<compile_context>
chip_gen: v7x
topology: tpu7x:2x2x1
jax: 0.10.0
libtpu: 0.0.40
codegen_flags: <defaults>
</compile_context>

<pallas_src>
import functools

import numpy as np
import jax
import jax.numpy as jnp
from jax import lax
from jax.experimental import pallas as pl
from jax.experimental.pallas import tpu as pltpu

KH, KW = 3, 3
BN_EPS = 1e-5


def _fused_kernel(x_ref, hmat_ref, b3_ref, m_ref, gamma_ref, beta_ref,
                  o_ref, stat_ref, coef_ref, *, W, C, inv_cnt):
    """Fully fused Boundary_enhance forward on a lane-dense (H, W*C) view.

    Grid is (N,), "arbitrary" (sequential): each step processes one image and
    accumulates BN partial statistics; the last step finalizes BatchNorm + ReLU
    in place on the VMEM-resident output block.

    x_ref    : (H, W*C)        one image, lane-dense channels-last view
    hmat_ref : (KH+1, H, H)    [0]   = V3 vertical 3-tap band (box sum)
                               [1+k] = R_k zero-padded row-shift matrix (shift by k-1)
    b3_ref   : (W*C, W*C)      horizontal per-channel 3-tap band (box sum)
    m_ref    : (KH, W*C, W*C)  banded grouped-conv weights, one per vertical tap
    gamma_ref, beta_ref : (1, C)   BatchNorm affine parameters
    o_ref    : (N, H, W*C)     whole output, VMEM-resident across the grid
    stat_ref : (2, W*C)        accumulated [sum, sum-of-squares] per dense lane
    coef_ref : (2, W*C)        scratch for dense [scale, shift] rows (last step only)
    """
    n = pl.program_id(0)

    @pl.when(n == 0)
    def _():
        stat_ref[...] = jnp.zeros_like(stat_ref)

    x = x_ref[...]                                         # (H, W*C) f32, lane-dense

    # ---- sharpen + residual + ReLU folded analytically:  relu(10*x - boxsum3x3(x)) --
    # Separable zero-padded box sum via two banded matmuls (idle MXU, no relayouts):
    rowsum = jnp.dot(hmat_ref[0], x, preferred_element_type=jnp.float32)    # vertical
    box = jnp.dot(rowsum, b3_ref[...], preferred_element_type=jnp.float32)  # horizontal
    xx = jnp.maximum(10.0 * x - box, 0.0)

    # ---- grouped 3x3 conv, still lane-dense:  conv = sum_k R_k @ (xx @ M_k) ---------
    conv = None
    for ky in range(KH):
        p = jnp.dot(xx, m_ref[ky], preferred_element_type=jnp.float32)
        t = jnp.dot(hmat_ref[1 + ky], p, preferred_element_type=jnp.float32)
        conv = t if conv is None else conv + t

    o_ref[n] = conv                                        # pre-BN; rewritten last step
    stat_ref[0:1, :] = stat_ref[0:1, :] + jnp.sum(conv, axis=0, keepdims=True)
    stat_ref[1:2, :] = stat_ref[1:2, :] + jnp.sum(conv * conv, axis=0, keepdims=True)

    # ---- last step: finish BatchNorm statistics and apply affine + ReLU in place ----
    @pl.when(n == pl.num_programs(0) - 1)
    def _():
        # reduce the dense per-lane stats over the W positions -> per-channel (2, C)
        tot = stat_ref[:, 0:C]
        for w in range(1, W):
            tot = tot + stat_ref[:, w * C:(w + 1) * C]
        mean = tot[0:1, :] * inv_cnt
        # TODO(synk): one-pass E[x^2]-mean^2 loses precision for very large N*H*W;
        # switch to a two-pass / Welford scheme there.
        var = jnp.maximum(tot[1:2, :] * inv_cnt - mean * mean, 0.0)
        scale = gamma_ref[...] * lax.rsqrt(var + BN_EPS)                  # (1, C)
        shift = beta_ref[...] - mean * scale
        # broadcast per-channel scale/shift to the dense layout (lane = w*C + c)
        for w in range(W):
            coef_ref[0:1, w * C:(w + 1) * C] = scale
            coef_ref[1:2, w * C:(w + 1) * C] = shift
        scale_d = coef_ref[0:1, :]
        shift_d = coef_ref[1:2, :]
        for i in range(o_ref.shape[0]):                    # static N, tiny epilogue
            o_ref[i] = jnp.maximum(o_ref[i] * scale_d + shift_d, 0.0)


def _static_band_matrices(H, W, C):
    """Constant 0/1 band/shift matrices for the separable zero-padded box sum."""
    idx = np.arange(H)
    hmat = np.zeros((KH + 1, H, H), np.float32)
    hmat[0] = np.abs(idx[:, None] - idx[None, :]) <= 1            # V3: vertical 3-tap
    for ky in range(KH):
        hmat[1 + ky] = idx[None, :] == (idx[:, None] + ky - 1)    # R_k: row shift, zero pad
    lane = np.arange(W * C)
    wpos, cpos = lane // C, lane % C
    b3 = ((np.abs(wpos[:, None] - wpos[None, :]) <= 1) &
          (cpos[:, None] == cpos[None, :])).astype(np.float32)    # horizontal 3-tap band
    return jnp.asarray(hmat), jnp.asarray(b3)


def _banded_conv_weights(weight, groups, W):
    """PyTorch grouped layout (Cout, Cin//groups, KH, KW) -> per-vertical-tap banded
    matrices M_k of shape (W*C, W*C) acting on the lane-dense (H, W*C) view:
      M_k[w_in*C + ci, w_out*C + co] = weight[co, ci_local, k, w_in - w_out + 1]
    for |w_in - w_out| <= 1 and ci, co in the same group, else 0."""
    C = weight.shape[0]
    cin_g = weight.shape[1]
    cout_g = C // groups
    wt = jnp.zeros((KH, KW, C, C), jnp.float32)            # dense per-tap (C_in, C_out)
    for g in range(groups):
        blk = jnp.transpose(weight[g * cout_g:(g + 1) * cout_g].astype(jnp.float32),
                            (2, 3, 1, 0))                  # (KH, KW, cin_g, cout_g)
        wt = wt.at[:, :, g * cin_g:(g + 1) * cin_g,
                   g * cout_g:(g + 1) * cout_g].set(blk)
    w_idx = np.arange(W)
    kx = w_idx[:, None] - w_idx[None, :] + 1               # (w_in, w_out) -> tap column
    valid = jnp.asarray((kx >= 0) & (kx < KW))
    kx_c = np.clip(kx, 0, KW - 1)
    mats = []
    for ky in range(KH):
        g4 = wt[ky][kx_c]                                  # (W, W, C, C) [w_in,w_out,ci,co]
        g4 = jnp.where(valid[:, :, None, None], g4, 0.0)
        mats.append(jnp.transpose(g4, (0, 2, 1, 3)).reshape(W * C, W * C))
    return jnp.stack(mats)                                 # (KH, W*C, W*C)


@functools.partial(jax.jit, static_argnames=("groups",))
def boundary_enhance_forward(x_nhwc, dsc_weight, gamma, beta, *, groups=16):
    """Boundary_enhance forward.  x_nhwc: (N, H, W, C) channels-last (TPU-native).
    A PyTorch/NCHW caller transposes once at the boundary (see __main__)."""
    N, H, W, C = x_nhwc.shape
    WC = W * C
    assert C % groups == 0 and dsc_weight.shape == (C, C // groups, KH, KW)
    # Fused single-call strategy keeps the whole output VMEM-resident across the grid.
    # TODO(synk): for larger N*H*W*C, H-tile with a 2-row halo + streaming two-pass BN.
    assert N * H * WC * 4 <= 8 * 1024 * 1024, "batch too large for whole-batch residency"

    x = x_nhwc.astype(jnp.float32).reshape(N, H, WC)       # metadata-only reshape
    hmat, b3 = _static_band_matrices(H, W, C)
    mats = _banded_conv_weights(dsc_weight, groups, W)     # (KH, WC, WC)
    gamma2 = gamma.astype(jnp.float32).reshape(1, C)
    beta2 = beta.astype(jnp.float32).reshape(1, C)

    # TODO(synk): a bf16 matmul path (operands only, f32 accumulate) would double MXU
    # rate at larger shapes but needs a relaxed tolerance; kept f32 here.
    kernel = functools.partial(_fused_kernel, W=W, C=C, inv_cnt=1.0 / float(N * H * W))
    out = pl.pallas_call(
        kernel,
        out_shape=jax.ShapeDtypeStruct((N, H, WC), jnp.float32),
        grid=(N,),
        in_specs=[
            pl.BlockSpec((None, H, WC), lambda n: (n, 0, 0)),      # x: one image / step
            pl.BlockSpec((KH + 1, H, H), lambda n: (0, 0, 0)),     # resident constants
            pl.BlockSpec((WC, WC), lambda n: (0, 0)),
            pl.BlockSpec((KH, WC, WC), lambda n: (0, 0, 0)),
            pl.BlockSpec((1, C), lambda n: (0, 0)),
            pl.BlockSpec((1, C), lambda n: (0, 0)),
        ],
        # Whole output resident across the grid (constant block index) -> single HBM
        # writeback after the last step; no pre-BN conv intermediate ever hits HBM.
        out_specs=pl.BlockSpec((N, H, WC), lambda n: (0, 0, 0)),
        scratch_shapes=[pltpu.VMEM((2, WC), jnp.float32),   # BN sum / sum-of-squares
                        pltpu.VMEM((2, WC), jnp.float32)],  # dense scale / shift rows
        compiler_params=pltpu.CompilerParams(
            # "arbitrary": stats accumulate and the output block is revisited across
            # steps, so the grid must run sequentially on one core (safe on v7x megacore).
            dimension_semantics=("arbitrary",),
            vmem_limit_bytes=32 * 1024 * 1024,              # explicit, v7x-safe
        ),
    )(x, hmat, b3, mats, gamma2, beta2)
    # TODO(synk): training-mode BatchNorm also updates running_mean/running_var buffers;
    # that stateful side effect is not reproduced (forward output unaffected).
    return out.reshape(N, H, W, C)


def _reference_forward(x_nchw, dsc_weight, gamma, beta, groups):
    """Pure-JAX NCHW reference: sharpen + residual + ReLU + grouped conv + BN + ReLU."""
    x = x_nchw.astype(jnp.float32)
    C = x.shape[1]
    kk = jnp.array([[-1., -1., -1.], [-1., 8., -1.], [-1., -1., -1.]], jnp.float32)
    w_sharp = jnp.tile(kk[None, None], (C, 1, 1, 1))        # (C, 1, 3, 3) depthwise
    sharp = lax.conv_general_dilated(
        x, w_sharp, (1, 1), ((1, 1), (1, 1)),
        dimension_numbers=("NCHW", "OIHW", "NCHW"), feature_group_count=C)
    xx = jnp.maximum(sharp + x, 0.0)
    y = lax.conv_general_dilated(
        xx, dsc_weight.astype(jnp.float32), (1, 1), ((1, 1), (1, 1)),
        dimension_numbers=("NCHW", "OIHW", "NCHW"), feature_group_count=groups)
    mean = jnp.mean(y, axis=(0, 2, 3), keepdims=True)
    var = jnp.mean((y - mean) ** 2, axis=(0, 2, 3), keepdims=True)
    y = (y - mean) * lax.rsqrt(var + BN_EPS)
    y = y * gamma.reshape(1, -1, 1, 1) + beta.reshape(1, -1, 1, 1)
    return jnp.maximum(y, 0.0)


if __name__ == "__main__":
    # Boundary_enhance(in_chs=32): in_chs must be divisible by GConvBNR's groups=16.
    N, C, H, W, GROUPS = 2, 32, 16, 16, 16

    key = jax.random.PRNGKey(0)
    k_x, k_w, k_g, k_b = jax.random.split(key, 4)
    x_nchw = jax.random.normal(k_x, (N, C, H, W), jnp.float32)          # PyTorch layout
    dsc_weight = 0.1 * jax.random.normal(k_w, (C, C // GROUPS, KH, KW), jnp.float32)
    gamma = 1.0 + 0.1 * jax.random.normal(k_g, (C,), jnp.float32)       # BN affine weight
    beta = 0.1 * jax.random.normal(k_b, (C,), jnp.float32)              # BN affine bias

    # Kernel path is channels-last; PyTorch-layout callers transpose once at the boundary.
    x_nhwc = jnp.transpose(x_nchw, (0, 2, 3, 1))
    out_nhwc = boundary_enhance_forward(x_nhwc, dsc_weight, gamma, beta, groups=GROUPS)
    out_nhwc = jax.block_until_ready(out_nhwc)

    ref_nhwc = jnp.transpose(
        _reference_forward(x_nchw, dsc_weight, gamma, beta, GROUPS), (0, 2, 3, 1))

    assert out_nhwc.shape == (N, H, W, C)
    max_err = float(jnp.max(jnp.abs(out_nhwc - ref_nhwc)))
    assert jnp.allclose(out_nhwc, ref_nhwc, atol=1e-3, rtol=1e-3), max_err

    print("KERNEL_OK")
</pallas_src>

<mosaic_0001>
module attributes {stable_mosaic.version = 11 : i64} {
  func.func @_fused_kernel(%arg0: i32, %arg1: memref<1x16x512xf32, #tpu.memory_space<vmem>>, %arg2: memref<4x16x16xf32, #tpu.memory_space<vmem>>, %arg3: memref<512x512xf32, #tpu.memory_space<vmem>>, %arg4: memref<3x512x512xf32, #tpu.memory_space<vmem>>, %arg5: memref<1x32xf32, #tpu.memory_space<vmem>>, %arg6: memref<1x32xf32, #tpu.memory_space<vmem>>, %arg7: memref<2x16x512xf32, #tpu.memory_space<vmem>>, %arg8: memref<2x512xf32, #tpu.memory_space<vmem>>, %arg9: memref<2x512xf32, #tpu.memory_space<vmem>>) attributes {dimension_semantics = [#tpu.dimension_semantics<arbitrary>], iteration_bounds = array<i64: 2>, scalar_prefetch = 0 : i64, scratch_operands = 2 : i64, tpu.core_type = #tpu.core_type<tc>, window_params = [{transform_indices = @transform_0, window_bounds = array<i64: 1, 16, 512>}, {pipeline_mode = #tpu.pipeline_mode<synchronous>, transform_indices = @transform_1, window_bounds = array<i64: 4, 16, 16>}, {pipeline_mode = #tpu.pipeline_mode<synchronous>, transform_indices = @transform_2, window_bounds = array<i64: 512, 512>}, {pipeline_mode = #tpu.pipeline_mode<synchronous>, transform_indices = @transform_3, window_bounds = array<i64: 3, 512, 512>}, {pipeline_mode = #tpu.pipeline_mode<synchronous>, transform_indices = @transform_4, window_bounds = array<i64: 1, 32>}, {pipeline_mode = #tpu.pipeline_mode<synchronous>, transform_indices = @transform_5, window_bounds = array<i64: 1, 32>}, {pipeline_mode = #tpu.pipeline_mode<synchronous>, transform_indices = @transform_6, window_bounds = array<i64: 2, 16, 512>}]} {
    %c0_i32 = arith.constant 0 : i32
    %0 = arith.cmpi eq, %arg0, %c0_i32 : i32
    %1 = arith.extui %0 : i1 to i32
    %c0_i32_0 = arith.constant 0 : i32
    %2 = arith.cmpi ne, %1, %c0_i32_0 : i32
    scf.if %2 {
      %cst_45 = arith.constant 0.000000e+00 : f32
      %53 = vector.broadcast %cst_45 : f32 to vector<2x512xf32>
      %c0_46 = arith.constant 0 : index
      %c0_47 = arith.constant 0 : index
      %54 = vector.load %arg8[%c0_46, %c0_47] : memref<2x512xf32, #tpu.memory_space<vmem>>, vector<2x512xf32>
      tpu.vector_store %arg8[%c0_46, %c0_47], %53 {strides = array<i32>} : memref<2x512xf32, #tpu.memory_space<vmem>>, vector<2x512xf32>,
    } else {
    }
    %c0 = arith.constant 0 : index
    %c0_1 = arith.constant 0 : index
    %c0_2 = arith.constant 0 : index
    %3 = vector.load %arg1[%c0, %c0_1, %c0_2] : memref<1x16x512xf32, #tpu.memory_space<vmem>>, vector<1x16x512xf32>
    %4 = vector.shape_cast %3 : vector<1x16x512xf32> to vector<16x512xf32>
    %c0_3 = arith.constant 0 : index
    %c0_4 = arith.constant 0 : index
    %c0_5 = arith.constant 0 : index
    %5 = vector.load %arg2[%c0_3, %c0_4, %c0_5] : memref<4x16x16xf32, #tpu.memory_space<vmem>>, vector<1x16x16xf32>
    %6 = vector.shape_cast %5 : vector<1x16x16xf32> to vector<16x16xf32>
    %cst = arith.constant dense<0.000000e+00> : vector<16x512xf32>
    %7 = tpu.matmul %6, %4, %cst {dimension_numbers = #tpu.dot_dimension_numbers<[1], [0], [0], [1], [0, 0, 1, 1], [], []>} : vector<16x16xf32>, vector<16x512xf32>, vector<16x512xf32> -> vector<16x512xf32>
    %c0_6 = arith.constant 0 : index
    %c0_7 = arith.constant 0 : index
    %8 = vector.load %arg3[%c0_6, %c0_7] : memref<512x512xf32, #tpu.memory_space<vmem>>, vector<512x512xf32>
    %cst_8 = arith.constant dense<0.000000e+00> : vector<16x512xf32>
    %9 = tpu.matmul %7, %8, %cst_8 {dimension_numbers = #tpu.dot_dimension_numbers<[1], [0], [0], [1], [0, 0, 1, 1], [], []>} : vector<16x512xf32>, vector<512x512xf32>, vector<16x512xf32> -> vector<16x512xf32>
    %cst_9 = arith.constant 1.000000e+01 : f32
    %10 = vector.broadcast %cst_9 : f32 to vector<16x512xf32>
    %11 = arith.mulf %10, %4 : vector<16x512xf32>
    %12 = arith.subf %11, %9 : vector<16x512xf32>
    %cst_10 = arith.constant 0.000000e+00 : f32
    %13 = vector.broadcast %cst_10 : f32 to vector<16x512xf32>
    %14 = arith.maximumf %12, %13 : vector<16x512xf32>
    %c0_11 = arith.constant 0 : index
    %c0_12 = arith.constant 0 : index
    %c0_13 = arith.constant 0 : index
    %15 = vector.load %arg4[%c0_11, %c0_12, %c0_13] : memref<3x512x512xf32, #tpu.memory_space<vmem>>, vector<1x512x512xf32>
    %16 = vector.shape_cast %15 : vector<1x512x512xf32> to vector<512x512xf32>
    %cst_14 = arith.constant dense<0.000000e+00> : vector<16x512xf32>
    %17 = tpu.matmul %14, %16, %cst_14 {dimension_numbers = #tpu.dot_dimension_numbers<[1], [0], [0], [1], [0, 0, 1, 1], [], []>} : vector<16x512xf32>, vector<512x512xf32>, vector<16x512xf32> -> vector<16x512xf32>
    %c1 = arith.constant 1 : index
    %c0_15 = arith.constant 0 : index
    %c0_16 = arith.constant 0 : index
    %18 = vector.load %arg2[%c1, %c0_15, %c0_16] : memref<4x16x16xf32, #tpu.memory_space<vmem>>, vector<1x16x16xf32>
    %19 = vector.shape_cast %18 : vector<1x16x16xf32> to vector<16x16xf32>
    %cst_17 = arith.constant dense<0.000000e+00> : vector<16x512xf32>
    %20 = tpu.matmul %19, %17, %cst_17 {dimension_numbers = #tpu.dot_dimension_numbers<[1], [0], [0], [1], [0, 0, 1, 1], [], []>} : vector<16x16xf32>, vector<16x512xf32>, vector<16x512xf32> -> vector<16x512xf32>
    %c1_18 = arith.constant 1 : index
    %c0_19 = arith.constant 0 : index
    %c0_20 = arith.constant 0 : index
    %21 = vector.load %arg4[%c1_18, %c0_19, %c0_20] : memref<3x512x512xf32, #tpu.memory_space<vmem>>, vector<1x512x512xf32>
    %22 = vector.shape_cast %21 : vector<1x512x512xf32> to vector<512x512xf32>
    %cst_21 = arith.constant dense<0.000000e+00> : vector<16x512xf32>
    %23 = tpu.matmul %14, %22, %cst_21 {dimension_numbers = #tpu.dot_dimension_numbers<[1], [0], [0], [1], [0, 0, 1, 1], [], []>} : vector<16x512xf32>, vector<512x512xf32>, vector<16x512xf32> -> vector<16x512xf32>
    %c2 = arith.constant 2 : index
    %c0_22 = arith.constant 0 : index
    %c0_23 = arith.constant 0 : index
    %24 = vector.load %arg2[%c2, %c0_22, %c0_23] : memref<4x16x16xf32, #tpu.memory_space<vmem>>, vector<1x16x16xf32>
    %25 = vector.shape_cast %24 : vector<1x16x16xf32> to vector<16x16xf32>
    %cst_24 = arith.constant dense<0.000000e+00> : vector<16x512xf32>
    %26 = tpu.matmul %25, %23, %cst_24 {dimension_numbers = #tpu.dot_dimension_numbers<[1], [0], [0], [1], [0, 0, 1, 1], [], []>} : vector<16x16xf32>, vector<16x512xf32>, vector<16x512xf32> -> vector<16x512xf32>
    %27 = arith.addf %20, %26 : vector<16x512xf32>
    %c2_25 = arith.constant 2 : index
    %c0_26 = arith.constant 0 : index
    %c0_27 = arith.constant 0 : index
    %28 = vector.load %arg4[%c2_25, %c0_26, %c0_27] : memref<3x512x512xf32, #tpu.memory_space<vmem>>, vector<1x512x512xf32>
    %29 = vector.shape_cast %28 : vector<1x512x512xf32> to vector<512x512xf32>
    %cst_28 = arith.constant dense<0.000000e+00> : vector<16x512xf32>
    %30 = tpu.matmul %14, %29, %cst_28 {dimension_numbers = #tpu.dot_dimension_numbers<[1], [0], [0], [1], [0, 0, 1, 1], [], []>} : vector<16x512xf32>, vector<512x512xf32>, vector<16x512xf32> -> vector<16x512xf32>
    %c3 = arith.constant 3 : index
    %c0_29 = arith.constant 0 : index
    %c0_30 = arith.constant 0 : index
    %31 = vector.load %arg2[%c3, %c0_29, %c0_30] : memref<4x16x16xf32, #tpu.memory_space<vmem>>, vector<1x16x16xf32>
    %32 = vector.shape_cast %31 : vector<1x16x16xf32> to vector<16x16xf32>
    %cst_31 = arith.constant dense<0.000000e+00> : vector<16x512xf32>
    %33 = tpu.matmul %32, %30, %cst_31 {dimension_numbers = #tpu.dot_dimension_numbers<[1], [0], [0], [1], [0, 0, 1, 1], [], []>} : vector<16x16xf32>, vector<16x512xf32>, vector<16x512xf32> -> vector<16x512xf32>
    %34 = arith.addf %27, %33 : vector<16x512xf32>
    %35 = arith.index_cast %arg0 : i32 to index
    %c0_32 = arith.constant 0 : index
    %c0_33 = arith.constant 0 : index
    %36 = vector.load %arg7[%35, %c0_32, %c0_33] : memref<2x16x512xf32, #tpu.memory_space<vmem>>, vector<1x16x512xf32>
    %37 = vector.shape_cast %36 : vector<1x16x512xf32> to vector<16x512xf32>
    %38 = vector.shape_cast %34 : vector<16x512xf32> to vector<1x16x512xf32>
    tpu.vector_store %arg7[%35, %c0_32, %c0_33], %38 {strides = array<i32>} : memref<2x16x512xf32, #tpu.memory_space<vmem>>, vector<1x16x512xf32>,
    %c0_34 = arith.constant 0 : index
    %c0_35 = arith.constant 0 : index
    %39 = vector.load %arg8[%c0_34, %c0_35] : memref<2x512xf32, #tpu.memory_space<vmem>>, vector<1x512xf32>
    %cst_36 = arith.constant dense<0.000000e+00> : vector<512xf32>
    %40 = vector.multi_reduction <add>, %34, %cst_36 [0] : vector<16x512xf32> to vector<512xf32>
    %41 = vector.shape_cast %40 : vector<512xf32> to vector<1x512xf32>
    %42 = arith.addf %39, %41 : vector<1x512xf32>
    %c0_37 = arith.constant 0 : index
    %c0_38 = arith.constant 0 : index
    %43 = vector.load %arg8[%c0_37, %c0_38] : memref<2x512xf32, #tpu.memory_space<vmem>>, vector<1x512xf32>
    tpu.vector_store %arg8[%c0_37, %c0_38], %42 {strides = array<i32>} : memref<2x512xf32, #tpu.memory_space<vmem>>, vector<1x512xf32>,
    %c1_39 = arith.constant 1 : index
    %c0_40 = arith.constant 0 : index
    %44 = vector.load %arg8[%c1_39, %c0_40] : memref<2x512xf32, #tpu.memory_space<vmem>>, vector<1x512xf32>
    %45 = arith.mulf %34, %34 : vector<16x512xf32>
    %cst_41 = arith.constant dense<0.000000e+00> : vector<512xf32>
    %46 = vector.multi_reduction <add>, %45, %cst_41 [0] : vector<16x512xf32> to vector<512xf32>
    %47 = vector.shape_cast %46 : vector<512xf32> to vector<1x512xf32>
    %48 = arith.addf %44, %47 : vector<1x512xf32>
    %c1_42 = arith.constant 1 : index
    %c0_43 = arith.constant 0 : index
    %49 = vector.load %arg8[%c1_42, %c0_43] : memref<2x512xf32, #tpu.memory_space<vmem>>, vector<1x512xf32>
    tpu.vector_store %arg8[%c1_42, %c0_43], %48 {strides = array<i32>} : memref<2x512xf32, #tpu.memory_space<vmem>>, vector<1x512xf32>,
    %c1_i32 = arith.constant 1 : i32
    %50 = arith.cmpi eq, %arg0, %c1_i32 : i32
    %51 = arith.extui %50 : i1 to i32
    %c0_i32_44 = arith.constant 0 : i32
    %52 = arith.cmpi ne, %51, %c0_i32_44 : i32
    scf.if %52 {
      %c0_45 = arith.constant 0 : index
      %c0_46 = arith.constant 0 : index
      %53 = vector.load %arg8[%c0_45, %c0_46] : memref<2x512xf32, #tpu.memory_space<vmem>>, vector<2x32xf32>
      %c0_47 = arith.constant 0 : index
      %c32 = arith.constant 32 : index
      %54 = vector.load %arg8[%c0_47, %c32] : memref<2x512xf32, #tpu.memory_space<vmem>>, vector<2x32xf32>
      %55 = arith.addf %53, %54 : vector<2x32xf32>
      %c0_48 = arith.constant 0 : index
      %c64 = arith.constant 64 : index
      %56 = vector.load %arg8[%c0_48, %c64] : memref<2x512xf32, #tpu.memory_space<vmem>>, vector<2x32xf32>
      %57 = arith.addf %55, %56 : vector<2x32xf32>
      %c0_49 = arith.constant 0 : index
      %c96 = arith.constant 96 : index
      %58 = vector.load %arg8[%c0_49, %c96] : memref<2x512xf32, #tpu.memory_space<vmem>>, vector<2x32xf32>
      %59 = arith.addf %57, %58 : vector<2x32xf32>
      %c0_50 = arith.constant 0 : index
      %c128 = arith.constant 128 : index
      %60 = vector.load %arg8[%c0_50, %c128] : memref<2x512xf32, #tpu.memory_space<vmem>>, vector<2x32xf32>
      %61 = arith.addf %59, %60 : vector<2x32xf32>
      %c0_51 = arith.constant 0 : index
      %c160 = arith.constant 160 : index
      %62 = vector.load %arg8[%c0_51, %c160] : memref<2x512xf32, #tpu.memory_space<vmem>>, vector<2x32xf32>
      %63 = arith.addf %61, %62 : vector<2x32xf32>
      %c0_52 = arith.constant 0 : index
      %c192 = arith.constant 192 : index
      %64 = vector.load %arg8[%c0_52, %c192] : memref<2x512xf32, #tpu.memory_space<vmem>>, vector<2x32xf32>
      %65 = arith.addf %63, %64 : vector<2x32xf32>
      %c0_53 = arith.constant 0 : index
      %c224 = arith.constant 224 : index
      %66 = vector.load %arg8[%c0_53, %c224] : memref<2x512xf32, #tpu.memory_space<vmem>>, vector<2x32xf32>
      %67 = arith.addf %65, %66 : vector<2x32xf32>
      %c0_54 = arith.constant 0 : index
      %c256 = arith.constant 256 : index
      %68 = vector.load %arg8[%c0_54, %c256] : memref<2x512xf32, #tpu.memory_space<vmem>>, vector<2x32xf32>
      %69 = arith.addf %67, %68 : vector<2x32xf32>
      %c0_55 = arith.constant 0 : index
      %c288 = arith.constant 288 : index
      %70 = vector.load %arg8[%c0_55, %c288] : memref<2x512xf32, #tpu.memory_space<vmem>>, vector<2x32xf32>
      %71 = arith.addf %69, %70 : vector<2x32xf32>
      %c0_56 = arith.constant 0 : index
      %c320 = arith.constant 320 : index
      %72 = vector.load %arg8[%c0_56, %c320] : memref<2x512xf32, #tpu.memory_space<vmem>>, vector<2x32xf32>
      %73 = arith.addf %71, %72 : vector<2x32xf32>
      %c0_57 = arith.constant 0 : index
      %c352 = arith.constant 352 : index
      %74 = vector.load %arg8[%c0_57, %c352] : memref<2x512xf32, #tpu.memory_space<vmem>>, vector<2x32xf32>
      %75 = arith.addf %73, %74 : vector<2x32xf32>
      %c0_58 = arith.constant 0 : index
      %c384 = arith.constant 384 : index
      %76 = vector.load %arg8[%c0_58, %c384] : memref<2x512xf32, #tpu.memory_space<vmem>>, vector<2x32xf32>
      %77 = arith.addf %75, %76 : vector<2x32xf32>
      %c0_59 = arith.constant 0 : index
      %c416 = arith.constant 416 : index
      %78 = vector.load %arg8[%c0_59, %c416] : memref<2x512xf32, #tpu.memory_space<vmem>>, vector<2x32xf32>
      %79 = arith.addf %77, %78 : vector<2x32xf32>
      %c0_60 = arith.constant 0 : index
      %c448 = arith.constant 448 : index
      %80 = vector.load %arg8[%c0_60, %c448] : memref<2x512xf32, #tpu.memory_space<vmem>>, vector<2x32xf32>
      %81 = arith.addf %79, %80 : vector<2x32xf32>
      %c0_61 = arith.constant 0 : index
      %c480 = arith.constant 480 : index
      %82 = vector.load %arg8[%c0_61, %c480] : memref<2x512xf32, #tpu.memory_space<vmem>>, vector<2x32xf32>
      %83 = arith.addf %81, %82 : vector<2x32xf32>
      %84 = vector.extract_strided_slice %83 {offsets = [0, 0], sizes = [1, 32], strides = [1, 1]} : vector<2x32xf32> to vector<1x32xf32>
      %cst_62 = arith.constant 0.001953125 : f32
      %85 = vector.broadcast %cst_62 : f32 to vector<1x32xf32>
      %86 = arith.mulf %84, %85 : vector<1x32xf32>
      %87 = vector.extract_strided_slice %83 {offsets = [1, 0], sizes = [1, 32], strides = [1, 1]} : vector<2x32xf32> to vector<1x32xf32>
      %cst_63 = arith.constant 0.001953125 : f32
      %88 = vector.broadcast %cst_63 : f32 to vector<1x32xf32>
      %89 = arith.mulf %87, %88 : vector<1x32xf32>
      %90 = arith.mulf %86, %86 : vector<1x32xf32>
      %91 = arith.subf %89, %90 : vector<1x32xf32>
      %cst_64 = arith.constant 0.000000e+00 : f32
      %92 = vector.broadcast %cst_64 : f32 to vector<1x32xf32>
      %93 = arith.maximumf %91, %92 : vector<1x32xf32>
      %c0_65 = arith.constant 0 : index
      %c0_66 = arith.constant 0 : index
      %94 = vector.load %arg5[%c0_65, %c0_66] : memref<1x32xf32, #tpu.memory_space<vmem>>, vector<1x32xf32>
      %cst_67 = arith.constant 9.99999974E-6 : f32
      %95 = vector.broadcast %cst_67 : f32 to vector<1x32xf32>
      %96 = arith.addf %93, %95 : vector<1x32xf32>
      %97 = math.rsqrt %96 : vector<1x32xf32>
      %98 = arith.mulf %94, %97 : vector<1x32xf32>
      %c0_68 = arith.constant 0 : index
      %c0_69 = arith.constant 0 : index
      %99 = vector.load %arg6[%c0_68, %c0_69] : memref<1x32xf32, #tpu.memory_space<vmem>>, vector<1x32xf32>
      %100 = arith.mulf %86, %98 : vector<1x32xf32>
      %101 = arith.subf %99, %100 : vector<1x32xf32>
      %c0_70 = arith.constant 0 : index
      %c0_71 = arith.constant 0 : index
      %102 = vector.load %arg9[%c0_70, %c0_71] : memref<2x512xf32, #tpu.memory_space<vmem>>, vector<1x32xf32>
      tpu.vector_store %arg9[%c0_70, %c0_71], %98 {strides = array<i32>} : memref<2x512xf32, #tpu.memory_space<vmem>>, vector<1x32xf32>,
      %c1_72 = arith.constant 1 : index
      %c0_73 = arith.constant 0 : index
      %103 = vector.load %arg9[%c1_72, %c0_73] : memref<2x512xf32, #tpu.memory_space<vmem>>, vector<1x32xf32>
      tpu.vector_store %arg9[%c1_72, %c0_73], %101 {strides = array<i32>} : memref<2x512xf32, #tpu.memory_space<vmem>>, vector<1x32xf32>,
      %c0_74 = arith.constant 0 : index
      %c32_75 = arith.constant 32 : index
      %104 = vector.load %arg9[%c0_74, %c32_75] : memref<2x512xf32, #tpu.memory_space<vmem>>, vector<1x32xf32>
      tpu.vector_store %arg9[%c0_74, %c32_75], %98 {strides = array<i32>} : memref<2x512xf32, #tpu.memory_space<vmem>>, vector<1x32xf32>,
      %c1_76 = arith.constant 1 : index
      %c32_77 = arith.constant 32 : index
      %105 = vector.load %arg9[%c1_76, %c32_77] : memref<2x512xf32, #tpu.memory_space<vmem>>, vector<1x32xf32>
      tpu.vector_store %arg9[%c1_76, %c32_77], %101 {strides = array<i32>} : memref<2x512xf32, #tpu.memory_space<vmem>>, vector<1x32xf32>,
      %c0_78 = arith.constant 0 : index
      %c64_79 = arith.constant 64 : index
      %106 = vector.load %arg9[%c0_78, %c64_79] : memref<2x512xf32, #tpu.memory_space<vmem>>, vector<1x32xf32>
      tpu.vector_store %arg9[%c0_78, %c64_79], %98 {strides = array<i32>} : memref<2x512xf32, #tpu.memory_space<vmem>>, vector<1x32xf32>,
      %c1_80 = arith.constant 1 : index
      %c64_81 = arith.constant 64 : index
      %107 = vector.load %arg9[%c1_80, %c64_81] : memref<2x512xf32, #tpu.memory_space<vmem>>, vector<1x32xf32>
      tpu.vector_store %arg9[%c1_80, %c64_81], %101 {strides = array<i32>} : memref<2x512xf32, #tpu.memory_space<vmem>>, vector<1x32xf32>,
      %c0_82 = arith.constant 0 : index
      %c96_83 = arith.constant 96 : index
      %108 = vector.load %arg9[%c0_82, %c96_83] : memref<2x512xf32, #tpu.memory_space<vmem>>, vector<1x32xf32>
      tpu.vector_store %arg9[%c0_82, %c96_83], %98 {strides = array<i32>} : memref<2x512xf32, #tpu.memory_space<vmem>>, vector<1x32xf32>,
      %c1_84 = arith.constant 1 : index
      %c96_85 = arith.constant 96 : index
      %109 = vector.load %arg9[%c1_84, %c96_85] : memref<2x512xf32, #tpu.memory_space<vmem>>, vector<1x32xf32>
      tpu.vector_store %arg9[%c1_84, %c96_85], %101 {strides = array<i32>} : memref<2x512xf32, #tpu.memory_space<vmem>>, vector<1x32xf32>,
      %c0_86 = arith.constant 0 : index
      %c128_87 = arith.constant 128 : index
      %110 = vector.load %arg9[%c0_86, %c128_87] : memref<2x512xf32, #tpu.memory_space<vmem>>, vector<1x32xf32>
      tpu.vector_store %arg9[%c0_86, %c128_87], %98 {strides = array<i32>} : memref<2x512xf32, #tpu.memory_space<vmem>>, vector<1x32xf32>,
      %c1_88 = arith.constant 1 : index
      %c128_89 = arith.constant 128 : index
      %111 = vector.load %arg9[%c1_88, %c128_89] : memref<2x512xf32, #tpu.memory_space<vmem>>, vector<1x32xf32>
      tpu.vector_store %arg9[%c1_88, %c128_89], %101 {strides = array<i32>} : memref<2x512xf32, #tpu.memory_space<vmem>>, vector<1x32xf32>,
      %c0_90 = arith.constant 0 : index
      %c160_91 = arith.constant 160 : index
      %112 = vector.load %arg9[%c0_90, %c160_91] : memref<2x512xf32, #tpu.memory_space<vmem>>, vector<1x32xf32>
      tpu.vector_store %arg9[%c0_90, %c160_91], %98 {strides = array<i32>} : memref<2x512xf32, #tpu.memory_space<vmem>>, vector<1x32xf32>,
      %c1_92 = arith.constant 1 : index
      %c160_93 = arith.constant 160 : index
      %113 = vector.load %arg9[%c1_92, %c160_93] : memref<2x512xf32, #tpu.memory_space<vmem>>, vector<1x32xf32>
      tpu.vector_store %arg9[%c1_92, %c160_93], %101 {strides = array<i32>} : memref<2x512xf32, #tpu.memory_space<vmem>>, vector<1x32xf32>,
      %c0_94 = arith.constant 0 : index
      %c192_95 = arith.constant 192 : index
      %114 = vector.load %arg9[%c0_94, %c192_95] : memref<2x512xf32, #tpu.memory_space<vmem>>, vector<1x32xf32>
      tpu.vector_store %arg9[%c0_94, %c192_95], %98 {strides = array<i32>} : memref<2x512xf32, #tpu.memory_space<vmem>>, vector<1x32xf32>,
      %c1_96 = arith.constant 1 : index
      %c192_97 = arith.constant 192 : index
      %115 = vector.load %arg9[%c1_96, %c192_97] : memref<2x512xf32, #tpu.memory_space<vmem>>, vector<1x32xf32>
      tpu.vector_store %arg9[%c1_96, %c192_97], %101 {strides = array<i32>} : memref<2x512xf32, #tpu.memory_space<vmem>>, vector<1x32xf32>,
      %c0_98 = arith.constant 0 : index
      %c224_99 = arith.constant 224 : index
      %116 = vector.load %arg9[%c0_98, %c224_99] : memref<2x512xf32, #tpu.memory_space<vmem>>, vector<1x32xf32>
      tpu.vector_store %arg9[%c0_98, %c224_99], %98 {strides = array<i32>} : memref<2x512xf32, #tpu.memory_space<vmem>>, vector<1x32xf32>,
      %c1_100 = arith.constant 1 : index
      %c224_101 = arith.constant 224 : index
      %117 = vector.load %arg9[%c1_100, %c224_101] : memref<2x512xf32, #tpu.memory_space<vmem>>, vector<1x32xf32>
      tpu.vector_store %arg9[%c1_100, %c224_101], %101 {strides = array<i32>} : memref<2x512xf32, #tpu.memory_space<vmem>>, vector<1x32xf32>,
      %c0_102 = arith.constant 0 : index
      %c256_103 = arith.constant 256 : index
      %118 = vector.load %arg9[%c0_102, %c256_103] : memref<2x512xf32, #tpu.memory_space<vmem>>, vector<1x32xf32>
      tpu.vector_store %arg9[%c0_102, %c256_103], %98 {strides = array<i32>} : memref<2x512xf32, #tpu.memory_space<vmem>>, vector<1x32xf32>,
      %c1_104 = arith.constant 1 : index
      %c256_105 = arith.constant 256 : index
      %119 = vector.load %arg9[%c1_104, %c256_105] : memref<2x512xf32, #tpu.memory_space<vmem>>, vector<1x32xf32>
      tpu.vector_store %arg9[%c1_104, %c256_105], %101 {strides = array<i32>} : memref<2x512xf32, #tpu.memory_space<vmem>>, vector<1x32xf32>,
      %c0_106 = arith.constant 0 : index
      %c288_107 = arith.constant 288 : index
      %120 = vector.load %arg9[%c0_106, %c288_107] : memref<2x512xf32, #tpu.memory_space<vmem>>, vector<1x32xf32>
      tpu.vector_store %arg9[%c0_106, %c288_107], %98 {strides = array<i32>} : memref<2x512xf32, #tpu.memory_space<vmem>>, vector<1x32xf32>,
      %c1_108 = arith.constant 1 : index
      %c288_109 = arith.constant 288 : index
      %121 = vector.load %arg9[%c1_108, %c288_109] : memref<2x512xf32, #tpu.memory_space<vmem>>, vector<1x32xf32>
      tpu.vector_store %arg9[%c1_108, %c288_109], %101 {strides = array<i32>} : memref<2x512xf32, #tpu.memory_space<vmem>>, vector<1x32xf32>,
      %c0_110 = arith.constant 0 : index
      %c320_111 = arith.constant 320 : index
      %122 = vector.load %arg9[%c0_110, %c320_111] : memref<2x512xf32, #tpu.memory_space<vmem>>, vector<1x32xf32>
      tpu.vector_store %arg9[%c0_110, %c320_111], %98 {strides = array<i32>} : memref<2x512xf32, #tpu.memory_space<vmem>>, vector<1x32xf32>,
      %c1_112 = arith.constant 1 : index
      %c320_113 = arith.constant 320 : index
      %123 = vector.load %arg9[%c1_112, %c320_113] : memref<2x512xf32, #tpu.memory_space<vmem>>, vector<1x32xf32>
      tpu.vector_store %arg9[%c1_112, %c320_113], %101 {strides = array<i32>} : memref<2x512xf32, #tpu.memory_space<vmem>>, vector<1x32xf32>,
      %c0_114 = arith.constant 0 : index
      %c352_115 = arith.constant 352 : index
      %124 = vector.load %arg9[%c0_114, %c352_115] : memref<2x512xf32, #tpu.memory_space<vmem>>, vector<1x32xf32>
      tpu.vector_store %arg9[%c0_114, %c352_115], %98 {strides = array<i32>} : memref<2x512xf32, #tpu.memory_space<vmem>>, vector<1x32xf32>,
      %c1_116 = arith.constant 1 : index
      %c352_117 = arith.constant 352 : index
      %125 = vector.load %arg9[%c1_116, %c352_117] : memref<2x512xf32, #tpu.memory_space<vmem>>, vector<1x32xf32>
      tpu.vector_store %arg9[%c1_116, %c352_117], %101 {strides = array<i32>} : memref<2x512xf32, #tpu.memory_space<vmem>>, vector<1x32xf32>,
      %c0_118 = arith.constant 0 : index
      %c384_119 = arith.constant 384 : index
      %126 = vector.load %arg9[%c0_118, %c384_119] : memref<2x512xf32, #tpu.memory_space<vmem>>, vector<1x32xf32>
      tpu.vector_store %arg9[%c0_118, %c384_119], %98 {strides = array<i32>} : memref<2x512xf32, #tpu.memory_space<vmem>>, vector<1x32xf32>,
      %c1_120 = arith.constant 1 : index
      %c384_121 = arith.constant 384 : index
      %127 = vector.load %arg9[%c1_120, %c384_121] : memref<2x512xf32, #tpu.memory_space<vmem>>, vector<1x32xf32>
      tpu.vector_store %arg9[%c1_120, %c384_121], %101 {strides = array<i32>} : memref<2x512xf32, #tpu.memory_space<vmem>>, vector<1x32xf32>,
      %c0_122 = arith.constant 0 : index
      %c416_123 = arith.constant 416 : index
      %128 = vector.load %arg9[%c0_122, %c416_123] : memref<2x512xf32, #tpu.memory_space<vmem>>, vector<1x32xf32>
      tpu.vector_store %arg9[%c0_122, %c416_123], %98 {strides = array<i32>} : memref<2x512xf32, #tpu.memory_space<vmem>>, vector<1x32xf32>,
      %c1_124 = arith.constant 1 : index
      %c416_125 = arith.constant 416 : index
      %129 = vector.load %arg9[%c1_124, %c416_125] : memref<2x512xf32, #tpu.memory_space<vmem>>, vector<1x32xf32>
      tpu.vector_store %arg9[%c1_124, %c416_125], %101 {strides = array<i32>} : memref<2x512xf32, #tpu.memory_space<vmem>>, vector<1x32xf32>,
      %c0_126 = arith.constant 0 : index
      %c448_127 = arith.constant 448 : index
      %130 = vector.load %arg9[%c0_126, %c448_127] : memref<2x512xf32, #tpu.memory_space<vmem>>, vector<1x32xf32>
      tpu.vector_store %arg9[%c0_126, %c448_127], %98 {strides = array<i32>} : memref<2x512xf32, #tpu.memory_space<vmem>>, vector<1x32xf32>,
      %c1_128 = arith.constant 1 : index
      %c448_129 = arith.constant 448 : index
      %131 = vector.load %arg9[%c1_128, %c448_129] : memref<2x512xf32, #tpu.memory_space<vmem>>, vector<1x32xf32>
      tpu.vector_store %arg9[%c1_128, %c448_129], %101 {strides = array<i32>} : memref<2x512xf32, #tpu.memory_space<vmem>>, vector<1x32xf32>,
      %c0_130 = arith.constant 0 : index
      %c480_131 = arith.constant 480 : index
      %132 = vector.load %arg9[%c0_130, %c480_131] : memref<2x512xf32, #tpu.memory_space<vmem>>, vector<1x32xf32>
      tpu.vector_store %arg9[%c0_130, %c480_131], %98 {strides = array<i32>} : memref<2x512xf32, #tpu.memory_space<vmem>>, vector<1x32xf32>,
      %c1_132 = arith.constant 1 : index
      %c480_133 = arith.constant 480 : index
      %133 = vector.load %arg9[%c1_132, %c480_133] : memref<2x512xf32, #tpu.memory_space<vmem>>, vector<1x32xf32>
      tpu.vector_store %arg9[%c1_132, %c480_133], %101 {strides = array<i32>} : memref<2x512xf32, #tpu.memory_space<vmem>>, vector<1x32xf32>,
      %c0_134 = arith.constant 0 : index
      %c0_135 = arith.constant 0 : index
      %134 = vector.load %arg9[%c0_134, %c0_135] : memref<2x512xf32, #tpu.memory_space<vmem>>, vector<1x512xf32>
      %c1_136 = arith.constant 1 : index
      %c0_137 = arith.constant 0 : index
      %135 = vector.load %arg9[%c1_136, %c0_137] : memref<2x512xf32, #tpu.memory_space<vmem>>, vector<1x512xf32>
      %c0_138 = arith.constant 0 : index
      %c0_139 = arith.constant 0 : index
      %c0_140 = arith.constant 0 : index
      %136 = vector.load %arg7[%c0_138, %c0_139, %c0_140] : memref<2x16x512xf32, #tpu.memory_space<vmem>>, vector<1x16x512xf32>
      %137 = vector.shape_cast %136 : vector<1x16x512xf32> to vector<16x512xf32>
      %138 = vector.broadcast %134 : vector<1x512xf32> to vector<16x512xf32>
      %139 = arith.mulf %137, %138 : vector<16x512xf32>
      %140 = vector.broadcast %135 : vector<1x512xf32> to vector<16x512xf32>
      %141 = arith.addf %139, %140 : vector<16x512xf32>
      %cst_141 = arith.constant 0.000000e+00 : f32
      %142 = vector.broadcast %cst_141 : f32 to vector<16x512xf32>
      %143 = arith.maximumf %141, %142 : vector<16x512xf32>
      %c0_142 = arith.constant 0 : index
      %c0_143 = arith.constant 0 : index
      %c0_144 = arith.constant 0 : index
      %144 = vector.load %arg7[%c0_142, %c0_143, %c0_144] : memref<2x16x512xf32, #tpu.memory_space<vmem>>, vector<1x16x512xf32>
      %145 = vector.shape_cast %144 : vector<1x16x512xf32> to vector<16x512xf32>
      %146 = vector.shape_cast %143 : vector<16x512xf32> to vector<1x16x512xf32>
      tpu.vector_store %arg7[%c0_142, %c0_143, %c0_144], %146 {strides = array<i32>} : memref<2x16x512xf32, #tpu.memory_space<vmem>>, vector<1x16x512xf32>,
      %c1_145 = arith.constant 1 : index
      %c0_146 = arith.constant 0 : index
      %c0_147 = arith.constant 0 : index
      %147 = vector.load %arg7[%c1_145, %c0_146, %c0_147] : memref<2x16x512xf32, #tpu.memory_space<vmem>>, vector<1x16x512xf32>
      %148 = vector.shape_cast %147 : vector<1x16x512xf32> to vector<16x512xf32>
      %149 = vector.broadcast %134 : vector<1x512xf32> to vector<16x512xf32>
      %150 = arith.mulf %148, %149 : vector<16x512xf32>
      %151 = vector.broadcast %135 : vector<1x512xf32> to vector<16x512xf32>
      %152 = arith.addf %150, %151 : vector<16x512xf32>
      %cst_148 = arith.constant 0.000000e+00 : f32
      %153 = vector.broadcast %cst_148 : f32 to vector<16x512xf32>
      %154 = arith.maximumf %152, %153 : vector<16x512xf32>
      %c1_149 = arith.constant 1 : index
      %c0_150 = arith.constant 0 : index
      %c0_151 = arith.constant 0 : index
      %155 = vector.load %arg7[%c1_149, %c0_150, %c0_151] : memref<2x16x512xf32, #tpu.memory_space<vmem>>, vector<1x16x512xf32>
      %156 = vector.shape_cast %155 : vector<1x16x512xf32> to vector<16x512xf32>
      %157 = vector.shape_cast %154 : vector<16x512xf32> to vector<1x16x512xf32>
      tpu.vector_store %arg7[%c1_149, %c0_150, %c0_151], %157 {strides = array<i32>} : memref<2x16x512xf32, #tpu.memory_space<vmem>>, vector<1x16x512xf32>,
    } else {
    }
    return
  }
  func.func @transform_0(%arg0: i32) -> (i32, i32, i32) {
    %c0_i32 = arith.constant 0 : i32
    %c0_i32_0 = arith.constant 0 : i32
    %c0_i32_1 = arith.constant 0 : i32
    return %arg0, %c0_i32, %c0_i32_0 : i32, i32, i32
  }
  func.func @transform_1(%arg0: i32) -> (i32, i32, i32) {
    %c0_i32 = arith.constant 0 : i32
    %c0_i32_0 = arith.constant 0 : i32
    %c0_i32_1 = arith.constant 0 : i32
    %c0_i32_2 = arith.constant 0 : i32
    return %c0_i32, %c0_i32_0, %c0_i32_1 : i32, i32, i32
  }
  func.func @transform_2(%arg0: i32) -> (i32, i32) {
    %c0_i32 = arith.constant 0 : i32
    %c0_i32_0 = arith.constant 0 : i32
    %c0_i32_1 = arith.constant 0 : i32
    return %c0_i32, %c0_i32_0 : i32, i32
  }
  func.func @transform_3(%arg0: i32) -> (i32, i32, i32) {
    %c0_i32 = arith.constant 0 : i32
    %c0_i32_0 = arith.constant 0 : i32
    %c0_i32_1 = arith.constant 0 : i32
    %c0_i32_2 = arith.constant 0 : i32
    return %c0_i32, %c0_i32_0, %c0_i32_1 : i32, i32, i32
  }
  func.func @transform_4(%arg0: i32) -> (i32, i32) {
    %c0_i32 = arith.constant 0 : i32
    %c0_i32_0 = arith.constant 0 : i32
    %c0_i32_1 = arith.constant 0 : i32
    return %c0_i32, %c0_i32_0 : i32, i32
  }
  func.func @transform_5(%arg0: i32) -> (i32, i32) {
    %c0_i32 = arith.constant 0 : i32
    %c0_i32_0 = arith.constant 0 : i32
    %c0_i32_1 = arith.constant 0 : i32
    return %c0_i32, %c0_i32_0 : i32, i32
  }
  func.func @transform_6(%arg0: i32) -> (i32, i32, i32) {
    %c0_i32 = arith.constant 0 : i32
    %c0_i32_0 = arith.constant 0 : i32
    %c0_i32_1 = arith.constant 0 : i32
    %c0_i32_2 = arith.constant 0 : i32
    return %c0_i32, %c0_i32_0, %c0_i32_1 : i32, i32, i32
  }
}

</mosaic_0001>

<llo_original>
// kernel: boundary_enhance_forward.1
$region0: #{boundary_enhance_forward.1}
  #allocation0 [shape = 'u32[]', space=smem, size = 0x4, offset = 0x4, fixed_abs, tag = 'smem constant byte address 0x4 - core index']
  #allocation1 [shape = 'u32[144,128]{1,0:T(1,128)}', space=vmem, size = 0x12000, scoped, tag = 'internal scratch']
  #allocation2 [shape = 'f32[2,512]{1,0:T(2,128)}', space=vmem, size = 0x1000, scoped, tag = 'scratch operand']
  #allocation3 [shape = 'f32[2,512]{1,0:T(2,128)}', space=vmem, size = 0x1000, scoped, tag = 'scratch operand']
  %s0 = inlined_call_operand.vmem [shape: f32[2,16,512], index: 0, kind: input, shape index: {}]
  %s1 = inlined_call_operand.vmem [shape: f32[4,16,16], index: 1, kind: input, shape index: {}]
  %s2 = inlined_call_operand.vmem [shape: f32[512,512], index: 2, kind: input, shape index: {}]
  %s3 = inlined_call_operand.vmem [shape: f32[3,512,512], index: 3, kind: input, shape index: {}]
  %s4 = inlined_call_operand.vmem [shape: f32[1,32], index: 4, kind: input, shape index: {}]
  %s5 = inlined_call_operand.vmem [shape: f32[1,32], index: 5, kind: input, shape index: {}]
  %s6 = inlined_call_operand.vmem [shape: f32[2,16,512], index: 6, kind: output, shape index: {}]
  %s7 = sld [smem:[#allocation0]]
  $region65: #{boundary_enhance_forward.1} parent=0
    _
  %s9 = ssub.s32 1, %s7
  %s10 = scalar_select 0, %s9, %s7
  loop: start=0, step=1, limit=4
  $region2: #{boundary_enhance_forward.1} parent=0 // loop_pre_header
    _
  $region3: #{boundary_enhance_forward.1} parent=0 // loop_header
    %s12 = sphi 0, %s16
    %p13 = scmp.ge.s32.totalorder %s12, 4
    %s22 = sphi 0, %s24
    %s25 = sphi 0, %s22
    %s26 = sphi 0, %s25
    %s42 = sphi 0, %s26
    %s46 = sphi 0, %s46
    %s48 = sphi 0, %s46
    %s49 = sphi 0, %s48
    %s63 = sphi 0, %s49
    %s67 = sphi 0, %s67
    %s69 = sphi 0, %s67
    %s70 = sphi 0, %s69
    %s84 = sphi 0, %s70
    %s88 = sphi 0, %s88
    %s90 = sphi 0, %s88
    %s91 = sphi 0, %s90
    %s105 = sphi 0, %s91
    %s109 = sphi 0, %s109
    %s111 = sphi 0, %s109
    %s112 = sphi 0, %s111
    %s126 = sphi 0, %s112
    %s130 = sphi 0, %s130
    %s132 = sphi 0, %s130
    %s133 = sphi 0, %s132
    %s147 = sphi 0, %s133
    %s151 = sphi 0, %s151
    %s153 = sphi 0, %s151
    %s154 = sphi 0, %s153
    %s168 = sphi 0, %s154
  $region4: #{boundary_enhance_forward.1} parent=0 // loop_header_branch
    %15 = sbr.rel (%p13) target = $region8
  $region5: #{boundary_enhance_forward.1} parent=0 // loop_body
    %s17 = ssub.s32 %s12, 1
    %s18 = ssub.s32 %s12, 2
    %s19 = sadd.s32 %s12, 1
    %s20 = ssub.s32 %s12, %s19
    %p21 = scmp.eq.s32.totalorder %s20, 0
    %s23 = sadd.s32 %s22, 1
    %s24 = scalar_select %p21, %s22, %s23
    %p27 = pneg %p21
    %p28 = scmp.eq.s32.totalorder %s12, 1
    %p29 = por %p27, %p28
    %p30 = scmp.ne.s32.totalorder %s22, %s25
    %p31 = scmp.eq.s32.totalorder %s12, 0
    %p32 = por %p30, %p31
    %p33 = scmp.ne.s32.totalorder %s22, %s25
    %p34 = scmp.eq.s32.totalorder %s17, 1
    %p35 = por %p33, %p34
    %p36 = scmp.ne.s32.totalorder %s25, %s26
    %p37 = scmp.eq.s32.totalorder %s17, 0
    %p38 = por %p36, %p37
    %p39 = scmp.ne.s32.totalorder %s25, %s26
    %p40 = scmp.eq.s32.totalorder %s18, 1
    %p41 = por %p39, %p40
    %p43 = scmp.ne.s32.totalorder %s26, %s42
    %p44 = scmp.eq.s32.totalorder %s18, 0
    %p45 = por %p43, %p44
    %s47 = sadd.s32 %s46, 1
    %p50 = scmp.eq.s32.totalorder %s12, 1
    %p51 = scmp.ne.s32.totalorder %s46, %s48
    %p52 = scmp.eq.s32.totalorder %s12, 0
    %p53 = por %p51, %p52
    %p54 = scmp.ne.s32.totalorder %s46, %s48
    %p55 = scmp.eq.s32.totalorder %s17, 1
    %p56 = por %p54, %p55
    %p57 = scmp.ne.s32.totalorder %s48, %s49
    %p58 = scmp.eq.s32.totalorder %s17, 0
    %p59 = por %p57, %p58
    %p60 = scmp.ne.s32.totalorder %s48, %s49
    %p61 = scmp.eq.s32.totalorder %s18, 1
    %p62 = por %p60, %p61
    %p64 = scmp.ne.s32.totalorder %s49, %s63
    %p65 = scmp.eq.s32.totalorder %s18, 0
    %p66 = por %p64, %p65
    %s68 = sadd.s32 %s67, 1
    %p71 = scmp.eq.s32.totalorder %s12, 1
    %p72 = scmp.ne.s32.totalorder %s67, %s69
    %p73 = scmp.eq.s32.totalorder %s12, 0
    %p74 = por %p72, %p73
    %p75 = scmp.ne.s32.totalorder %s67, %s69
    %p76 = scmp.eq.s32.totalorder %s17, 1
    %p77 = por %p75, %p76
    %p78 = scmp.ne.s32.totalorder %s69, %s70
    %p79 = scmp.eq.s32.totalorder %s17, 0
    %p80 = por %p78, %p79
    %p81 = scmp.ne.s32.totalorder %s69, %s70
    %p82 = scmp.eq.s32.totalorder %s18, 1
    %p83 = por %p81, %p82
    %p85 = scmp.ne.s32.totalorder %s70, %s84
    %p86 = scmp.eq.s32.totalorder %s18, 0
    %p87 = por %p85, %p86
    %s89 = sadd.s32 %s88, 1
    %p92 = scmp.eq.s32.totalorder %s12, 1
    %p93 = scmp.ne.s32.totalorder %s88, %s90
    %p94 = scmp.eq.s32.totalorder %s12, 0
    %p95 = por %p93, %p94
    %p96 = scmp.ne.s32.totalorder %s88, %s90
    %p97 = scmp.eq.s32.totalorder %s17, 1
    %p98 = por %p96, %p97
    %p99 = scmp.ne.s32.totalorder %s90, %s91
    %p100 = scmp.eq.s32.totalorder %s17, 0
    %p101 = por %p99, %p100
    %p102 = scmp.ne.s32.totalorder %s90, %s91
    %p103 = scmp.eq.s32.totalorder %s18, 1
    %p104 = por %p102, %p103
    %p106 = scmp.ne.s32.totalorder %s91, %s105
    %p107 = scmp.eq.s32.totalorder %s18, 0
    %p108 = por %p106, %p107
    %s110 = sadd.s32 %s109, 1
    %p113 = scmp.eq.s32.totalorder %s12, 1
    %p114 = scmp.ne.s32.totalorder %s109, %s111
    %p115 = scmp.eq.s32.totalorder %s12, 0
    %p116 = por %p114, %p115
    %p117 = scmp.ne.s32.totalorder %s109, %s111
    %p118 = scmp.eq.s32.totalorder %s17, 1
    %p119 = por %p117, %p118
    %p120 = scmp.ne.s32.totalorder %s111, %s112
    %p121 = scmp.eq.s32.totalorder %s17, 0
    %p122 = por %p120, %p121
    %p123 = scmp.ne.s32.totalorder %s111, %s112
    %p124 = scmp.eq.s32.totalorder %s18, 1
    %p125 = por %p123, %p124
    %p127 = scmp.ne.s32.totalorder %s112, %s126
    %p128 = scmp.eq.s32.totalorder %s18, 0
    %p129 = por %p127, %p128
    %s131 = sadd.s32 %s130, 1
    %p134 = scmp.eq.s32.totalorder %s12, 1
    %p135 = scmp.ne.s32.totalorder %s130, %s132
    %p136 = scmp.eq.s32.totalorder %s12, 0
    %p137 = por %p135, %p136
    %p138 = scmp.ne.s32.totalorder %s130, %s132
    %p139 = scmp.eq.s32.totalorder %s17, 1
    %p140 = por %p138, %p139
    %p141 = scmp.ne.s32.totalorder %s132, %s133
    %p142 = scmp.eq.s32.totalorder %s17, 0
    %p143 = por %p141, %p142
    %p144 = scmp.ne.s32.totalorder %s132, %s133
    %p145 = scmp.eq.s32.totalorder %s18, 1
    %p146 = por %p144, %p145
    %p148 = scmp.ne.s32.totalorder %s133, %s147
    %p149 = scmp.eq.s32.totalorder %s18, 0
    %p150 = por %p148, %p149
    %s152 = sadd.s32 %s151, 1
    %p155 = scmp.eq.s32.totalorder %s12, 1
    %p156 = scmp.ne.s32.totalorder %s151, %s153
    %p157 = scmp.eq.s32.totalorder %s12, 0
    %p158 = por %p156, %p157
    %p159 = scmp.ne.s32.totalorder %s151, %s153
    %p160 = scmp.eq.s32.totalorder %s17, 1
    %p161 = por %p159, %p160
    %p162 = scmp.ne.s32.totalorder %s153, %s154
    %p163 = scmp.eq.s32.totalorder %s17, 0
    %p164 = por %p162, %p163
    %p165 = scmp.ne.s32.totalorder %s153, %s154
    %p166 = scmp.eq.s32.totalorder %s18, 1
    %p167 = por %p165, %p166
    %p169 = scmp.ne.s32.totalorder %s154, %s168
    %p170 = scmp.eq.s32.totalorder %s18, 0
    %p171 = por %p169, %p170
    %p172 = scmp.le.s32.totalorder 1, %s12
    %p173 = scmp.lt.s32.totalorder %s12, 3
    %p174 = pnand %p172, %p173
    %p175 = pneg %p174
    // Predicated region
    $region9: #{boundary_enhance_forward.1} parent=5 // pred_check
      _
    $region10: #{boundary_enhance_forward.1} parent=5 // pred_check_branch
      %177 = sbr.rel (%p174) target = $region12
    $region11: #{boundary_enhance_forward.1} parent=5 // pred_region
      %s178 = ssub.s32 %s12, 1
      // Predicated region
      $region13: #{boundary_enhance_forward.1} parent=11 // pred_check
        %p179 = pneg %p59
      $region14: #{boundary_enhance_forward.1} parent=11 // pred_check_branch
        %181 = sbr.rel (%p179) target = $region16
      $region15: #{boundary_enhance_forward.1} parent=11 // pred_region
        _
      $region16: #{boundary_enhance_forward.1} parent=11 // pred_fallthru
        _
      // Predicated region
      $region17: #{boundary_enhance_forward.1} parent=11 // pred_check
        %p182 = pneg %p80
      $region18: #{boundary_enhance_forward.1} parent=11 // pred_check_branch
        %184 = sbr.rel (%p182) target = $region20
      $region19: #{boundary_enhance_forward.1} parent=11 // pred_region
        _
      $region20: #{boundary_enhance_forward.1} parent=11 // pred_fallthru
        _
      // Predicated region
      $region21: #{boundary_enhance_forward.1} parent=11 // pred_check
        %p185 = pneg %p101
      $region22: #{boundary_enhance_forward.1} parent=11 // pred_check_branch
        %187 = sbr.rel (%p185) target = $region24
      $region23: #{boundary_enhance_forward.1} parent=11 // pred_region
        _
      $region24: #{boundary_enhance_forward.1} parent=11 // pred_fallthru
        _
      // Predicated region
      $region25: #{boundary_enhance_forward.1} parent=11 // pred_check
        %p188 = pneg %p122
      $region26: #{boundary_enhance_forward.1} parent=11 // pred_check_branch
        %190 = sbr.rel (%p188) target = $region28
      $region27: #{boundary_enhance_forward.1} parent=11 // pred_region
        _
      $region28: #{boundary_enhance_forward.1} parent=11 // pred_fallthru
        _
      // Predicated region
      $region29: #{boundary_enhance_forward.1} parent=11 // pred_check
        %p191 = pneg %p143
      $region30: #{boundary_enhance_forward.1} parent=11 // pred_check_branch
        %193 = sbr.rel (%p191) target = $region32
      $region31: #{boundary_enhance_forward.1} parent=11 // pred_region
        _
      $region32: #{boundary_enhance_forward.1} parent=11 // pred_fallthru
        _
    $region12: #{boundary_enhance_forward.1} parent=5 // pred_fallthru
      _
    %p194 = scmp.lt.s32.totalorder %s12, 2
    // Predicated region
    $region33: #{boundary_enhance_forward.1} parent=5 // pred_check
      %p195 = pneg %p194
    $region34: #{boundary_enhance_forward.1} parent=5 // pred_check_branch
      %197 = sbr.rel (%p195) target = $region36
    $region35: #{boundary_enhance_forward.1} parent=5 // pred_region
      // Predicated region
      $region37: #{boundary_enhance_forward.1} parent=35 // pred_check
        %p198 = pneg %p32
      $region38: #{boundary_enhance_forward.1} parent=35 // pred_check_branch
        %200 = sbr.rel (%p198) target = $region40
      $region39: #{boundary_enhance_forward.1} parent=35 // pred_region
        %p201 = scmp.lt.s32.totalorder %s12, 1
        %s202 = scalar_select %p201, %s12, 1
        %s203 = smul.addr %s202, 8
        %s204 = smul.addr %s203, 8
        %s205 = scalar_lea.vmem %s0, %s204
      $region40: #{boundary_enhance_forward.1} parent=35 // pred_fallthru
        _
    $region36: #{boundary_enhance_forward.1} parent=5 // pred_fallthru
      _
    %p206 = scmp.le.s32.totalorder 1, %s12
    %p207 = scmp.lt.s32.totalorder %s12, 3
    %p208 = pnand %p206, %p207
    %p209 = pneg %p208
    // Predicated region
    $region41: #{boundary_enhance_forward.1} parent=5 // pred_check
      _
    $region42: #{boundary_enhance_forward.1} parent=5 // pred_check_branch
      %211 = sbr.rel (%p208) target = $region44
    $region43: #{boundary_enhance_forward.1} parent=5 // pred_region
      %s212 = ssub.s32 %s12, 1
      %p213 = scmp.lt.s32.totalorder %s17, 1
      %s214 = scalar_select %p213, %s17, 1
      %s215 = smul.addr %s214, 8
      %s216 = smul.addr %s215, 8
      %s217 = scalar_lea.vmem %s0, %s216
      %p218 = pneg %p38
      %p219 = pneg %p35
      %p220 = pneg %p59
      %p221 = pneg %p56
      %p222 = pneg %p80
      %p223 = pneg %p77
      %p224 = pneg %p101
      %p225 = pneg %p98
      %p226 = pneg %p122
      %p227 = pneg %p119
      %p228 = pneg %p143
      %p229 = pneg %p140
      %p230 = pneg %p164
      %p231 = pneg %p161
      %p232 = scmp.lt.s32.totalorder %s17, 1
      %s233 = scalar_select %p232, %s17, 1
      %s234 = smul.addr %s233, 8
      %s235 = smul.addr %s234, 8
      %s236 = scalar_lea.vmem %s0, %s235
      %p237 = scmp.eq.s32.totalorder %s17, 0
      // Predicated region
      $region45: #{boundary_enhance_forward.1} parent=43 // pred_check
        %p238 = pneg %p237
      $region46: #{boundary_enhance_forward.1} parent=43 // pred_check_branch
        %240 = sbr.rel (%p238) target = $region48
      $region47: #{boundary_enhance_forward.1} parent=43 // pred_region
        %241 = vst [vmem:[#allocation2] sm:$0xff] 0.0
      $region48: #{boundary_enhance_forward.1} parent=43 // pred_fallthru
        _
      %v242 = vld [vmem:[%s236] sm:$0xff]
      %v243 = vld [vmem:[%s236 + $0x8] sm:$0xff]
      %v244 = vld [vmem:[%s236 + $0x10] sm:$0xff]
      %v245 = vld [vmem:[%s236 + $0x18] sm:$0xff]
      %v246 = vld [vmem:[%s236 + $0x20] sm:$0xff]
      %v247 = vld [vmem:[%s236 + $0x28] sm:$0xff]
      %v248 = vld [vmem:[%s236 + $0x30] sm:$0xff]
      %v249 = vld [vmem:[%s236 + $0x38] sm:$0xff]
      %v250 = vld [vmem:[%s1] sm:$0xff]
      %v251 = vld [vmem:[%s1 + $0x8] sm:$0xff]
      %vm252 = vcmask 130048
      %v254 = vsel %vm252, %v250, 0
      %v257 = vsel %vm252, %v251, 0
      %259 = vmatprep.subr.mxu0 %v243
      %260 = vmatpush1.msra.mxu0 %v242
      %261 = vmatprep.subr.mxu0 %v247
      %262 = vmatpush1.msra.mxu0 %v246
      %263 = vmatprep.subr.mxu0 0.0
      %264 = vmatpush1.msra.mxu0 0.0
      %265 = vmatprep.subr.mxu0 0.0
      %266 = vmatpush1.msra.mxu0 0.0
      %267 = vmatprep.subr.mxu0 0.0
      %268 = vmatpush1.msra.mxu0 0.0
      %269 = vmatprep.subr.mxu0 0.0
      %270 = vmatpush1.msra.mxu0 0.0
      %271 = vmatprep.subr.mxu0 0.0
      %272 = vmatpush1.msra.mxu0 0.0
      %273 = vmatprep.subr.mxu0 0.0
      %274 = vmatpush1.msra.mxu0 0.0
      %275 = vmatprep.subr.mxu0 0.0
      %276 = vmatpush1.msra.mxu0 0.0
      %277 = vmatprep.subr.mxu0 0.0
      %278 = vmatpush1.msra.mxu0 0.0
      %279 = vmatprep.subr.mxu0 0.0
      %280 = vmatpush1.msra.mxu0 0.0
      %281 = vmatprep.subr.mxu0 0.0
      %282 = vmatpush1.msra.mxu0 0.0
      %283 = vmatprep.subr.mxu0 0.0
      %284 = vmatpush1.msra.mxu0 0.0
      %285 = vmatprep.subr.mxu0 0.0
      %286 = vmatpush1.msra.mxu0 0.0
      %287 = vmatprep.subr.mxu0 0.0
      %288 = vmatpush1.msra.mxu0 0.0
      %289 = vmatprep.subr.mxu0 0.0
      %290 = vmatpush1.msra.mxu0 0.0
      %291 = vmatprep.subr.mxu0 0.0
      %292 = vmatpush1.msra.mxu0 0.0
      %293 = vmatprep.subr.mxu0 0.0
      %294 = vmatpush1.msra.mxu0 0.0
      %295 = vmatprep.subr.mxu0 0.0
      %296 = vmatpush1.msra.mxu0 0.0
      %297 = vmatprep.subr.mxu0 0.0
      %298 = vmatpush1.msra.mxu0 0.0
      %299 = vmatprep.subr.mxu0 0.0
      %300 = vmatpush1.msra.mxu0 0.0
      %301 = vmatprep.subr.mxu0 0.0
      %302 = vmatpush1.msra.mxu0 0.0
      %303 = vmatprep.subr.mxu0 0.0
      %304 = vmatpush1.msra.mxu0 0.0
      %305 = vmatprep.subr.mxu0 0.0
      %306 = vmatpush1.msra.mxu0 0.0
      %307 = vmatprep.subr.mxu0 0.0
      %308 = vmatpush1.msra.mxu0 0.0
      %309 = vmatprep.subr.mxu0 0.0
      %310 = vmatpush1.msra.mxu0 0.0
      %311 = vmatprep.subr.mxu0 0.0
      %312 = vmatpush1.msra.mxu0 0.0
      %313 = vmatprep.subr.mxu0 0.0
      %314 = vmatpush1.msra.mxu0 0.0
      %315 = vmatprep.subr.mxu0 0.0
      %316 = vmatpush1.msra.mxu0 0.0
      %317 = vmatprep.subr.mxu0 0.0
      %318 = vmatpush1.msra.mxu0 0.0
      %319 = vmatprep.subr.mxu0 0.0
      %320 = vmatpush1.msra.mxu0 0.0
      %321 = vmatprep.subr.mxu0 0.0
      %322 = vmatpush1.msra.mxu0 0.0
      %323 = vmatprep.mubr.f32.mxu0 0.0
      %324 = vmatmul.mubr.f32.gmra.mrb[0].mxu0 %v254
      %v325 = vpop.f32.mrb[0].mxu0
      %v326 = vadd.f32 0.0, %v325
      %v327 = vpop.f32.mrb[0].mxu0
      %v328 = vadd.f32 0.0, %v327
      %329 = vmatprep.mubr.f32.mxu0 0.0
      %330 = vmatmul.mubr.f32.gmra.mrb[0].mxu0 %v257
      %v331 = vpop.f32.mrb[0].mxu0
      %v332 = vadd.f32 0.0, %v331
      %v333 = vpop.f32.mrb[0].mxu0
      %v334 = vadd.f32 0.0, %v333
      %335 = vdwg.mxu0
      %336 = vmatprep.subr.mxu0 %v245
      %337 = vmatpush1.msra.mxu0 %v244
      %338 = vmatprep.subr.mxu0 %v249
      %339 = vmatpush1.msra.mxu0 %v248
      %340 = vmatprep.subr.mxu0 0.0
      %341 = vmatpush1.msra.mxu0 0.0
      %342 = vmatprep.subr.mxu0 0.0
      %343 = vmatpush1.msra.mxu0 0.0
      %344 = vmatprep.subr.mxu0 0.0
      %345 = vmatpush1.msra.mxu0 0.0
      %346 = vmatprep.subr.mxu0 0.0
      %347 = vmatpush1.msra.mxu0 0.0
      %348 = vmatprep.subr.mxu0 0.0
      %349 = vmatpush1.msra.mxu0 0.0
      %350 = vmatprep.subr.mxu0 0.0
      %351 = vmatpush1.msra.mxu0 0.0
      %352 = vmatprep.subr.mxu0 0.0
      %353 = vmatpush1.msra.mxu0 0.0
      %354 = vmatprep.subr.mxu0 0.0
      %355 = vmatpush1.msra.mxu0 0.0
      %356 = vmatprep.subr.mxu0 0.0
      %357 = vmatpush1.msra.mxu0 0.0
      %358 = vmatprep.subr.mxu0 0.0
      %359 = vmatpush1.msra.mxu0 0.0
      %360 = vmatprep.subr.mxu0 0.0
      %361 = vmatpush1.msra.mxu0 0.0
      %362 = vmatprep.subr.mxu0 0.0
      %363 = vmatpush1.msra.mxu0 0.0
      %364 = vmatprep.subr.mxu0 0.0
      %365 = vmatpush1.msra.mxu0 0.0
      %366 = vmatprep.subr.mxu0 0.0
      %367 = vmatpush1.msra.mxu0 0.0
      %368 = vmatprep.subr.mxu0 0.0
      %369 = vmatpush1.msra.mxu0 0.0
      %370 = vmatprep.subr.mxu0 0.0
      %371 = vmatpush1.msra.mxu0 0.0
      %372 = vmatprep.subr.mxu0 0.0
      %373 = vmatpush1.msra.mxu0 0.0
      %374 = vmatprep.subr.mxu0 0.0
      %375 = vmatpush1.msra.mxu0 0.0
      %376 = vmatprep.subr.mxu0 0.0
      %377 = vmatpush1.msra.mxu0 0.0
      %378 = vmatprep.subr.mxu0 0.0
      %379 = vmatpush1.msra.mxu0 0.0
      %380 = vmatprep.subr.mxu0 0.0
      %381 = vmatpush1.msra.mxu0 0.0
      %382 = vmatprep.subr.mxu0 0.0
      %383 = vmatpush1.msra.mxu0 0.0
      %384 = vmatprep.subr.mxu0 0.0
      %385 = vmatpush1.msra.mxu0 0.0
      %386 = vmatprep.subr.mxu0 0.0
      %387 = vmatpush1.msra.mxu0 0.0
      %388 = vmatprep.subr.mxu0 0.0
      %389 = vmatpush1.msra.mxu0 0.0
      %390 = vmatprep.subr.mxu0 0.0
      %391 = vmatpush1.msra.mxu0 0.0
      %392 = vmatprep.subr.mxu0 0.0
      %393 = vmatpush1.msra.mxu0 0.0
      %394 = vmatprep.subr.mxu0 0.0
      %395 = vmatpush1.msra.mxu0 0.0
      %396 = vmatprep.subr.mxu0 0.0
      %397 = vmatpush1.msra.mxu0 0.0
      %398 = vmatprep.subr.mxu0 0.0
      %399 = vmatpush1.msra.mxu0 0.0
      %400 = vmatprep.mubr.f32.mxu0 0.0
      %401 = vmatmul.mubr.f32.gmra.mrb[0].mxu0 %v254
      %v402 = vpop.f32.mrb[0].mxu0
      %v403 = vadd.f32 0.0, %v402
      %v404 = vpop.f32.mrb[0].mxu0
      %v405 = vadd.f32 0.0, %v404
      %406 = vmatprep.mubr.f32.mxu0 0.0
      %407 = vmatmul.mubr.f32.gmra.mrb[0].mxu0 %v257
      %v408 = vpop.f32.mrb[0].mxu0
      %v409 = vadd.f32 0.0, %v408
      %v410 = vpop.f32.mrb[0].mxu0
      %v411 = vadd.f32 0.0, %v410
      %412 = vdwg.mxu0
      %v413 = vld [vmem:[%s2] sm:$0xff]
      %v414 = vld [vmem:[%s2 + $0x8] sm:$0xff]
      %v415 = vld [vmem:[%s2 + $0x10] sm:$0xff]
      %v416 = vld [vmem:[%s2 + $0x18] sm:$0xff]
      %v417 = vld [vmem:[%s2 + $0x20] sm:$0xff]
      %v418 = vld [vmem:[%s2 + $0x28] sm:$0xff]
      %v419 = vld [vmem:[%s2 + $0x30] sm:$0xff]
      %v420 = vld [vmem:[%s2 + $0x38] sm:$0xff]
      %v421 = vld [vmem:[%s2 + $0x40] sm:$0xff]
      %v422 = vld [vmem:[%s2 + $0x48] sm:$0xff]
      %v423 = vld [vmem:[%s2 + $0x50] sm:$0xff]
      %v424 = vld [vmem:[%s2 + $0x58] sm:$0xff]
      %v425 = vld [vmem:[%s2 + $0x60] sm:$0xff]
      %v426 = vld [vmem:[%s2 + $0x68] sm:$0xff]
      %v427 = vld [vmem:[%s2 + $0x70] sm:$0xff]
      %v428 = vld [vmem:[%s2 + $0x78] sm:$0xff]
      %v429 = vld [vmem:[%s2 + $0x80] sm:$0xff]
      %v430 = vld [vmem:[%s2 + $0x88] sm:$0xff]
      %v431 = vld [vmem:[%s2 + $0x90] sm:$0xff]
      %v432 = vld [vmem:[%s2 + $0x98] sm:$0xff]
      %v433 = vld [vmem:[%s2 + $0xa0] sm:$0xff]
      %v434 = vld [vmem:[%s2 + $0xa8] sm:$0xff]
      %v435 = vld [vmem:[%s2 + $0xb0] sm:$0xff]
      %v436 = vld [vmem:[%s2 + $0xb8] sm:$0xff]
      %v437 = vld [vmem:[%s2 + $0xc0] sm:$0xff]
      %v438 = vld [vmem:[%s2 + $0xc8] sm:$0xff]
      %v439 = vld [vmem:[%s2 + $0xd0] sm:$0xff]
      %v440 = vld [vmem:[%s2 + $0xd8] sm:$0xff]
      %v441 = vld [vmem:[%s2 + $0xe0] sm:$0xff]
      %v442 = vld [vmem:[%s2 + $0xe8] sm:$0xff]
      %v443 = vld [vmem:[%s2 + $0xf0] sm:$0xff]
      %v444 = vld [vmem:[%s2 + $0xf8] sm:$0xff]
      %v445 = vld [vmem:[%s2 + $0x100] sm:$0xff]
      %v446 = vld [vmem:[%s2 + $0x108] sm:$0xff]
      %v447 = vld [vmem:[%s2 + $0x110] sm:$0xff]
      %v448 = vld [vmem:[%s2 + $0x118] sm:$0xff]
      %v449 = vld [vmem:[%s2 + $0x120] sm:$0xff]
      %v450 = vld [vmem:[%s2 + $0x128] sm:$0xff]
      %v451 = vld [vmem:[%s2 + $0x130] sm:$0xff]
      %v452 = vld [vmem:[%s2 + $0x138] sm:$0xff]
      %v453 = vld [vmem:[%s2 + $0x140] sm:$0xff]
      %v454 = vld [vmem:[%s2 + $0x148] sm:$0xff]
      %v455 = vld [vmem:[%s2 + $0x150] sm:$0xff]
      %v456 = vld [vmem:[%s2 + $0x158] sm:$0xff]
      %v457 = vld [vmem:[%s2 + $0x160] sm:$0xff]
      %v458 = vld [vmem:[%s2 + $0x168] sm:$0xff]
      %v459 = vld [vmem:[%s2 + $0x170] sm:$0xff]
      %v460 = vld [vmem:[%s2 + $0x178] sm:$0xff]
      %v461 = vld [vmem:[%s2 + $0x180] sm:$0xff]
      %v462 = vld [vmem:[%s2 + $0x188] sm:$0xff]
      %v463 = vld [vmem:[%s2 + $0x190] sm:$0xff]
      %v464 = vld [vmem:[%s2 + $0x198] sm:$0xff]
      %v465 = vld [vmem:[%s2 + $0x1a0] sm:$0xff]
      %v466 = vld [vmem:[%s2 + $0x1a8] sm:$0xff]
      %v467 = vld [vmem:[%s2 + $0x1b0] sm:$0xff]
      %v468 = vld [vmem:[%s2 + $0x1b8] sm:$0xff]
      %v469 = vld [vmem:[%s2 + $0x1c0] sm:$0xff]
      %v470 = vld [vmem:[%s2 + $0x1c8] sm:$0xff]
      %v471 = vld [vmem:[%s2 + $0x1d0] sm:$0xff]
      %v472 = vld [vmem:[%s2 + $0x1d8] sm:$0xff]
      %v473 = vld [vmem:[%s2 + $0x1e0] sm:$0xff]
      %v474 = vld [vmem:[%s2 + $0x1e8] sm:$0xff]
      %v475 = vld [vmem:[%s2 + $0x1f0] sm:$0xff]
      %v476 = vld [vmem:[%s2 + $0x1f8] sm:$0xff]
      %v477 = vld [vmem:[%s2 + $0x200] sm:$0xff]
      %v478 = vld [vmem:[%s2 + $0x208] sm:$0xff]
      %v479 = vld [vmem:[%s2 + $0x210] sm:$0xff]
      %v480 = vld [vmem:[%s2 + $0x218] sm:$0xff]
      %v481 = vld [vmem:[%s2 + $0x220] sm:$0xff]
      %v482 = vld [vmem:[%s2 + $0x228] sm:$0xff]
      %v483 = vld [vmem:[%s2 + $0x230] sm:$0xff]
      %v484 = vld [vmem:[%s2 + $0x238] sm:$0xff]
      %v485 = vld [vmem:[%s2 + $0x240] sm:$0xff]
      %v486 = vld [vmem:[%s2 + $0x248] sm:$0xff]
      %v487 = vld [vmem:[%s2 + $0x250] sm:$0xff]
      %v488 = vld [vmem:[%s2 + $0x258] sm:$0xff]
      %v489 = vld [vmem:[%s2 + $0x260] sm:$0xff]
      %v490 = vld [vmem:[%s2 + $0x268] sm:$0xff]
      %v491 = vld [vmem:[%s2 + $0x270] sm:$0xff]
      %v492 = vld [vmem:[%s2 + $0x278] sm:$0xff]
      %v493 = vld [vmem:[%s2 + $0x280] sm:$0xff]
      %v494 = vld [vmem:[%s2 + $0x288] sm:$0xff]
      %v495 = vld [vmem:[%s2 + $0x290] sm:$0xff]
      %v496 = vld [vmem:[%s2 + $0x298] sm:$0xff]
      %v497 = vld [vmem:[%s2 + $0x2a0] sm:$0xff]
      %v498 = vld [vmem:[%s2 + $0x2a8] sm:$0xff]
      %v499 = vld [vmem:[%s2 + $0x2b0] sm:$0xff]
      %v500 = vld [vmem:[%s2 + $0x2b8] sm:$0xff]
      %v501 = vld [vmem:[%s2 + $0x2c0] sm:$0xff]
      %v502 = vld [vmem:[%s2 + $0x2c8] sm:$0xff]
      %v503 = vld [vmem:[%s2 + $0x2d0] sm:$0xff]
      %v504 = vld [vmem:[%s2 + $0x2d8] sm:$0xff]
      %v505 = vld [vmem:[%s2 + $0x2e0] sm:$0xff]
      %v506 = vld [vmem:[%s2 + $0x2e8] sm:$0xff]
      %v507 = vld [vmem:[%s2 + $0x2f0] sm:$0xff]
      %v508 = vld [vmem:[%s2 + $0x2f8] sm:$0xff]
      %v509 = vld [vmem:[%s2 + $0x300] sm:$0xff]
      %v510 = vld [vmem:[%s2 + $0x308] sm:$0xff]
      %v511 = vld [vmem:[%s2 + $0x310] sm:$0xff]
      %v512 = vld [vmem:[%s2 + $0x318] sm:$0xff]
      %v513 = vld [vmem:[%s2 + $0x320] sm:$0xff]
      %v514 = vld [vmem:[%s2 + $0x328] sm:$0xff]
      %v515 = vld [vmem:[%s2 + $0x330] sm:$0xff]
      %v516 = vld [vmem:[%s2 + $0x338] sm:$0xff]
      %v517 = vld [vmem:[%s2 + $0x340] sm:$0xff]
      %v518 = vld [vmem:[%s2 + $0x348] sm:$0xff]
      %v519 = vld [vmem:[%s2 + $0x350] sm:$0xff]
      %v520 = vld [vmem:[%s2 + $0x358] sm:$0xff]
      %v521 = vld [vmem:[%s2 + $0x360] sm:$0xff]
      %v522 = vld [vmem:[%s2 + $0x368] sm:$0xff]
      %v523 = vld [vmem:[%s2 + $0x370] sm:$0xff]
      %v524 = vld [vmem:[%s2 + $0x378] sm:$0xff]
      %v525 = vld [vmem:[%s2 + $0x380] sm:$0xff]
      %v526 = vld [vmem:[%s2 + $0x388] sm:$0xff]
      %v527 = vld [vmem:[%s2 + $0x390] sm:$0xff]
      %v528 = vld [vmem:[%s2 + $0x398] sm:$0xff]
      %v529 = vld [vmem:[%s2 + $0x3a0] sm:$0xff]
      %v530 = vld [vmem:[%s2 + $0x3a8] sm:$0xff]
      %v531 = vld [vmem:[%s2 + $0x3b0] sm:$0xff]
      %v532 = vld [vmem:[%s2 + $0x3b8] sm:$0xff]
      %v533 = vld [vmem:[%s2 + $0x3c0] sm:$0xff]
      %v534 = vld [vmem:[%s2 + $0x3c8] sm:$0xff]
      %v535 = vld [vmem:[%s2 + $0x3d0] sm:$0xff]
      %v536 = vld [vmem:[%s2 + $0x3d8] sm:$0xff]
      %v537 = vld [vmem:[%s2 + $0x3e0] sm:$0xff]
      %v538 = vld [vmem:[%s2 + $0x3e8] sm:$0xff]
      %v539 = vld [vmem:[%s2 + $0x3f0] sm:$0xff]
      %v540 = vld [vmem:[%s2 + $0x3f8] sm:$0xff]
      %v541 = vld [vmem:[%s2 + $0x400] sm:$0xff]
      %v542 = vld [vmem:[%s2 + $0x408] sm:$0xff]
      %v543 = vld [vmem:[%s2 + $0x410] sm:$0xff]
      %v544 = vld [vmem:[%s2 + $0x418] sm:$0xff]
      %v545 = vld [vmem:[%s2 + $0x420] sm:$0xff]
      %v546 = vld [vmem:[%s2 + $0x428] sm:$0xff]
      %v547 = vld [vmem:[%s2 + $0x430] sm:$0xff]
      %v548 = vld [vmem:[%s2 + $0x438] sm:$0xff]
      %v549 = vld [vmem:[%s2 + $0x440] sm:$0xff]
      %v550 = vld [vmem:[%s2 + $0x448] sm:$0xff]
      %v551 = vld [vmem:[%s2 + $0x450] sm:$0xff]
      %v552 = vld [vmem:[%s2 + $0x458] sm:$0xff]
      %v553 = vld [vmem:[%s2 + $0x460] sm:$0xff]
      %v554 = vld [vmem:[%s2 + $0x468] sm:$0xff]
      %v555 = vld [vmem:[%s2 + $0x470] sm:$0xff]
      %v556 = vld [vmem:[%s2 + $0x478] sm:$0xff]
      %v557 = vld [vmem:[%s2 + $0x480] sm:$0xff]
      %v558 = vld [vmem:[%s2 + $0x488] sm:$0xff]
      %v559 = vld [vmem:[%s2 + $0x490] sm:$0xff]
      %v560 = vld [vmem:[%s2 + $0x498] sm:$0xff]
      %v561 = vld [vmem:[%s2 + $0x4a0] sm:$0xff]
      %v562 = vld [vmem:[%s2 + $0x4a8] sm:$0xff]
      %v563 = vld [vmem:[%s2 + $0x4b0] sm:$0xff]
      %v564 = vld [vmem:[%s2 + $0x4b8] sm:$0xff]
      %v565 = vld [vmem:[%s2 + $0x4c0] sm:$0xff]
      %v566 = vld [vmem:[%s2 + $0x4c8] sm:$0xff]
      %v567 = vld [vmem:[%s2 + $0x4d0] sm:$0xff]
      %v568 = vld [vmem:[%s2 + $0x4d8] sm:$0xff]
      %v569 = vld [vmem:[%s2 + $0x4e0] sm:$0xff]
      %v570 = vld [vmem:[%s2 + $0x4e8] sm:$0xff]
      %v571 = vld [vmem:[%s2 + $0x4f0] sm:$0xff]
      %v572 = vld [vmem:[%s2 + $0x4f8] sm:$0xff]
      %v573 = vld [vmem:[%s2 + $0x500] sm:$0xff]
      %v574 = vld [vmem:[%s2 + $0x508] sm:$0xff]
      %v575 = vld [vmem:[%s2 + $0x510] sm:$0xff]
      %v576 = vld [vmem:[%s2 + $0x518] sm:$0xff]
      %v577 = vld [vmem:[%s2 + $0x520] sm:$0xff]
      %v578 = vld [vmem:[%s2 + $0x528] sm:$0xff]
      %v579 = vld [vmem:[%s2 + $0x530] sm:$0xff]
      %v580 = vld [vmem:[%s2 + $0x538] sm:$0xff]
      %v581 = vld [vmem:[%s2 + $0x540] sm:$0xff]
      %v582 = vld [vmem:[%s2 + $0x548] sm:$0xff]
      %v583 = vld [vmem:[%s2 + $0x550] sm:$0xff]
      %v584 = vld [vmem:[%s2 + $0x558] sm:$0xff]
      %v585 = vld [vmem:[%s2 + $0x560] sm:$0xff]
      %v586 = vld [vmem:[%s2 + $0x568] sm:$0xff]
      %v587 = vld [vmem:[%s2 + $0x570] sm:$0xff]
      %v588 = vld [vmem:[%s2 + $0x578] sm:$0xff]
      %v589 = vld [vmem:[%s2 + $0x580] sm:$0xff]
      %v590 = vld [vmem:[%s2 + $0x588] sm:$0xff]
      %v591 = vld [vmem:[%s2 + $0x590] sm:$0xff]
      %v592 = vld [vmem:[%s2 + $0x598] sm:$0xff]
      %v593 = vld [vmem:[%s2 + $0x5a0] sm:$0xff]
      %v594 = vld [vmem:[%s2 + $0x5a8] sm:$0xff]
      %v595 = vld [vmem:[%s2 + $0x5b0] sm:$0xff]
      %v596 = vld [vmem:[%s2 + $0x5b8] sm:$0xff]
      %v597 = vld [vmem:[%s2 + $0x5c0] sm:$0xff]
      %v598 = vld [vmem:[%s2 + $0x5c8] sm:$0xff]
      %v599 = vld [vmem:[%s2 + $0x5d0] sm:$0xff]
      %v600 = vld [vmem:[%s2 + $0x5d8] sm:$0xff]
      %v601 = vld [vmem:[%s2 + $0x5e0] sm:$0xff]
      %v602 = vld [vmem:[%s2 + $0x5e8] sm:$0xff]
      %v603 = vld [vmem:[%s2 + $0x5f0] sm:$0xff]
      %v604 = vld [vmem:[%s2 + $0x5f8] sm:$0xff]
      %v605 = vld [vmem:[%s2 + $0x600] sm:$0xff]
      %v606 = vld [vmem:[%s2 + $0x608] sm:$0xff]
      %v607 = vld [vmem:[%s2 + $0x610] sm:$0xff]
      %v608 = vld [vmem:[%s2 + $0x618] sm:$0xff]
      %v609 = vld [vmem:[%s2 + $0x620] sm:$0xff]
      %v610 = vld [vmem:[%s2 + $0x628] sm:$0xff]
      %v611 = vld [vmem:[%s2 + $0x630] sm:$0xff]
      %v612 = vld [vmem:[%s2 + $0x638] sm:$0xff]
      %v613 = vld [vmem:[%s2 + $0x640] sm:$0xff]
      %v614 = vld [vmem:[%s2 + $0x648] sm:$0xff]
      %v615 = vld [vmem:[%s2 + $0x650] sm:$0xff]
      %v616 = vld [vmem:[%s2 + $0x658] sm:$0xff]
      %v617 = vld [vmem:[%s2 + $0x660] sm:$0xff]
      %v618 = vld [vmem:[%s2 + $0x668] sm:$0xff]
      %v619 = vld [vmem:[%s2 + $0x670] sm:$0xff]
      %v620 = vld [vmem:[%s2 + $0x678] sm:$0xff]
      %v621 = vld [vmem:[%s2 + $0x680] sm:$0xff]
      %v622 = vld [vmem:[%s2 + $0x688] sm:$0xff]
      %v623 = vld [vmem:[%s2 + $0x690] sm:$0xff]
      %v624 = vld [vmem:[%s2 + $0x698] sm:$0xff]
      %v625 = vld [vmem:[%s2 + $0x6a0] sm:$0xff]
      %v626 = vld [vmem:[%s2 + $0x6a8] sm:$0xff]
      %v627 = vld [vmem:[%s2 + $0x6b0] sm:$0xff]
      %v628 = vld [vmem:[%s2 + $0x6b8] sm:$0xff]
      %v629 = vld [vmem:[%s2 + $0x6c0] sm:$0xff]
      %v630 = vld [vmem:[%s2 + $0x6c8] sm:$0xff]
      %v631 = vld [vmem:[%s2 + $0x6d0] sm:$0xff]
      %v632 = vld [vmem:[%s2 + $0x6d8] sm:$0xff]
      %v633 = vld [vmem:[%s2 + $0x6e0] sm:$0xff]
      %v634 = vld [vmem:[%s2 + $0x6e8] sm:$0xff]
      %v635 = vld [vmem:[%s2 + $0x6f0] sm:$0xff]
      %v636 = vld [vmem:[%s2 + $0x6f8] sm:$0xff]
      %v637 = vld [vmem:[%s2 + $0x700] sm:$0xff]
      %v638 = vld [vmem:[%s2 + $0x708] sm:$0xff]
      %v639 = vld [vmem:[%s2 + $0x710] sm:$0xff]
      %v640 = vld [vmem:[%s2 + $0x718] sm:$0xff]
      %v641 = vld [vmem:[%s2 + $0x720] sm:$0xff]
      %v642 = vld [vmem:[%s2 + $0x728] sm:$0xff]
      %v643 = vld [vmem:[%s2 + $0x730] sm:$0xff]
      %v644 = vld [vmem:[%s2 + $0x738] sm:$0xff]
      %v645 = vld [vmem:[%s2 + $0x740] sm:$0xff]
      %v646 = vld [vmem:[%s2 + $0x748] sm:$0xff]
      %v647 = vld [vmem:[%s2 + $0x750] sm:$0xff]
      %v648 = vld [vmem:[%s2 + $0x758] sm:$0xff]
      %v649 = vld [vmem:[%s2 + $0x760] sm:$0xff]
      %v650 = vld [vmem:[%s2 + $0x768] sm:$0xff]
      %v651 = vld [vmem:[%s2 + $0x770] sm:$0xff]
      %v652 = vld [vmem:[%s2 + $0x778] sm:$0xff]
      %v653 = vld [vmem:[%s2 + $0x780] sm:$0xff]
      %v654 = vld [vmem:[%s2 + $0x788] sm:$0xff]
      %v655 = vld [vmem:[%s2 + $0x790] sm:$0xff]
      %v656 = vld [vmem:[%s2 + $0x798] sm:$0xff]
      %v657 = vld [vmem:[%s2 + $0x7a0] sm:$0xff]
      %v658 = vld [vmem:[%s2 + $0x7a8] sm:$0xff]
      %v659 = vld [vmem:[%s2 + $0x7b0] sm:$0xff]
      %v660 = vld [vmem:[%s2 + $0x7b8] sm:$0xff]
      %v661 = vld [vmem:[%s2 + $0x7c0] sm:$0xff]
      %v662 = vld [vmem:[%s2 + $0x7c8] sm:$0xff]
      %v663 = vld [vmem:[%s2 + $0x7d0] sm:$0xff]
      %v664 = vld [vmem:[%s2 + $0x7d8] sm:$0xff]
      %v665 = vld [vmem:[%s2 + $0x7e0] sm:$0xff]
      %v666 = vld [vmem:[%s2 + $0x7e8] sm:$0xff]
      %v667 = vld [vmem:[%s2 + $0x7f0] sm:$0xff]
      %v668 = vld [vmem:[%s2 + $0x7f8] sm:$0xff]
      %669 = vmatprep.subr.mxu0 %v414
      %670 = vmatpush1.msra.mxu0 %v413
      %671 = vmatprep.subr.mxu0 %v418
      %672 = vmatpush1.msra.mxu0 %v417
      %673 = vmatprep.subr.mxu0 %v422
      %674 = vmatpush1.msra.mxu0 %v421
      %675 = vmatprep.subr.mxu0 %v426
      %676 = vmatpush1.msra.mxu0 %v425
      %677 = vmatprep.subr.mxu0 %v430
      %678 = vmatpush1.msra.mxu0 %v429
      %679 = vmatprep.subr.mxu0 %v434
      %680 = vmatpush1.msra.mxu0 %v433
      %681 = vmatprep.subr.mxu0 %v438
      %682 = vmatpush1.msra.mxu0 %v437
      %683 = vmatprep.subr.mxu0 %v442
      %684 = vmatpush1.msra.mxu0 %v441
      %685 = vmatprep.subr.mxu0 %v446
      %686 = vmatpush1.msra.mxu0 %v445
      %687 = vmatprep.subr.mxu0 %v450
      %688 = vmatpush1.msra.mxu0 %v449
      %689 = vmatprep.subr.mxu0 %v454
      %690 = vmatpush1.msra.mxu0 %v453
      %691 = vmatprep.subr.mxu0 %v458
      %692 = vmatpush1.msra.mxu0 %v457
      %693 = vmatprep.subr.mxu0 %v462
      %694 = vmatpush1.msra.mxu0 %v461
      %695 = vmatprep.subr.mxu0 %v466
      %696 = vmatpush1.msra.mxu0 %v465
      %697 = vmatprep.subr.mxu0 %v470
      %698 = vmatpush1.msra.mxu0 %v469
      %699 = vmatprep.subr.mxu0 %v474
      %700 = vmatpush1.msra.mxu0 %v473
      %701 = vmatprep.subr.mxu0 %v478
      %702 = vmatpush1.msra.mxu0 %v477
      %703 = vmatprep.subr.mxu0 %v482
      %704 = vmatpush1.msra.mxu0 %v481
      %705 = vmatprep.subr.mxu0 %v486
      %706 = vmatpush1.msra.mxu0 %v485
      %707 = vmatprep.subr.mxu0 %v490
      %708 = vmatpush1.msra.mxu0 %v489
      %709 = vmatprep.subr.mxu0 %v494
      %710 = vmatpush1.msra.mxu0 %v493
      %711 = vmatprep.subr.mxu0 %v498
      %712 = vmatpush1.msra.mxu0 %v497
      %713 = vmatprep.subr.mxu0 %v502
      %714 = vmatpush1.msra.mxu0 %v501
      %715 = vmatprep.subr.mxu0 %v506
      %716 = vmatpush1.msra.mxu0 %v505
      %717 = vmatprep.subr.mxu0 %v510
      %718 = vmatpush1.msra.mxu0 %v509
      %719 = vmatprep.subr.mxu0 %v514
      %720 = vmatpush1.msra.mxu0 %v513
      %721 = vmatprep.subr.mxu0 %v518
      %722 = vmatpush1.msra.mxu0 %v517
      %723 = vmatprep.subr.mxu0 %v522
      %724 = vmatpush1.msra.mxu0 %v521
      %725 = vmatprep.subr.mxu0 %v526
      %726 = vmatpush1.msra.mxu0 %v525
      %727 = vmatprep.subr.mxu0 %v530
      %728 = vmatpush1.msra.mxu0 %v529
      %729 = vmatprep.subr.mxu0 %v534
      %730 = vmatpush1.msra.mxu0 %v533
      %731 = vmatprep.subr.mxu0 %v538
      %732 = vmatpush1.msra.mxu0 %v537
      %733 = vmatprep.mubr.f32.mxu0 %v328
      %734 = vmatmul.mubr.f32.gmra.mrb[0].mxu0 %v326
      %v735 = vpop.f32.mrb[0].mxu0
      %v736 = vadd.f32 0.0, %v735
      %v737 = vpop.f32.mrb[0].mxu0
      %v738 = vadd.f32 0.0, %v737
      %739 = vmatprep.mubr.f32.mxu0 %v334
      %740 = vmatmul.mubr.f32.gmra.mrb[0].mxu0 %v332
      %v741 = vpop.f32.mrb[0].mxu0
      %v742 = vadd.f32 0.0, %v741
      %v743 = vpop.f32.mrb[0].mxu0
      %v744 = vadd.f32 0.0, %v743
      %745 = vdwg.mxu0
      %746 = vmatprep.subr.mxu0 %v542
      %747 = vmatpush1.msra.mxu0 %v541
      %748 = vmatprep.subr.mxu0 %v546
      %749 = vmatpush1.msra.mxu0 %v545
      %750 = vmatprep.subr.mxu0 %v550
      %751 = vmatpush1.msra.mxu0 %v549
      %752 = vmatprep.subr.mxu0 %v554
      %753 = vmatpush1.msra.mxu0 %v553
      %754 = vmatprep.subr.mxu0 %v558
      %755 = vmatpush1.msra.mxu0 %v557
      %756 = vmatprep.subr.mxu0 %v562
      %757 = vmatpush1.msra.mxu0 %v561
      %758 = vmatprep.subr.mxu0 %v566
      %759 = vmatpush1.msra.mxu0 %v565
      %760 = vmatprep.subr.mxu0 %v570
      %761 = vmatpush1.msra.mxu0 %v569
      %762 = vmatprep.subr.mxu0 %v574
      %763 = vmatpush1.msra.mxu0 %v573
      %764 = vmatprep.subr.mxu0 %v578
      %765 = vmatpush1.msra.mxu0 %v577
      %766 = vmatprep.subr.mxu0 %v582
      %767 = vmatpush1.msra.mxu0 %v581
      %768 = vmatprep.subr.mxu0 %v586
      %769 = vmatpush1.msra.mxu0 %v585
      %770 = vmatprep.subr.mxu0 %v590
      %771 = vmatpush1.msra.mxu0 %v589
      %772 = vmatprep.subr.mxu0 %v594
      %773 = vmatpush1.msra.mxu0 %v593
      %774 = vmatprep.subr.mxu0 %v598
      %775 = vmatpush1.msra.mxu0 %v597
      %776 = vmatprep.subr.mxu0 %v602
      %777 = vmatpush1.msra.mxu0 %v601
      %778 = vmatprep.subr.mxu0 %v606
      %779 = vmatpush1.msra.mxu0 %v605
      %780 = vmatprep.subr.mxu0 %v610
      %781 = vmatpush1.msra.mxu0 %v609
      %782 = vmatprep.subr.mxu0 %v614
      %783 = vmatpush1.msra.mxu0 %v613
      %784 = vmatprep.subr.mxu0 %v618
      %785 = vmatpush1.msra.mxu0 %v617
      %786 = vmatprep.subr.mxu0 %v622
      %787 = vmatpush1.msra.mxu0 %v621
      %788 = vmatprep.subr.mxu0 %v626
      %789 = vmatpush1.msra.mxu0 %v625
      %790 = vmatprep.subr.mxu0 %v630
      %791 = vmatpush1.msra.mxu0 %v629
      %792 = vmatprep.subr.mxu0 %v634
      %793 = vmatpush1.msra.mxu0 %v633
      %794 = vmatprep.subr.mxu0 %v638
      %795 = vmatpush1.msra.mxu0 %v637
      %796 = vmatprep.subr.mxu0 %v642
      %797 = vmatpush1.msra.mxu0 %v641
      %798 = vmatprep.subr.mxu0 %v646
      %799 = vmatpush1.msra.mxu0 %v645
      %800 = vmatprep.subr.mxu0 %v650
      %801 = vmatpush1.msra.mxu0 %v649
      %802 = vmatprep.subr.mxu0 %v654
      %803 = vmatpush1.msra.mxu0 %v653
      %804 = vmatprep.subr.mxu0 %v658
      %805 = vmatpush1.msra.mxu0 %v657
      %806 = vmatprep.subr.mxu0 %v662
      %807 = vmatpush1.msra.mxu0 %v661
      %808 = vmatprep.subr.mxu0 %v666
      %809 = vmatpush1.msra.mxu0 %v665
      %810 = vmatprep.mubr.f32.mxu0 %v405
      %811 = vmatmul.mubr.f32.gmra.mrb[0].mxu0 %v403
      %v812 = vpop.f32.mrb[0].mxu0
      %v813 = vadd.f32 %v736, %v812
      %v814 = vpop.f32.mrb[0].mxu0
      %v815 = vadd.f32 %v738, %v814
      %816 = vmatprep.mubr.f32.mxu0 %v411
      %817 = vmatmul.mubr.f32.gmra.mrb[0].mxu0 %v409
      %v818 = vpop.f32.mrb[0].mxu0
      %v819 = vadd.f32 %v742, %v818
      %v820 = vpop.f32.mrb[0].mxu0
      %v821 = vadd.f32 %v744, %v820
      %822 = vdwg.mxu0
      %823 = vmatprep.subr.mxu0 %v416
      %824 = vmatpush1.msra.mxu0 %v415
      %825 = vmatprep.subr.mxu0 %v420
      %826 = vmatpush1.msra.mxu0 %v419
      %827 = vmatprep.subr.mxu0 %v424
      %828 = vmatpush1.msra.mxu0 %v423
      %829 = vmatprep.subr.mxu0 %v428
      %830 = vmatpush1.msra.mxu0 %v427
      %831 = vmatprep.subr.mxu0 %v432
      %832 = vmatpush1.msra.mxu0 %v431
      %833 = vmatprep.subr.mxu0 %v436
      %834 = vmatpush1.msra.mxu0 %v435
      %835 = vmatprep.subr.mxu0 %v440
      %836 = vmatpush1.msra.mxu0 %v439
      %837 = vmatprep.subr.mxu0 %v444
      %838 = vmatpush1.msra.mxu0 %v443
      %839 = vmatprep.subr.mxu0 %v448
      %840 = vmatpush1.msra.mxu0 %v447
      %841 = vmatprep.subr.mxu0 %v452
      %842 = vmatpush1.msra.mxu0 %v451
      %843 = vmatprep.subr.mxu0 %v456
      %844 = vmatpush1.msra.mxu0 %v455
      %845 = vmatprep.subr.mxu0 %v460
      %846 = vmatpush1.msra.mxu0 %v459
      %847 = vmatprep.subr.mxu0 %v464
      %848 = vmatpush1.msra.mxu0 %v463
      %849 = vmatprep.subr.mxu0 %v468
      %850 = vmatpush1.msra.mxu0 %v467
      %851 = vmatprep.subr.mxu0 %v472
      %852 = vmatpush1.msra.mxu0 %v471
      %853 = vmatprep.subr.mxu0 %v476
      %854 = vmatpush1.msra.mxu0 %v475
      %855 = vmatprep.subr.mxu0 %v480
      %856 = vmatpush1.msra.mxu0 %v479
      %857 = vmatprep.subr.mxu0 %v484
      %858 = vmatpush1.msra.mxu0 %v483
      %859 = vmatprep.subr.mxu0 %v488
      %860 = vmatpush1.msra.mxu0 %v487
      %861 = vmatprep.subr.mxu0 %v492
      %862 = vmatpush1.msra.mxu0 %v491
      %863 = vmatprep.subr.mxu0 %v496
      %864 = vmatpush1.msra.mxu0 %v495
      %865 = vmatprep.subr.mxu0 %v500
      %866 = vmatpush1.msra.mxu0 %v499
      %867 = vmatprep.subr.mxu0 %v504
      %868 = vmatpush1.msra.mxu0 %v503
      %869 = vmatprep.subr.mxu0 %v508
      %870 = vmatpush1.msra.mxu0 %v507
      %871 = vmatprep.subr.mxu0 %v512
      %872 = vmatpush1.msra.mxu0 %v511
      %873 = vmatprep.subr.mxu0 %v516
      %874 = vmatpush1.msra.mxu0 %v515
      %875 = vmatprep.subr.mxu0 %v520
      %876 = vmatpush1.msra.mxu0 %v519
      %877 = vmatprep.subr.mxu0 %v524
      %878 = vmatpush1.msra.mxu0 %v523
      %879 = vmatprep.subr.mxu0 %v528
      %880 = vmatpush1.msra.mxu0 %v527
      %881 = vmatprep.subr.mxu0 %v532
      %882 = vmatpush1.msra.mxu0 %v531
      %883 = vmatprep.subr.mxu0 %v536
      %884 = vmatpush1.msra.mxu0 %v535
      %885 = vmatprep.subr.mxu0 %v540
      %886 = vmatpush1.msra.mxu0 %v539
      %887 = vmatprep.mubr.f32.mxu0 %v328
      %888 = vmatmul.mubr.f32.gmra.mrb[0].mxu0 %v326
      %v889 = vpop.f32.mrb[0].mxu0
      %v890 = vadd.f32 0.0, %v889
      %v891 = vpop.f32.mrb[0].mxu0
      %v892 = vadd.f32 0.0, %v891
      %893 = vmatprep.mubr.f32.mxu0 %v334
      %894 = vmatmul.mubr.f32.gmra.mrb[0].mxu0 %v332
      %v895 = vpop.f32.mrb[0].mxu0
      %v896 = vadd.f32 0.0, %v895
      %v897 = vpop.f32.mrb[0].mxu0
      %v898 = vadd.f32 0.0, %v897
      %899 = vdwg.mxu0
      %900 = vmatprep.subr.mxu0 %v544
      %901 = vmatpush1.msra.mxu0 %v543
      %902 = vmatprep.subr.mxu0 %v548
      %903 = vmatpush1.msra.mxu0 %v547
      %904 = vmatprep.subr.mxu0 %v552
      %905 = vmatpush1.msra.mxu0 %v551
      %906 = vmatprep.subr.mxu0 %v556
      %907 = vmatpush1.msra.mxu0 %v555
      %908 = vmatprep.subr.mxu0 %v560
      %909 = vmatpush1.msra.mxu0 %v559
      %910 = vmatprep.subr.mxu0 %v564
      %911 = vmatpush1.msra.mxu0 %v563
      %912 = vmatprep.subr.mxu0 %v568
      %913 = vmatpush1.msra.mxu0 %v567
      %914 = vmatprep.subr.mxu0 %v572
      %915 = vmatpush1.msra.mxu0 %v571
      %916 = vmatprep.subr.mxu0 %v576
      %917 = vmatpush1.msra.mxu0 %v575
      %918 = vmatprep.subr.mxu0 %v580
      %919 = vmatpush1.msra.mxu0 %v579
      %920 = vmatprep.subr.mxu0 %v584
      %921 = vmatpush1.msra.mxu0 %v583
      %922 = vmatprep.subr.mxu0 %v588
      %923 = vmatpush1.msra.mxu0 %v587
      %924 = vmatprep.subr.mxu0 %v592
      %925 = vmatpush1.msra.mxu0 %v591
      %926 = vmatprep.subr.mxu0 %v596
      %927 = vmatpush1.msra.mxu0 %v595
      %928 = vmatprep.subr.mxu0 %v600
      %929 = vmatpush1.msra.mxu0 %v599
      %930 = vmatprep.subr.mxu0 %v604
      %931 = vmatpush1.msra.mxu0 %v603
      %932 = vmatprep.subr.mxu0 %v608
      %933 = vmatpush1.msra.mxu0 %v607
      %934 = vmatprep.subr.mxu0 %v612
      %935 = vmatpush1.msra.mxu0 %v611
      %936 = vmatprep.subr.mxu0 %v616
      %937 = vmatpush1.msra.mxu0 %v615
      %938 = vmatprep.subr.mxu0 %v620
      %939 = vmatpush1.msra.mxu0 %v619
      %940 = vmatprep.subr.mxu0 %v624
      %941 = vmatpush1.msra.mxu0 %v623
      %942 = vmatprep.subr.mxu0 %v628
      %943 = vmatpush1.msra.mxu0 %v627
      %944 = vmatprep.subr.mxu0 %v632
      %945 = vmatpush1.msra.mxu0 %v631
      %946 = vmatprep.subr.mxu0 %v636
      %947 = vmatpush1.msra.mxu0 %v635
      %948 = vmatprep.subr.mxu0 %v640
      %949 = vmatpush1.msra.mxu0 %v639
      %950 = vmatprep.subr.mxu0 %v644
      %951 = vmatpush1.msra.mxu0 %v643
      %952 = vmatprep.subr.mxu0 %v648
      %953 = vmatpush1.msra.mxu0 %v647
      %954 = vmatprep.subr.mxu0 %v652
      %955 = vmatpush1.msra.mxu0 %v651
      %956 = vmatprep.subr.mxu0 %v656
      %957 = vmatpush1.msra.mxu0 %v655
      %958 = vmatprep.subr.mxu0 %v660
      %959 = vmatpush1.msra.mxu0 %v659
      %960 = vmatprep.subr.mxu0 %v664
      %961 = vmatpush1.msra.mxu0 %v663
      %962 = vmatprep.subr.mxu0 %v668
      %963 = vmatpush1.msra.mxu0 %v667
      %964 = vmatprep.mubr.f32.mxu0 %v405
      %965 = vmatmul.mubr.f32.gmra.mrb[0].mxu0 %v403
      %v966 = vpop.f32.mrb[0].mxu0
      %v967 = vadd.f32 %v890, %v966
      %v968 = vpop.f32.mrb[0].mxu0
      %v969 = vadd.f32 %v892, %v968
      %970 = vmatprep.mubr.f32.mxu0 %v411
      %971 = vmatmul.mubr.f32.gmra.mrb[0].mxu0 %v409
      %v972 = vpop.f32.mrb[0].mxu0
      %v973 = vadd.f32 %v896, %v972
      %v974 = vpop.f32.mrb[0].mxu0
      %v975 = vadd.f32 %v898, %v974
      %976 = vdwg.mxu0
      %v977 = vmul.f32 %v242, 10.0
      %v978 = vmul.f32 %v243, 10.0
      %v979 = vmul.f32 %v244, 10.0
      %v980 = vmul.f32 %v245, 10.0
      %v981 = vmul.f32 %v246, 10.0
      %v982 = vmul.f32 %v247, 10.0
      %v983 = vmul.f32 %v248, 10.0
      %v984 = vmul.f32 %v249, 10.0
      %v985 = vsub.f32 %v977, %v813
      %v986 = vsub.f32 %v978, %v815
      %v987 = vsub.f32 %v979, %v967
      %v988 = vsub.f32 %v980, %v969
      %v989 = vsub.f32 %v981, %v819
      %v990 = vsub.f32 %v982, %v821
      %v991 = vsub.f32 %v983, %v973
      %v992 = vsub.f32 %v984, %v975
      %v993 = vmax.f32 %v985, 0.0
      %v994 = vmax.f32 %v986, 0.0
      %v995 = vmax.f32 %v987, 0.0
      %v996 = vmax.f32 %v988, 0.0
      %v997 = vmax.f32 %v989, 0.0
      %v998 = vmax.f32 %v990, 0.0
      %v999 = vmax.f32 %v991, 0.0
      %v1000 = vmax.f32 %v992, 0.0
      %v1001 = vld [vmem:[%s3] sm:$0xff]
      %v1002 = vld [vmem:[%s3 + $0x8] sm:$0xff]
      %v1003 = vld [vmem:[%s3 + $0x10] sm:$0xff]
      %v1004 = vld [vmem:[%s3 + $0x18] sm:$0xff]
      %v1005 = vld [vmem:[%s3 + $0x20] sm:$0xff]
      %v1006 = vld [vmem:[%s3 + $0x28] sm:$0xff]
      %v1007 = vld [vmem:[%s3 + $0x30] sm:$0xff]
      %v1008 = vld [vmem:[%s3 + $0x38] sm:$0xff]
      %v1009 = vld [vmem:[%s3 + $0x40] sm:$0xff]
      %v1010 = vld [vmem:[%s3 + $0x48] sm:$0xff]
      %v1011 = vld [vmem:[%s3 + $0x50] sm:$0xff]
      %v1012 = vld [vmem:[%s3 + $0x58] sm:$0xff]
      %v1013 = vld [vmem:[%s3 + $0x60] sm:$0xff]
      %v1014 = vld [vmem:[%s3 + $0x68] sm:$0xff]
      %v1015 = vld [vmem:[%s3 + $0x70] sm:$0xff]
      %v1016 = vld [vmem:[%s3 + $0x78] sm:$0xff]
      %v1017 = vld [vmem:[%s3 + $0x80] sm:$0xff]
      %v1018 = vld [vmem:[%s3 + $0x88] sm:$0xff]
      %v1019 = vld [vmem:[%s3 + $0x90] sm:$0xff]
      %v1020 = vld [vmem:[%s3 + $0x98] sm:$0xff]
      %v1021 = vld [vmem:[%s3 + $0xa0] sm:$0xff]
      %v1022 = vld [vmem:[%s3 + $0xa8] sm:$0xff]
      %v1023 = vld [vmem:[%s3 + $0xb0] sm:$0xff]
      %v1024 = vld [vmem:[%s3 + $0xb8] sm:$0xff]
      %v1025 = vld [vmem:[%s3 + $0xc0] sm:$0xff]
      %v1026 = vld [vmem:[%s3 + $0xc8] sm:$0xff]
      %v1027 = vld [vmem:[%s3 + $0xd0] sm:$0xff]
      %v1028 = vld [vmem:[%s3 + $0xd8] sm:$0xff]
      %v1029 = vld [vmem:[%s3 + $0xe0] sm:$0xff]
      %v1030 = vld [vmem:[%s3 + $0xe8] sm:$0xff]
      %v1031 = vld [vmem:[%s3 + $0xf0] sm:$0xff]
      %v1032 = vld [vmem:[%s3 + $0xf8] sm:$0xff]
      %v1033 = vld [vmem:[%s3 + $0x100] sm:$0xff]
      %v1034 = vld [vmem:[%s3 + $0x108] sm:$0xff]
      %v1035 = vld [vmem:[%s3 + $0x110] sm:$0xff]
      %v1036 = vld [vmem:[%s3 + $0x118] sm:$0xff]
      %v1037 = vld [vmem:[%s3 + $0x120] sm:$0xff]
      %v1038 = vld [vmem:[%s3 + $0x128] sm:$0xff]
      %v1039 = vld [vmem:[%s3 + $0x130] sm:$0xff]
      %v1040 = vld [vmem:[%s3 + $0x138] sm:$0xff]
      %v1041 = vld [vmem:[%s3 + $0x140] sm:$0xff]
      %v1042 = vld [vmem:[%s3 + $0x148] sm:$0xff]
      %v1043 = vld [vmem:[%s3 + $0x150] sm:$0xff]
      %v1044 = vld [vmem:[%s3 + $0x158] sm:$0xff]
      %v1045 = vld [vmem:[%s3 + $0x160] sm:$0xff]
      %v1046 = vld [vmem:[%s3 + $0x168] sm:$0xff]
      %v1047 = vld [vmem:[%s3 + $0x170] sm:$0xff]
      %v1048 = vld [vmem:[%s3 + $0x178] sm:$0xff]
      %v1049 = vld [vmem:[%s3 + $0x180] sm:$0xff]
      %v1050 = vld [vmem:[%s3 + $0x188] sm:$0xff]
      %v1051 = vld [vmem:[%s3 + $0x190] sm:$0xff]
      %v1052 = vld [vmem:[%s3 + $0x198] sm:$0xff]
      %v1053 = vld [vmem:[%s3 + $0x1a0] sm:$0xff]
      %v1054 = vld [vmem:[%s3 + $0x1a8] sm:$0xff]
      %v1055 = vld [vmem:[%s3 + $0x1b0] sm:$0xff]
      %v1056 = vld [vmem:[%s3 + $0x1b8] sm:$0xff]
      %v1057 = vld [vmem:[%s3 + $0x1c0] sm:$0xff]
      %v1058 = vld [vmem:[%s3 + $0x1c8] sm:$0xff]
      %v1059 = vld [vmem:[%s3 + $0x1d0] sm:$0xff]
      %v1060 = vld [vmem:[%s3 + $0x1d8] sm:$0xff]
      %v1061 = vld [vmem:[%s3 + $0x1e0] sm:$0xff]
      %v1062 = vld [vmem:[%s3 + $0x1e8] sm:$0xff]
      %v1063 = vld [vmem:[%s3 + $0x1f0] sm:$0xff]
      %v1064 = vld [vmem:[%s3 + $0x1f8] sm:$0xff]
      %v1065 = vld [vmem:[%s3 + $0x200] sm:$0xff]
      %v1066 = vld [vmem:[%s3 + $0x208] sm:$0xff]
      %v1067 = vld [vmem:[%s3 + $0x210] sm:$0xff]
      %v1068 = vld [vmem:[%s3 + $0x218] sm:$0xff]
      %v1069 = vld [vmem:[%s3 + $0x220] sm:$0xff]
      %v1070 = vld [vmem:[%s3 + $0x228] sm:$0xff]
      %v1071 = vld [vmem:[%s3 + $0x230] sm:$0xff]
      %v1072 = vld [vmem:[%s3 + $0x238] sm:$0xff]
      %v1073 = vld [vmem:[%s3 + $0x240] sm:$0xff]
      %v1074 = vld [vmem:[%s3 + $0x248] sm:$0xff]
      %v1075 = vld [vmem:[%s3 + $0x250] sm:$0xff]
      %v1076 = vld [vmem:[%s3 + $0x258] sm:$0xff]
      %v1077 = vld [vmem:[%s3 + $0x260] sm:$0xff]
      %v1078 = vld [vmem:[%s3 + $0x268] sm:$0xff]
      %v1079 = vld [vmem:[%s3 + $0x270] sm:$0xff]
      %v1080 = vld [vmem:[%s3 + $0x278] sm:$0xff]
      %v1081 = vld [vmem:[%s3 + $0x280] sm:$0xff]
      %v1082 = vld [vmem:[%s3 + $0x288] sm:$0xff]
      %v1083 = vld [vmem:[%s3 + $0x290] sm:$0xff]
      %v1084 = vld [vmem:[%s3 + $0x298] sm:$0xff]
      %v1085 = vld [vmem:[%s3 + $0x2a0] sm:$0xff]
      %v1086 = vld [vmem:[%s3 + $0x2a8] sm:$0xff]
      %v1087 = vld [vmem:[%s3 + $0x2b0] sm:$0xff]
      %v1088 = vld [vmem:[%s3 + $0x2b8] sm:$0xff]
      %v1089 = vld [vmem:[%s3 + $0x2c0] sm:$0xff]
      %v1090 = vld [vmem:[%s3 + $0x2c8] sm:$0xff]
      %v1091 = vld [vmem:[%s3 + $0x2d0] sm:$0xff]
      %v1092 = vld [vmem:[%s3 + $0x2d8] sm:$0xff]
      %v1093 = vld [vmem:[%s3 + $0x2e0] sm:$0xff]
      %v1094 = vld [vmem:[%s3 + $0x2e8] sm:$0xff]
      %v1095 = vld [vmem:[%s3 + $0x2f0] sm:$0xff]
      %v1096 = vld [vmem:[%s3 + $0x2f8] sm:$0xff]
      %v1097 = vld [vmem:[%s3 + $0x300] sm:$0xff]
      %v1098 = vld [vmem:[%s3 + $0x308] sm:$0xff]
      %v1099 = vld [vmem:[%s3 + $0x310] sm:$0xff]
      %v1100 = vld [vmem:[%s3 + $0x318] sm:$0xff]
      %v1101 = vld [vmem:[%s3 + $0x320] sm:$0xff]
      %v1102 = vld [vmem:[%s3 + $0x328] sm:$0xff]
      %v1103 = vld [vmem:[%s3 + $0x330] sm:$0xff]
      %v1104 = vld [vmem:[%s3 + $0x338] sm:$0xff]
      %v1105 = vld [vmem:[%s3 + $0x340] sm:$0xff]
      %v1106 = vld [vmem:[%s3 + $0x348] sm:$0xff]
      %v1107 = vld [vmem:[%s3 + $0x350] sm:$0xff]
      %v1108 = vld [vmem:[%s3 + $0x358] sm:$0xff]
      %v1109 = vld [vmem:[%s3 + $0x360] sm:$0xff]
      %v1110 = vld [vmem:[%s3 + $0x368] sm:$0xff]
      %v1111 = vld [vmem:[%s3 + $0x370] sm:$0xff]
      %v1112 = vld [vmem:[%s3 + $0x378] sm:$0xff]
      %v1113 = vld [vmem:[%s3 + $0x380] sm:$0xff]
      %v1114 = vld [vmem:[%s3 + $0x388] sm:$0xff]
      %v1115 = vld [vmem:[%s3 + $0x390] sm:$0xff]
      %v1116 = vld [vmem:[%s3 + $0x398] sm:$0xff]
      %v1117 = vld [vmem:[%s3 + $0x3a0] sm:$0xff]
      %v1118 = vld [vmem:[%s3 + $0x3a8] sm:$0xff]
      %v1119 = vld [vmem:[%s3 + $0x3b0] sm:$0xff]
      %v1120 = vld [vmem:[%s3 + $0x3b8] sm:$0xff]
      %v1121 = vld [vmem:[%s3 + $0x3c0] sm:$0xff]
      %v1122 = vld [vmem:[%s3 + $0x3c8] sm:$0xff]
      %v1123 = vld [vmem:[%s3 + $0x3d0] sm:$0xff]
      %v1124 = vld [vmem:[%s3 + $0x3d8] sm:$0xff]
      %v1125 = vld [vmem:[%s3 + $0x3e0] sm:$0xff]
      %v1126 = vld [vmem:[%s3 + $0x3e8] sm:$0xff]
      %v1127 = vld [vmem:[%s3 + $0x3f0] sm:$0xff]
      %v1128 = vld [vmem:[%s3 + $0x3f8] sm:$0xff]
      %v1129 = vld [vmem:[%s3 + $0x400] sm:$0xff]
      %v1130 = vld [vmem:[%s3 + $0x408] sm:$0xff]
      %v1131 = vld [vmem:[%s3 + $0x410] sm:$0xff]
      %v1132 = vld [vmem:[%s3 + $0x418] sm:$0xff]
      %v1133 = vld [vmem:[%s3 + $0x420] sm:$0xff]
      %v1134 = vld [vmem:[%s3 + $0x428] sm:$0xff]
      %v1135 = vld [vmem:[%s3 + $0x430] sm:$0xff]
      %v1136 = vld [vmem:[%s3 + $0x438] sm:$0xff]
      %v1137 = vld [vmem:[%s3 + $0x440] sm:$0xff]
      %v1138 = vld [vmem:[%s3 + $0x448] sm:$0xff]
      %v1139 = vld [vmem:[%s3 + $0x450] sm:$0xff]
      %v1140 = vld [vmem:[%s3 + $0x458] sm:$0xff]
      %v1141 = vld [vmem:[%s3 + $0x460] sm:$0xff]
      %v1142 = vld [vmem:[%s3 + $0x468] sm:$0xff]
      %v1143 = vld [vmem:[%s3 + $0x470] sm:$0xff]
      %v1144 = vld [vmem:[%s3 + $0x478] sm:$0xff]
      %v1145 = vld [vmem:[%s3 + $0x480] sm:$0xff]
      %v1146 = vld [vmem:[%s3 + $0x488] sm:$0xff]
      %v1147 = vld [vmem:[%s3 + $0x490] sm:$0xff]
      %v1148 = vld [vmem:[%s3 + $0x498] sm:$0xff]
      %v1149 = vld [vmem:[%s3 + $0x4a0] sm:$0xff]
      %v1150 = vld [vmem:[%s3 + $0x4a8] sm:$0xff]
      %v1151 = vld [vmem:[%s3 + $0x4b0] sm:$0xff]
      %v1152 = vld [vmem:[%s3 + $0x4b8] sm:$0xff]
      %v1153 = vld [vmem:[%s3 + $0x4c0] sm:$0xff]
      %v1154 = vld [vmem:[%s3 + $0x4c8] sm:$0xff]
      %v1155 = vld [vmem:[%s3 + $0x4d0] sm:$0xff]
      %v1156 = vld [vmem:[%s3 + $0x4d8] sm:$0xff]
      %v1157 = vld [vmem:[%s3 + $0x4e0] sm:$0xff]
      %v1158 = vld [vmem:[%s3 + $0x4e8] sm:$0xff]
      %v1159 = vld [vmem:[%s3 + $0x4f0] sm:$0xff]
      %v1160 = vld [vmem:[%s3 + $0x4f8] sm:$0xff]
      %v1161 = vld [vmem:[%s3 + $0x500] sm:$0xff]
      %v1162 = vld [vmem:[%s3 + $0x508] sm:$0xff]
      %v1163 = vld [vmem:[%s3 + $0x510] sm:$0xff]
      %v1164 = vld [vmem:[%s3 + $0x518] sm:$0xff]
      %v1165 = vld [vmem:[%s3 + $0x520] sm:$0xff]
      %v1166 = vld [vmem:[%s3 + $0x528] sm:$0xff]
      %v1167 = vld [vmem:[%s3 + $0x530] sm:$0xff]
      %v1168 = vld [vmem:[%s3 + $0x538] sm:$0xff]
      %v1169 = vld [vmem:[%s3 + $0x540] sm:$0xff]
      %v1170 = vld [vmem:[%s3 + $0x548] sm:$0xff]
      %v1171 = vld [vmem:[%s3 + $0x550] sm:$0xff]
      %v1172 = vld [vmem:[%s3 + $0x558] sm:$0xff]
      %v1173 = vld [vmem:[%s3 + $0x560] sm:$0xff]
      %v1174 = vld [vmem:[%s3 + $0x568] sm:$0xff]
      %v1175 = vld [vmem:[%s3 + $0x570] sm:$0xff]
      %v1176 = vld [vmem:[%s3 + $0x578] sm:$0xff]
      %v1177 = vld [vmem:[%s3 + $0x580] sm:$0xff]
      %v1178 = vld [vmem:[%s3 + $0x588] sm:$0xff]
      %v1179 = vld [vmem:[%s3 + $0x590] sm:$0xff]
      %v1180 = vld [vmem:[%s3 + $0x598] sm:$0xff]
      %v1181 = vld [vmem:[%s3 + $0x5a0] sm:$0xff]
      %v1182 = vld [vmem:[%s3 + $0x5a8] sm:$0xff]
      %v1183 = vld [vmem:[%s3 + $0x5b0] sm:$0xff]
      %v1184 = vld [vmem:[%s3 + $0x5b8] sm:$0xff]
      %v1185 = vld [vmem:[%s3 + $0x5c0] sm:$0xff]
      %v1186 = vld [vmem:[%s3 + $0x5c8] sm:$0xff]
      %v1187 = vld [vmem:[%s3 + $0x5d0] sm:$0xff]
      %v1188 = vld [vmem:[%s3 + $0x5d8] sm:$0xff]
      %v1189 = vld [vmem:[%s3 + $0x5e0] sm:$0xff]
      %v1190 = vld [vmem:[%s3 + $0x5e8] sm:$0xff]
      %v1191 = vld [vmem:[%s3 + $0x5f0] sm:$0xff]
      %v1192 = vld [vmem:[%s3 + $0x5f8] sm:$0xff]
      %v1193 = vld [vmem:[%s3 + $0x600] sm:$0xff]
      %v1194 = vld [vmem:[%s3 + $0x608] sm:$0xff]
      %v1195 = vld [vmem:[%s3 + $0x610] sm:$0xff]
      %v1196 = vld [vmem:[%s3 + $0x618] sm:$0xff]
      %v1197 = vld [vmem:[%s3 + $0x620] sm:$0xff]
      %v1198 = vld [vmem:[%s3 + $0x628] sm:$0xff]
      %v1199 = vld [vmem:[%s3 + $0x630] sm:$0xff]
      %v1200 = vld [vmem:[%s3 + $0x638] sm:$0xff]
      %v1201 = vld [vmem:[%s3 + $0x640] sm:$0xff]
      %v1202 = vld [vmem:[%s3 + $0x648] sm:$0xff]
      %v1203 = vld [vmem:[%s3 + $0x650] sm:$0xff]
      %v1204 = vld [vmem:[%s3 + $0x658] sm:$0xff]
      %v1205 = vld [vmem:[%s3 + $0x660] sm:$0xff]
      %v1206 = vld [vmem:[%s3 + $0x668] sm:$0xff]
      %v1207 = vld [vmem:[%s3 + $0x670] sm:$0xff]
      %v1208 = vld [vmem:[%s3 + $0x678] sm:$0xff]
      %v1209 = vld [vmem:[%s3 + $0x680] sm:$0xff]
      %v1210 = vld [vmem:[%s3 + $0x688] sm:$0xff]
      %v1211 = vld [vmem:[%s3 + $0x690] sm:$0xff]
      %v1212 = vld [vmem:[%s3 + $0x698] sm:$0xff]
      %v1213 = vld [vmem:[%s3 + $0x6a0] sm:$0xff]
      %v1214 = vld [vmem:[%s3 + $0x6a8] sm:$0xff]
      %v1215 = vld [vmem:[%s3 + $0x6b0] sm:$0xff]
      %v1216 = vld [vmem:[%s3 + $0x6b8] sm:$0xff]
      %v1217 = vld [vmem:[%s3 + $0x6c0] sm:$0xff]
      %v1218 = vld [vmem:[%s3 + $0x6c8] sm:$0xff]
      %v1219 = vld [vmem:[%s3 + $0x6d0] sm:$0xff]
      %v1220 = vld [vmem:[%s3 + $0x6d8] sm:$0xff]
      %v1221 = vld [vmem:[%s3 + $0x6e0] sm:$0xff]
      %v1222 = vld [vmem:[%s3 + $0x6e8] sm:$0xff]
      %v1223 = vld [vmem:[%s3 + $0x6f0] sm:$0xff]
      %v1224 = vld [vmem:[%s3 + $0x6f8] sm:$0xff]
      %v1225 = vld [vmem:[%s3 + $0x700] sm:$0xff]
      %v1226 = vld [vmem:[%s3 + $0x708] sm:$0xff]
      %v1227 = vld [vmem:[%s3 + $0x710] sm:$0xff]
      %v1228 = vld [vmem:[%s3 + $0x718] sm:$0xff]
      %v1229 = vld [vmem:[%s3 + $0x720] sm:$0xff]
      %v1230 = vld [vmem:[%s3 + $0x728] sm:$0xff]
      %v1231 = vld [vmem:[%s3 + $0x730] sm:$0xff]
      %v1232 = vld [vmem:[%s3 + $0x738] sm:$0xff]
      %v1233 = vld [vmem:[%s3 + $0x740] sm:$0xff]
      %v1234 = vld [vmem:[%s3 + $0x748] sm:$0xff]
      %v1235 = vld [vmem:[%s3 + $0x750] sm:$0xff]
      %v1236 = vld [vmem:[%s3 + $0x758] sm:$0xff]
      %v1237 = vld [vmem:[%s3 + $0x760] sm:$0xff]
      %v1238 = vld [vmem:[%s3 + $0x768] sm:$0xff]
      %v1239 = vld [vmem:[%s3 + $0x770] sm:$0xff]
      %v1240 = vld [vmem:[%s3 + $0x778] sm:$0xff]
      %v1241 = vld [vmem:[%s3 + $0x780] sm:$0xff]
      %v1242 = vld [vmem:[%s3 + $0x788] sm:$0xff]
      %v1243 = vld [vmem:[%s3 + $0x790] sm:$0xff]
      %v1244 = vld [vmem:[%s3 + $0x798] sm:$0xff]
      %v1245 = vld [vmem:[%s3 + $0x7a0] sm:$0xff]
      %v1246 = vld [vmem:[%s3 + $0x7a8] sm:$0xff]
      %v1247 = vld [vmem:[%s3 + $0x7b0] sm:$0xff]
      %v1248 = vld [vmem:[%s3 + $0x7b8] sm:$0xff]
      %v1249 = vld [vmem:[%s3 + $0x7c0] sm:$0xff]
      %v1250 = vld [vmem:[%s3 + $0x7c8] sm:$0xff]
      %v1251 = vld [vmem:[%s3 + $0x7d0] sm:$0xff]
      %v1252 = vld [vmem:[%s3 + $0x7d8] sm:$0xff]
      %v1253 = vld [vmem:[%s3 + $0x7e0] sm:$0xff]
      %v1254 = vld [vmem:[%s3 + $0x7e8] sm:$0xff]
      %v1255 = vld [vmem:[%s3 + $0x7f0] sm:$0xff]
      %v1256 = vld [vmem:[%s3 + $0x7f8] sm:$0xff]
      %1257 = vmatprep.subr.mxu0 %v1002
      %1258 = vmatpush1.msra.mxu0 %v1001
      %1259 = vmatprep.subr.mxu0 %v1006
      %1260 = vmatpush1.msra.mxu0 %v1005
      %1261 = vmatprep.subr.mxu0 %v1010
      %1262 = vmatpush1.msra.mxu0 %v1009
      %1263 = vmatprep.subr.mxu0 %v1014
      %1264 = vmatpush1.msra.mxu0 %v1013
      %1265 = vmatprep.subr.mxu0 %v1018
      %1266 = vmatpush1.msra.mxu0 %v1017
      %1267 = vmatprep.subr.mxu0 %v1022
      %1268 = vmatpush1.msra.mxu0 %v1021
      %1269 = vmatprep.subr.mxu0 %v1026
      %1270 = vmatpush1.msra.mxu0 %v1025
      %1271 = vmatprep.subr.mxu0 %v1030
      %1272 = vmatpush1.msra.mxu0 %v1029
      %1273 = vmatprep.subr.mxu0 %v1034
      %1274 = vmatpush1.msra.mxu0 %v1033
      %1275 = vmatprep.subr.mxu0 %v1038
      %1276 = vmatpush1.msra.mxu0 %v1037
      %1277 = vmatprep.subr.mxu0 %v1042
      %1278 = vmatpush1.msra.mxu0 %v1041
      %1279 = vmatprep.subr.mxu0 %v1046
      %1280 = vmatpush1.msra.mxu0 %v1045
      %1281 = vmatprep.subr.mxu0 %v1050
      %1282 = vmatpush1.msra.mxu0 %v1049
      %1283 = vmatprep.subr.mxu0 %v1054
      %1284 = vmatpush1.msra.mxu0 %v1053
      %1285 = vmatprep.subr.mxu0 %v1058
      %1286 = vmatpush1.msra.mxu0 %v1057
      %1287 = vmatprep.subr.mxu0 %v1062
      %1288 = vmatpush1.msra.mxu0 %v1061
      %1289 = vmatprep.subr.mxu0 %v1066
      %1290 = vmatpush1.msra.mxu0 %v1065
      %1291 = vmatprep.subr.mxu0 %v1070
      %1292 = vmatpush1.msra.mxu0 %v1069
      %1293 = vmatprep.subr.mxu0 %v1074
      %1294 = vmatpush1.msra.mxu0 %v1073
      %1295 = vmatprep.subr.mxu0 %v1078
      %1296 = vmatpush1.msra.mxu0 %v1077
      %1297 = vmatprep.subr.mxu0 %v1082
      %1298 = vmatpush1.msra.mxu0 %v1081
      %1299 = vmatprep.subr.mxu0 %v1086
      %1300 = vmatpush1.msra.mxu0 %v1085
      %1301 = vmatprep.subr.mxu0 %v1090
      %1302 = vmatpush1.msra.mxu0 %v1089
      %1303 = vmatprep.subr.mxu0 %v1094
      %1304 = vmatpush1.msra.mxu0 %v1093
      %1305 = vmatprep.subr.mxu0 %v1098
      %1306 = vmatpush1.msra.mxu0 %v1097
      %1307 = vmatprep.subr.mxu0 %v1102
      %1308 = vmatpush1.msra.mxu0 %v1101
      %1309 = vmatprep.subr.mxu0 %v1106
      %1310 = vmatpush1.msra.mxu0 %v1105
      %1311 = vmatprep.subr.mxu0 %v1110
      %1312 = vmatpush1.msra.mxu0 %v1109
      %1313 = vmatprep.subr.mxu0 %v1114
      %1314 = vmatpush1.msra.mxu0 %v1113
      %1315 = vmatprep.subr.mxu0 %v1118
      %1316 = vmatpush1.msra.mxu0 %v1117
      %1317 = vmatprep.subr.mxu0 %v1122
      %1318 = vmatpush1.msra.mxu0 %v1121
      %1319 = vmatprep.subr.mxu0 %v1126
      %1320 = vmatpush1.msra.mxu0 %v1125
      %1321 = vmatprep.mubr.f32.mxu0 %v994
      %1322 = vmatmul.mubr.f32.gmra.mrb[0].mxu0 %v993
      %v1323 = vpop.f32.mrb[0].mxu0
      %v1324 = vadd.f32 0.0, %v1323
      %v1325 = vpop.f32.mrb[0].mxu0
      %v1326 = vadd.f32 0.0, %v1325
      %1327 = vmatprep.mubr.f32.mxu0 %v998
      %1328 = vmatmul.mubr.f32.gmra.mrb[0].mxu0 %v997
      %v1329 = vpop.f32.mrb[0].mxu0
      %v1330 = vadd.f32 0.0, %v1329
      %v1331 = vpop.f32.mrb[0].mxu0
      %v1332 = vadd.f32 0.0, %v1331
      %1333 = vdwg.mxu0
      %1334 = vmatprep.subr.mxu0 %v1130
      %1335 = vmatpush1.msra.mxu0 %v1129
      %1336 = vmatprep.subr.mxu0 %v1134
      %1337 = vmatpush1.msra.mxu0 %v1133
      %1338 = vmatprep.subr.mxu0 %v1138
      %1339 = vmatpush1.msra.mxu0 %v1137
      %1340 = vmatprep.subr.mxu0 %v1142
      %1341 = vmatpush1.msra.mxu0 %v1141
      %1342 = vmatprep.subr.mxu0 %v1146
      %1343 = vmatpush1.msra.mxu0 %v1145
      %1344 = vmatprep.subr.mxu0 %v1150
      %1345 = vmatpush1.msra.mxu0 %v1149
      %1346 = vmatprep.subr.mxu0 %v1154
      %1347 = vmatpush1.msra.mxu0 %v1153
      %1348 = vmatprep.subr.mxu0 %v1158
      %1349 = vmatpush1.msra.mxu0 %v1157
      %1350 = vmatprep.subr.mxu0 %v1162
      %1351 = vmatpush1.msra.mxu0 %v1161
      %1352 = vmatprep.subr.mxu0 %v1166
      %1353 = vmatpush1.msra.mxu0 %v1165
      %1354 = vmatprep.subr.mxu0 %v1170
      %1355 = vmatpush1.msra.mxu0 %v1169
      %1356 = vmatprep.subr.mxu0 %v1174
      %1357 = vmatpush1.msra.mxu0 %v1173
      %1358 = vmatprep.subr.mxu0 %v1178
      %1359 = vmatpush1.msra.mxu0 %v1177
      %1360 = vmatprep.subr.mxu0 %v1182
      %1361 = vmatpush1.msra.mxu0 %v1181
      %1362 = vmatprep.subr.mxu0 %v1186
      %1363 = vmatpush1.msra.mxu0 %v1185
      %1364 = vmatprep.subr.mxu0 %v1190
      %1365 = vmatpush1.msra.mxu0 %v1189
      %1366 = vmatprep.subr.mxu0 %v1194
      %1367 = vmatpush1.msra.mxu0 %v1193
      %1368 = vmatprep.subr.mxu0 %v1198
      %1369 = vmatpush1.msra.mxu0 %v1197
      %1370 = vmatprep.subr.mxu0 %v1202
      %1371 = vmatpush1.msra.mxu0 %v1201
      %1372 = vmatprep.subr.mxu0 %v1206
      %1373 = vmatpush1.msra.mxu0 %v1205
      %1374 = vmatprep.subr.mxu0 %v1210
      %1375 = vmatpush1.msra.mxu0 %v1209
      %1376 = vmatprep.subr.mxu0 %v1214
      %1377 = vmatpush1.msra.mxu0 %v1213
      %1378 = vmatprep.subr.mxu0 %v1218
      %1379 = vmatpush1.msra.mxu0 %v1217
      %1380 = vmatprep.subr.mxu0 %v1222
      %1381 = vmatpush1.msra.mxu0 %v1221
      %1382 = vmatprep.subr.mxu0 %v1226
      %1383 = vmatpush1.msra.mxu0 %v1225
      %1384 = vmatprep.subr.mxu0 %v1230
      %1385 = vmatpush1.msra.mxu0 %v1229
      %1386 = vmatprep.subr.mxu0 %v1234
      %1387 = vmatpush1.msra.mxu0 %v1233
      %1388 = vmatprep.subr.mxu0 %v1238
      %1389 = vmatpush1.msra.mxu0 %v1237
      %1390 = vmatprep.subr.mxu0 %v1242
      %1391 = vmatpush1.msra.mxu0 %v1241
      %1392 = vmatprep.subr.mxu0 %v1246
      %1393 = vmatpush1.msra.mxu0 %v1245
      %1394 = vmatprep.subr.mxu0 %v1250
      %1395 = vmatpush1.msra.mxu0 %v1249
      %1396 = vmatprep.subr.mxu0 %v1254
      %1397 = vmatpush1.msra.mxu0 %v1253
      %1398 = vmatprep.mubr.f32.mxu0 %v996
      %1399 = vmatmul.mubr.f32.gmra.mrb[0].mxu0 %v995
      %v1400 = vpop.f32.mrb[0].mxu0
      %v1401 = vadd.f32 %v1324, %v1400
      %v1402 = vpop.f32.mrb[0].mxu0
      %v1403 = vadd.f32 %v1326, %v1402
      %1404 = vmatprep.mubr.f32.mxu0 %v1000
      %1405 = vmatmul.mubr.f32.gmra.mrb[0].mxu0 %v999
      %v1406 = vpop.f32.mrb[0].mxu0
      %v1407 = vadd.f32 %v1330, %v1406
      %v1408 = vpop.f32.mrb[0].mxu0
      %v1409 = vadd.f32 %v1332, %v1408
      %1410 = vdwg.mxu0
      %1411 = vmatprep.subr.mxu0 %v1004
      %1412 = vmatpush1.msra.mxu0 %v1003
      %1413 = vmatprep.subr.mxu0 %v1008
      %1414 = vmatpush1.msra.mxu0 %v1007
      %1415 = vmatprep.subr.mxu0 %v1012
      %1416 = vmatpush1.msra.mxu0 %v1011
      %1417 = vmatprep.subr.mxu0 %v1016
      %1418 = vmatpush1.msra.mxu0 %v1015
      %1419 = vmatprep.subr.mxu0 %v1020
      %1420 = vmatpush1.msra.mxu0 %v1019
      %1421 = vmatprep.subr.mxu0 %v1024
      %1422 = vmatpush1.msra.mxu0 %v1023
      %1423 = vmatprep.subr.mxu0 %v1028
      %1424 = vmatpush1.msra.mxu0 %v1027
      %1425 = vmatprep.subr.mxu0 %v1032
      %1426 = vmatpush1.msra.mxu0 %v1031
      %1427 = vmatprep.subr.mxu0 %v1036
      %1428 = vmatpush1.msra.mxu0 %v1035
      %1429 = vmatprep.subr.mxu0 %v1040
      %1430 = vmatpush1.msra.mxu0 %v1039
      %1431 = vmatprep.subr.mxu0 %v1044
      %1432 = vmatpush1.msra.mxu0 %v1043
      %1433 = vmatprep.subr.mxu0 %v1048
      %1434 = vmatpush1.msra.mxu0 %v1047
      %1435 = vmatprep.subr.mxu0 %v1052
      %1436 = vmatpush1.msra.mxu0 %v1051
      %1437 = vmatprep.subr.mxu0 %v1056
      %1438 = vmatpush1.msra.mxu0 %v1055
      %1439 = vmatprep.subr.mxu0 %v1060
      %1440 = vmatpush1.msra.mxu0 %v1059
      %1441 = vmatprep.subr.mxu0 %v1064
      %1442 = vmatpush1.msra.mxu0 %v1063
      %1443 = vmatprep.subr.mxu0 %v1068
      %1444 = vmatpush1.msra.mxu0 %v1067
      %1445 = vmatprep.subr.mxu0 %v1072
      %1446 = vmatpush1.msra.mxu0 %v1071
      %1447 = vmatprep.subr.mxu0 %v1076
      %1448 = vmatpush1.msra.mxu0 %v1075
      %1449 = vmatprep.subr.mxu0 %v1080
      %1450 = vmatpush1.msra.mxu0 %v1079
      %1451 = vmatprep.subr.mxu0 %v1084
      %1452 = vmatpush1.msra.mxu0 %v1083
      %1453 = vmatprep.subr.mxu0 %v1088
      %1454 = vmatpush1.msra.mxu0 %v1087
      %1455 = vmatprep.subr.mxu0 %v1092
      %1456 = vmatpush1.msra.mxu0 %v1091
      %1457 = vmatprep.subr.mxu0 %v1096
      %1458 = vmatpush1.msra.mxu0 %v1095
      %1459 = vmatprep.subr.mxu0 %v1100
      %1460 = vmatpush1.msra.mxu0 %v1099
      %1461 = vmatprep.subr.mxu0 %v1104
      %1462 = vmatpush1.msra.mxu0 %v1103
      %1463 = vmatprep.subr.mxu0 %v1108
      %1464 = vmatpush1.msra.mxu0 %v1107
      %1465 = vmatprep.subr.mxu0 %v1112
      %1466 = vmatpush1.msra.mxu0 %v1111
      %1467 = vmatprep.subr.mxu0 %v1116
      %1468 = vmatpush1.msra.mxu0 %v1115
      %1469 = vmatprep.subr.mxu0 %v1120
      %1470 = vmatpush1.msra.mxu0 %v1119
      %1471 = vmatprep.subr.mxu0 %v1124
      %1472 = vmatpush1.msra.mxu0 %v1123
      %1473 = vmatprep.subr.mxu0 %v1128
      %1474 = vmatpush1.msra.mxu0 %v1127
      %1475 = vmatprep.mubr.f32.mxu0 %v994
      %1476 = vmatmul.mubr.f32.gmra.mrb[0].mxu0 %v993
      %v1477 = vpop.f32.mrb[0].mxu0
      %v1478 = vadd.f32 0.0, %v1477
      %v1479 = vpop.f32.mrb[0].mxu0
      %v1480 = vadd.f32 0.0, %v1479
      %1481 = vmatprep.mubr.f32.mxu0 %v998
      %1482 = vmatmul.mubr.f32.gmra.mrb[0].mxu0 %v997
      %v1483 = vpop.f32.mrb[0].mxu0
      %v1484 = vadd.f32 0.0, %v1483
      %v1485 = vpop.f32.mrb[0].mxu0
      %v1486 = vadd.f32 0.0, %v1485
      %1487 = vdwg.mxu0
      %1488 = vmatprep.subr.mxu0 %v1132
      %1489 = vmatpush1.msra.mxu0 %v1131
      %1490 = vmatprep.subr.mxu0 %v1136
      %1491 = vmatpush1.msra.mxu0 %v1135
      %1492 = vmatprep.subr.mxu0 %v1140
      %1493 = vmatpush1.msra.mxu0 %v1139
      %1494 = vmatprep.subr.mxu0 %v1144
      %1495 = vmatpush1.msra.mxu0 %v1143
      %1496 = vmatprep.subr.mxu0 %v1148
      %1497 = vmatpush1.msra.mxu0 %v1147
      %1498 = vmatprep.subr.mxu0 %v1152
      %1499 = vmatpush1.msra.mxu0 %v1151
      %1500 = vmatprep.subr.mxu0 %v1156
      %1501 = vmatpush1.msra.mxu0 %v1155
      %1502 = vmatprep.subr.mxu0 %v1160
      %1503 = vmatpush1.msra.mxu0 %v1159
      %1504 = vmatprep.subr.mxu0 %v1164
      %1505 = vmatpush1.msra.mxu0 %v1163
      %1506 = vmatprep.subr.mxu0 %v1168
      %1507 = vmatpush1.msra.mxu0 %v1167
      %1508 = vmatprep.subr.mxu0 %v1172
      %1509 = vmatpush1.msra.mxu0 %v1171
      %1510 = vmatprep.subr.mxu0 %v1176
      %1511 = vmatpush1.msra.mxu0 %v1175
      %1512 = vmatprep.subr.mxu0 %v1180
      %1513 = vmatpush1.msra.mxu0 %v1179
      %1514 = vmatprep.subr.mxu0 %v1184
      %1515 = vmatpush1.msra.mxu0 %v1183
      %1516 = vmatprep.subr.mxu0 %v1188
      %1517 = vmatpush1.msra.mxu0 %v1187
      %1518 = vmatprep.subr.mxu0 %v1192
      %1519 = vmatpush1.msra.mxu0 %v1191
      %1520 = vmatprep.subr.mxu0 %v1196
      %1521 = vmatpush1.msra.mxu0 %v1195
      %1522 = vmatprep.subr.mxu0 %v1200
      %1523 = vmatpush1.msra.mxu0 %v1199
      %1524 = vmatprep.subr.mxu0 %v1204
      %1525 = vmatpush1.msra.mxu0 %v1203
      %1526 = vmatprep.subr.mxu0 %v1208
      %1527 = vmatpush1.msra.mxu0 %v1207
      %1528 = vmatprep.subr.mxu0 %v1212
      %1529 = vmatpush1.msra.mxu0 %v1211
      %1530 = vmatprep.subr.mxu0 %v1216
      %1531 = vmatpush1.msra.mxu0 %v1215
      %1532 = vmatprep.subr.mxu0 %v1220
      %1533 = vmatpush1.msra.mxu0 %v1219
      %1534 = vmatprep.subr.mxu0 %v1224
      %1535 = vmatpush1.msra.mxu0 %v1223
      %1536 = vmatprep.subr.mxu0 %v1228
      %1537 = vmatpush1.msra.mxu0 %v1227
      %1538 = vmatprep.subr.mxu0 %v1232
      %1539 = vmatpush1.msra.mxu0 %v1231
      %1540 = vmatprep.subr.mxu0 %v1236
      %1541 = vmatpush1.msra.mxu0 %v1235
      %1542 = vmatprep.subr.mxu0 %v1240
      %1543 = vmatpush1.msra.mxu0 %v1239
      %1544 = vmatprep.subr.mxu0 %v1244
      %1545 = vmatpush1.msra.mxu0 %v1243
      %1546 = vmatprep.subr.mxu0 %v1248
      %1547 = vmatpush1.msra.mxu0 %v1247
      %1548 = vmatprep.subr.mxu0 %v1252
      %1549 = vmatpush1.msra.mxu0 %v1251
      %1550 = vmatprep.subr.mxu0 %v1256
      %1551 = vmatpush1.msra.mxu0 %v1255
      %1552 = vmatprep.mubr.f32.mxu0 %v996
      %1553 = vmatmul.mubr.f32.gmra.mrb[0].mxu0 %v995
      %v1554 = vpop.f32.mrb[0].mxu0
      %v1555 = vadd.f32 %v1478, %v1554
      %v1556 = vpop.f32.mrb[0].mxu0
      %v1557 = vadd.f32 %v1480, %v1556
      %1558 = vmatprep.mubr.f32.mxu0 %v1000
      %1559 = vmatmul.mubr.f32.gmra.mrb[0].mxu0 %v999
      %v1560 = vpop.f32.mrb[0].mxu0
      %v1561 = vadd.f32 %v1484, %v1560
      %v1562 = vpop.f32.mrb[0].mxu0
      %v1563 = vadd.f32 %v1486, %v1562
      %1564 = vdwg.mxu0
      %s1565 = scalar_lea.vmem %s1, 16
      %v1566 = vld [vmem:[%s1565] sm:$0xff]
      %v1567 = vld [vmem:[%s1565 + $0x8] sm:$0xff]
      %s1568 = scalar_lea.vmem %s3, 2048
      %v1569 = vld [vmem:[%s1568] sm:$0xff]
      %v1570 = vld [vmem:[%s1568 + $0x8] sm:$0xff]
      %v1571 = vld [vmem:[%s1568 + $0x10] sm:$0xff]
      %v1572 = vld [vmem:[%s1568 + $0x18] sm:$0xff]
      %v1573 = vld [vmem:[%s1568 + $0x20] sm:$0xff]
      %v1574 = vld [vmem:[%s1568 + $0x28] sm:$0xff]
      %v1575 = vld [vmem:[%s1568 + $0x30] sm:$0xff]
      %v1576 = vld [vmem:[%s1568 + $0x38] sm:$0xff]
      %v1577 = vld [vmem:[%s1568 + $0x40] sm:$0xff]
      %v1578 = vld [vmem:[%s1568 + $0x48] sm:$0xff]
      %v1579 = vld [vmem:[%s1568 + $0x50] sm:$0xff]
      %v1580 = vld [vmem:[%s1568 + $0x58] sm:$0xff]
      %v1581 = vld [vmem:[%s1568 + $0x60] sm:$0xff]
      %v1582 = vld [vmem:[%s1568 + $0x68] sm:$0xff]
      %v1583 = vld [vmem:[%s1568 + $0x70] sm:$0xff]
      %v1584 = vld [vmem:[%s1568 + $0x78] sm:$0xff]
      %v1585 = vld [vmem:[%s1568 + $0x80] sm:$0xff]
      %v1586 = vld [vmem:[%s1568 + $0x88] sm:$0xff]
      %v1587 = vld [vmem:[%s1568 + $0x90] sm:$0xff]
      %v1588 = vld [vmem:[%s1568 + $0x98] sm:$0xff]
      %v1589 = vld [vmem:[%s1568 + $0xa0] sm:$0xff]
      %v1590 = vld [vmem:[%s1568 + $0xa8] sm:$0xff]
      %v1591 = vld [vmem:[%s1568 + $0xb0] sm:$0xff]
      %v1592 = vld [vmem:[%s1568 + $0xb8] sm:$0xff]
      %v1593 = vld [vmem:[%s1568 + $0xc0] sm:$0xff]
      %v1594 = vld [vmem:[%s1568 + $0xc8] sm:$0xff]
      %v1595 = vld [vmem:[%s1568 + $0xd0] sm:$0xff]
      %v1596 = vld [vmem:[%s1568 + $0xd8] sm:$0xff]
      %v1597 = vld [vmem:[%s1568 + $0xe0] sm:$0xff]
      %v1598 = vld [vmem:[%s1568 + $0xe8] sm:$0xff]
      %v1599 = vld [vmem:[%s1568 + $0xf0] sm:$0xff]
      %v1600 = vld [vmem:[%s1568 + $0xf8] sm:$0xff]
      %v1601 = vld [vmem:[%s1568 + $0x100] sm:$0xff]
      %v1602 = vld [vmem:[%s1568 + $0x108] sm:$0xff]
      %v1603 = vld [vmem:[%s1568 + $0x110] sm:$0xff]
      %v1604 = vld [vmem:[%s1568 + $0x118] sm:$0xff]
      %v1605 = vld [vmem:[%s1568 + $0x120] sm:$0xff]
      %v1606 = vld [vmem:[%s1568 + $0x128] sm:$0xff]
      %v1607 = vld [vmem:[%s1568 + $0x130] sm:$0xff]
      %v1608 = vld [vmem:[%s1568 + $0x138] sm:$0xff]
      %v1609 = vld [vmem:[%s1568 + $0x140] sm:$0xff]
      %v1610 = vld [vmem:[%s1568 + $0x148] sm:$0xff]
      %v1611 = vld [vmem:[%s1568 + $0x150] sm:$0xff]
      %v1612 = vld [vmem:[%s1568 + $0x158] sm:$0xff]
      %v1613 = vld [vmem:[%s1568 + $0x160] sm:$0xff]
      %v1614 = vld [vmem:[%s1568 + $0x168] sm:$0xff]
      %v1615 = vld [vmem:[%s1568 + $0x170] sm:$0xff]
      %v1616 = vld [vmem:[%s1568 + $0x178] sm:$0xff]
      %v1617 = vld [vmem:[%s1568 + $0x180] sm:$0xff]
      %v1618 = vld [vmem:[%s1568 + $0x188] sm:$0xff]
      %v1619 = vld [vmem:[%s1568 + $0x190] sm:$0xff]
      %v1620 = vld [vmem:[%s1568 + $0x198] sm:$0xff]
      %v1621 = vld [vmem:[%s1568 + $0x1a0] sm:$0xff]
      %v1622 = vld [vmem:[%s1568 + $0x1a8] sm:$0xff]
      %v1623 = vld [vmem:[%s1568 + $0x1b0] sm:$0xff]
      %v1624 = vld [vmem:[%s1568 + $0x1b8] sm:$0xff]
      %v1625 = vld [vmem:[%s1568 + $0x1c0] sm:$0xff]
      %v1626 = vld [vmem:[%s1568 + $0x1c8] sm:$0xff]
      %v1627 = vld [vmem:[%s1568 + $0x1d0] sm:$0xff]
      %v1628 = vld [vmem:[%s1568 + $0x1d8] sm:$0xff]
      %v1629 = vld [vmem:[%s1568 + $0x1e0] sm:$0xff]
      %v1630 = vld [vmem:[%s1568 + $0x1e8] sm:$0xff]
      %v1631 = vld [vmem:[%s1568 + $0x1f0] sm:$0xff]
      %v1632 = vld [vmem:[%s1568 + $0x1f8] sm:$0xff]
      %v1633 = vld [vmem:[%s1568 + $0x200] sm:$0xff]
      %v1634 = vld [vmem:[%s1568 + $0x208] sm:$0xff]
      %v1635 = vld [vmem:[%s1568 + $0x210] sm:$0xff]
      %v1636 = vld [vmem:[%s1568 + $0x218] sm:$0xff]
      %v1637 = vld [vmem:[%s1568 + $0x220] sm:$0xff]
      %v1638 = vld [vmem:[%s1568 + $0x228] sm:$0xff]
      %v1639 = vld [vmem:[%s1568 + $0x230] sm:$0xff]
      %v1640 = vld [vmem:[%s1568 + $0x238] sm:$0xff]
      %v1641 = vld [vmem:[%s1568 + $0x240] sm:$0xff]
      %v1642 = vld [vmem:[%s1568 + $0x248] sm:$0xff]
      %v1643 = vld [vmem:[%s1568 + $0x250] sm:$0xff]
      %v1644 = vld [vmem:[%s1568 + $0x258] sm:$0xff]
      %v1645 = vld [vmem:[%s1568 + $0x260] sm:$0xff]
      %v1646 = vld [vmem:[%s1568 + $0x268] sm:$0xff]
      %v1647 = vld [vmem:[%s1568 + $0x270] sm:$0xff]
      %v1648 = vld [vmem:[%s1568 + $0x278] sm:$0xff]
      %v1649 = vld [vmem:[%s1568 + $0x280] sm:$0xff]
      %v1650 = vld [vmem:[%s1568 + $0x288] sm:$0xff]
      %v1651 = vld [vmem:[%s1568 + $0x290] sm:$0xff]
      %v1652 = vld [vmem:[%s1568 + $0x298] sm:$0xff]
      %v1653 = vld [vmem:[%s1568 + $0x2a0] sm:$0xff]
      %v1654 = vld [vmem:[%s1568 + $0x2a8] sm:$0xff]
      %v1655 = vld [vmem:[%s1568 + $0x2b0] sm:$0xff]
      %v1656 = vld [vmem:[%s1568 + $0x2b8] sm:$0xff]
      %v1657 = vld [vmem:[%s1568 + $0x2c0] sm:$0xff]
      %v1658 = vld [vmem:[%s1568 + $0x2c8] sm:$0xff]
      %v1659 = vld [vmem:[%s1568 + $0x2d0] sm:$0xff]
      %v1660 = vld [vmem:[%s1568 + $0x2d8] sm:$0xff]
      %v1661 = vld [vmem:[%s1568 + $0x2e0] sm:$0xff]
      %v1662 = vld [vmem:[%s1568 + $0x2e8] sm:$0xff]
      %v1663 = vld [vmem:[%s1568 + $0x2f0] sm:$0xff]
      %v1664 = vld [vmem:[%s1568 + $0x2f8] sm:$0xff]
      %v1665 = vld [vmem:[%s1568 + $0x300] sm:$0xff]
      %v1666 = vld [vmem:[%s1568 + $0x308] sm:$0xff]
      %v1667 = vld [vmem:[%s1568 + $0x310] sm:$0xff]
      %v1668 = vld [vmem:[%s1568 + $0x318] sm:$0xff]
      %v1669 = vld [vmem:[%s1568 + $0x320] sm:$0xff]
      %v1670 = vld [vmem:[%s1568 + $0x328] sm:$0xff]
      %v1671 = vld [vmem:[%s1568 + $0x330] sm:$0xff]
      %v1672 = vld [vmem:[%s1568 + $0x338] sm:$0xff]
      %v1673 = vld [vmem:[%s1568 + $0x340] sm:$0xff]
      %v1674 = vld [vmem:[%s1568 + $0x348] sm:$0xff]
      %v1675 = vld [vmem:[%s1568 + $0x350] sm:$0xff]
      %v1676 = vld [vmem:[%s1568 + $0x358] sm:$0xff]
      %v1677 = vld [vmem:[%s1568 + $0x360] sm:$0xff]
      %v1678 = vld [vmem:[%s1568 + $0x368] sm:$0xff]
      %v1679 = vld [vmem:[%s1568 + $0x370] sm:$0xff]
      %v1680 = vld [vmem:[%s1568 + $0x378] sm:$0xff]
      %v1681 = vld [vmem:[%s1568 + $0x380] sm:$0xff]
      %v1682 = vld [vmem:[%s1568 + $0x388] sm:$0xff]
      %v1683 = vld [vmem:[%s1568 + $0x390] sm:$0xff]
      %v1684 = vld [vmem:[%s1568 + $0x398] sm:$0xff]
      %v1685 = vld [vmem:[%s1568 + $0x3a0] sm:$0xff]
      %v1686 = vld [vmem:[%s1568 + $0x3a8] sm:$0xff]
      %v1687 = vld [vmem:[%s1568 + $0x3b0] sm:$0xff]
      %v1688 = vld [vmem:[%s1568 + $0x3b8] sm:$0xff]
      %v1689 = vld [vmem:[%s1568 + $0x3c0] sm:$0xff]
      %v1690 = vld [vmem:[%s1568 + $0x3c8] sm:$0xff]
      %v1691 = vld [vmem:[%s1568 + $0x3d0] sm:$0xff]
      %v1692 = vld [vmem:[%s1568 + $0x3d8] sm:$0xff]
      %v1693 = vld [vmem:[%s1568 + $0x3e0] sm:$0xff]
      %v1694 = vld [vmem:[%s1568 + $0x3e8] sm:$0xff]
      %v1695 = vld [vmem:[%s1568 + $0x3f0] sm:$0xff]
      %v1696 = vld [vmem:[%s1568 + $0x3f8] sm:$0xff]
      %v1697 = vld [vmem:[%s1568 + $0x400] sm:$0xff]
      %v1698 = vld [vmem:[%s1568 + $0x408] sm:$0xff]
      %v1699 = vld [vmem:[%s1568 + $0x410] sm:$0xff]
      %v1700 = vld [vmem:[%s1568 + $0x418] sm:$0xff]
      %v1701 = vld [vmem:[%s1568 + $0x420] sm:$0xff]
      %v1702 = vld [vmem:[%s1568 + $0x428] sm:$0xff]
      %v1703 = vld [vmem:[%s1568 + $0x430] sm:$0xff]
      %v1704 = vld [vmem:[%s1568 + $0x438] sm:$0xff]
      %v1705 = vld [vmem:[%s1568 + $0x440] sm:$0xff]
      %v1706 = vld [vmem:[%s1568 + $0x448] sm:$0xff]
      %v1707 = vld [vmem:[%s1568 + $0x450] sm:$0xff]
      %v1708 = vld [vmem:[%s1568 + $0x458] sm:$0xff]
      %v1709 = vld [vmem:[%s1568 + $0x460] sm:$0xff]
      %v1710 = vld [vmem:[%s1568 + $0x468] sm:$0xff]
      %v1711 = vld [vmem:[%s1568 + $0x470] sm:$0xff]
      %v1712 = vld [vmem:[%s1568 + $0x478] sm:$0xff]
      %v1713 = vld [vmem:[%s1568 + $0x480] sm:$0xff]
      %v1714 = vld [vmem:[%s1568 + $0x488] sm:$0xff]
      %v1715 = vld [vmem:[%s1568 + $0x490] sm:$0xff]
      %v1716 = vld [vmem:[%s1568 + $0x498] sm:$0xff]
      %v1717 = vld [vmem:[%s1568 + $0x4a0] sm:$0xff]
      %v1718 = vld [vmem:[%s1568 + $0x4a8] sm:$0xff]
      %v1719 = vld [vmem:[%s1568 + $0x4b0] sm:$0xff]
      %v1720 = vld [vmem:[%s1568 + $0x4b8] sm:$0xff]
      %v1721 = vld [vmem:[%s1568 + $0x4c0] sm:$0xff]
      %v1722 = vld [vmem:[%s1568 + $0x4c8] sm:$0xff]
      %v1723 = vld [vmem:[%s1568 + $0x4d0] sm:$0xff]
      %v1724 = vld [vmem:[%s1568 + $0x4d8] sm:$0xff]
      %v1725 = vld [vmem:[%s1568 + $0x4e0] sm:$0xff]
      %v1726 = vld [vmem:[%s1568 + $0x4e8] sm:$0xff]
      %v1727 = vld [vmem:[%s1568 + $0x4f0] sm:$0xff]
      %v1728 = vld [vmem:[%s1568 + $0x4f8] sm:$0xff]
      %v1729 = vld [vmem:[%s1568 + $0x500] sm:$0xff]
      %v1730 = vld [vmem:[%s1568 + $0x508] sm:$0xff]
      %v1731 = vld [vmem:[%s1568 + $0x510] sm:$0xff]
      %v1732 = vld [vmem:[%s1568 + $0x518] sm:$0xff]
      %v1733 = vld [vmem:[%s1568 + $0x520] sm:$0xff]
      %v1734 = vld [vmem:[%s1568 + $0x528] sm:$0xff]
      %v1735 = vld [vmem:[%s1568 + $0x530] sm:$0xff]
      %v1736 = vld [vmem:[%s1568 + $0x538] sm:$0xff]
      %v1737 = vld [vmem:[%s1568 + $0x540] sm:$0xff]
      %v1738 = vld [vmem:[%s1568 + $0x548] sm:$0xff]
      %v1739 = vld [vmem:[%s1568 + $0x550] sm:$0xff]
      %v1740 = vld [vmem:[%s1568 + $0x558] sm:$0xff]
      %v1741 = vld [vmem:[%s1568 + $0x560] sm:$0xff]
      %v1742 = vld [vmem:[%s1568 + $0x568] sm:$0xff]
      %v1743 = vld [vmem:[%s1568 + $0x570] sm:$0xff]
      %v1744 = vld [vmem:[%s1568 + $0x578] sm:$0xff]
      %v1745 = vld [vmem:[%s1568 + $0x580] sm:$0xff]
      %v1746 = vld [vmem:[%s1568 + $0x588] sm:$0xff]
      %v1747 = vld [vmem:[%s1568 + $0x590] sm:$0xff]
      %v1748 = vld [vmem:[%s1568 + $0x598] sm:$0xff]
      %v1749 = vld [vmem:[%s1568 + $0x5a0] sm:$0xff]
      %v1750 = vld [vmem:[%s1568 + $0x5a8] sm:$0xff]
      %v1751 = vld [vmem:[%s1568 + $0x5b0] sm:$0xff]
      %v1752 = vld [vmem:[%s1568 + $0x5b8] sm:$0xff]
      %v1753 = vld [vmem:[%s1568 + $0x5c0] sm:$0xff]
      %v1754 = vld [vmem:[%s1568 + $0x5c8] sm:$0xff]
      %v1755 = vld [vmem:[%s1568 + $0x5d0] sm:$0xff]
      %v1756 = vld [vmem:[%s1568 + $0x5d8] sm:$0xff]
      %v1757 = vld [vmem:[%s1568 + $0x5e0] sm:$0xff]
      %v1758 = vld [vmem:[%s1568 + $0x5e8] sm:$0xff]
      %v1759 = vld [vmem:[%s1568 + $0x5f0] sm:$0xff]
      %v1760 = vld [vmem:[%s1568 + $0x5f8] sm:$0xff]
      %v1761 = vld [vmem:[%s1568 + $0x600] sm:$0xff]
      %v1762 = vld [vmem:[%s1568 + $0x608] sm:$0xff]
      %v1763 = vld [vmem:[%s1568 + $0x610] sm:$0xff]
      %v1764 = vld [vmem:[%s1568 + $0x618] sm:$0xff]
      %v1765 = vld [vmem:[%s1568 + $0x620] sm:$0xff]
      %v1766 = vld [vmem:[%s1568 + $0x628] sm:$0xff]
      %v1767 = vld [vmem:[%s1568 + $0x630] sm:$0xff]
      %v1768 = vld [vmem:[%s1568 + $0x638] sm:$0xff]
      %v1769 = vld [vmem:[%s1568 + $0x640] sm:$0xff]
      %v1770 = vld [vmem:[%s1568 + $0x648] sm:$0xff]
      %v1771 = vld [vmem:[%s1568 + $0x650] sm:$0xff]
      %v1772 = vld [vmem:[%s1568 + $0x658] sm:$0xff]
      %v1773 = vld [vmem:[%s1568 + $0x660] sm:$0xff]
      %v1774 = vld [vmem:[%s1568 + $0x668] sm:$0xff]
      %v1775 = vld [vmem:[%s1568 + $0x670] sm:$0xff]
      %v1776 = vld [vmem:[%s1568 + $0x678] sm:$0xff]
      %v1777 = vld [vmem:[%s1568 + $0x680] sm:$0xff]
      %v1778 = vld [vmem:[%s1568 + $0x688] sm:$0xff]
      %v1779 = vld [vmem:[%s1568 + $0x690] sm:$0xff]
      %v1780 = vld [vmem:[%s1568 + $0x698] sm:$0xff]
      %v1781 = vld [vmem:[%s1568 + $0x6a0] sm:$0xff]
      %v1782 = vld [vmem:[%s1568 + $0x6a8] sm:$0xff]
      %v1783 = vld [vmem:[%s1568 + $0x6b0] sm:$0xff]
      %v1784 = vld [vmem:[%s1568 + $0x6b8] sm:$0xff]
      %v1785 = vld [vmem:[%s1568 + $0x6c0] sm:$0xff]
      %v1786 = vld [vmem:[%s1568 + $0x6c8] sm:$0xff]
      %v1787 = vld [vmem:[%s1568 + $0x6d0] sm:$0xff]
      %v1788 = vld [vmem:[%s1568 + $0x6d8] sm:$0xff]
      %v1789 = vld [vmem:[%s1568 + $0x6e0] sm:$0xff]
      %v1790 = vld [vmem:[%s1568 + $0x6e8] sm:$0xff]
      %v1791 = vld [vmem:[%s1568 + $0x6f0] sm:$0xff]
      %v1792 = vld [vmem:[%s1568 + $0x6f8] sm:$0xff]
      %v1793 = vld [vmem:[%s1568 + $0x700] sm:$0xff]
      %v1794 = vld [vmem:[%s1568 + $0x708] sm:$0xff]
      %v1795 = vld [vmem:[%s1568 + $0x710] sm:$0xff]
      %v1796 = vld [vmem:[%s1568 + $0x718] sm:$0xff]
      %v1797 = vld [vmem:[%s1568 + $0x720] sm:$0xff]
      %v1798 = vld [vmem:[%s1568 + $0x728] sm:$0xff]
      %v1799 = vld [vmem:[%s1568 + $0x730] sm:$0xff]
      %v1800 = vld [vmem:[%s1568 + $0x738] sm:$0xff]
      %v1801 = vld [vmem:[%s1568 + $0x740] sm:$0xff]
      %v1802 = vld [vmem:[%s1568 + $0x748] sm:$0xff]
      %v1803 = vld [vmem:[%s1568 + $0x750] sm:$0xff]
      %v1804 = vld [vmem:[%s1568 + $0x758] sm:$0xff]
      %v1805 = vld [vmem:[%s1568 + $0x760] sm:$0xff]
      %v1806 = vld [vmem:[%s1568 + $0x768] sm:$0xff]
      %v1807 = vld [vmem:[%s1568 + $0x770] sm:$0xff]
      %v1808 = vld [vmem:[%s1568 + $0x778] sm:$0xff]
      %v1809 = vld [vmem:[%s1568 + $0x780] sm:$0xff]
      %v1810 = vld [vmem:[%s1568 + $0x788] sm:$0xff]
      %v1811 = vld [vmem:[%s1568 + $0x790] sm:$0xff]
      %v1812 = vld [vmem:[%s1568 + $0x798] sm:$0xff]
      %v1813 = vld [vmem:[%s1568 + $0x7a0] sm:$0xff]
      %v1814 = vld [vmem:[%s1568 + $0x7a8] sm:$0xff]
      %v1815 = vld [vmem:[%s1568 + $0x7b0] sm:$0xff]
      %v1816 = vld [vmem:[%s1568 + $0x7b8] sm:$0xff]
      %v1817 = vld [vmem:[%s1568 + $0x7c0] sm:$0xff]
      %v1818 = vld [vmem:[%s1568 + $0x7c8] sm:$0xff]
      %v1819 = vld [vmem:[%s1568 + $0x7d0] sm:$0xff]
      %v1820 = vld [vmem:[%s1568 + $0x7d8] sm:$0xff]
      %v1821 = vld [vmem:[%s1568 + $0x7e0] sm:$0xff]
      %v1822 = vld [vmem:[%s1568 + $0x7e8] sm:$0xff]
      %v1823 = vld [vmem:[%s1568 + $0x7f0] sm:$0xff]
      %v1824 = vld [vmem:[%s1568 + $0x7f8] sm:$0xff]
      %1825 = vmatprep.subr.mxu0 %v1570
      %1826 = vmatpush1.msra.mxu0 %v1569
      %1827 = vmatprep.subr.mxu0 %v1574
      %1828 = vmatpush1.msra.mxu0 %v1573
      %1829 = vmatprep.subr.mxu0 %v1578
      %1830 = vmatpush1.msra.mxu0 %v1577
      %1831 = vmatprep.subr.mxu0 %v1582
      %1832 = vmatpush1.msra.mxu0 %v1581
      %1833 = vmatprep.subr.mxu0 %v1586
      %1834 = vmatpush1.msra.mxu0 %v1585
      %1835 = vmatprep.subr.mxu0 %v1590
      %1836 = vmatpush1.msra.mxu0 %v1589
      %1837 = vmatprep.subr.mxu0 %v1594
      %1838 = vmatpush1.msra.mxu0 %v1593
      %1839 = vmatprep.subr.mxu0 %v1598
      %1840 = vmatpush1.msra.mxu0 %v1597
      %1841 = vmatprep.subr.mxu0 %v1602
      %1842 = vmatpush1.msra.mxu0 %v1601
      %1843 = vmatprep.subr.mxu0 %v1606
      %1844 = vmatpush1.msra.mxu0 %v1605
      %1845 = vmatprep.subr.mxu0 %v1610
      %1846 = vmatpush1.msra.mxu0 %v1609
      %1847 = vmatprep.subr.mxu0 %v1614
      %1848 = vmatpush1.msra.mxu0 %v1613
      %1849 = vmatprep.subr.mxu0 %v1618
      %1850 = vmatpush1.msra.mxu0 %v1617
      %1851 = vmatprep.subr.mxu0 %v1622
      %1852 = vmatpush1.msra.mxu0 %v1621
      %1853 = vmatprep.subr.mxu0 %v1626
      %1854 = vmatpush1.msra.mxu0 %v1625
      %1855 = vmatprep.subr.mxu0 %v1630
      %1856 = vmatpush1.msra.mxu0 %v1629
      %1857 = vmatprep.subr.mxu0 %v1634
      %1858 = vmatpush1.msra.mxu0 %v1633
      %1859 = vmatprep.subr.mxu0 %v1638
      %1860 = vmatpush1.msra.mxu0 %v1637
      %1861 = vmatprep.subr.mxu0 %v1642
      %1862 = vmatpush1.msra.mxu0 %v1641
      %1863 = vmatprep.subr.mxu0 %v1646
      %1864 = vmatpush1.msra.mxu0 %v1645
      %1865 = vmatprep.subr.mxu0 %v1650
      %1866 = vmatpush1.msra.mxu0 %v1649
      %1867 = vmatprep.subr.mxu0 %v1654
      %1868 = vmatpush1.msra.mxu0 %v1653
      %1869 = vmatprep.subr.mxu0 %v1658
      %1870 = vmatpush1.msra.mxu0 %v1657
      %1871 = vmatprep.subr.mxu0 %v1662
      %1872 = vmatpush1.msra.mxu0 %v1661
      %1873 = vmatprep.subr.mxu0 %v1666
      %1874 = vmatpush1.msra.mxu0 %v1665
      %1875 = vmatprep.subr.mxu0 %v1670
      %1876 = vmatpush1.msra.mxu0 %v1669
      %1877 = vmatprep.subr.mxu0 %v1674
      %1878 = vmatpush1.msra.mxu0 %v1673
      %1879 = vmatprep.subr.mxu0 %v1678
      %1880 = vmatpush1.msra.mxu0 %v1677
      %1881 = vmatprep.subr.mxu0 %v1682
      %1882 = vmatpush1.msra.mxu0 %v1681
      %1883 = vmatprep.subr.mxu0 %v1686
      %1884 = vmatpush1.msra.mxu0 %v1685
      %1885 = vmatprep.subr.mxu0 %v1690
      %1886 = vmatpush1.msra.mxu0 %v1689
      %1887 = vmatprep.subr.mxu0 %v1694
      %1888 = vmatpush1.msra.mxu0 %v1693
      %1889 = vmatprep.mubr.f32.mxu0 %v994
      %1890 = vmatmul.mubr.f32.gmra.mrb[0].mxu0 %v993
      %v1891 = vpop.f32.mrb[0].mxu0
      %v1892 = vadd.f32 0.0, %v1891
      %v1893 = vpop.f32.mrb[0].mxu0
      %v1894 = vadd.f32 0.0, %v1893
      %1895 = vmatprep.mubr.f32.mxu0 %v998
      %1896 = vmatmul.mubr.f32.gmra.mrb[0].mxu0 %v997
      %v1897 = vpop.f32.mrb[0].mxu0
      %v1898 = vadd.f32 0.0, %v1897
      %v1899 = vpop.f32.mrb[0].mxu0
      %v1900 = vadd.f32 0.0, %v1899
      %1901 = vdwg.mxu0
      %1902 = vmatprep.subr.mxu0 %v1698
      %1903 = vmatpush1.msra.mxu0 %v1697
      %1904 = vmatprep.subr.mxu0 %v1702
      %1905 = vmatpush1.msra.mxu0 %v1701
      %1906 = vmatprep.subr.mxu0 %v1706
      %1907 = vmatpush1.msra.mxu0 %v1705
      %1908 = vmatprep.subr.mxu0 %v1710
      %1909 = vmatpush1.msra.mxu0 %v1709
      %1910 = vmatprep.subr.mxu0 %v1714
      %1911 = vmatpush1.msra.mxu0 %v1713
      %1912 = vmatprep.subr.mxu0 %v1718
      %1913 = vmatpush1.msra.mxu0 %v1717
      %1914 = vmatprep.subr.mxu0 %v1722
      %1915 = vmatpush1.msra.mxu0 %v1721
      %1916 = vmatprep.subr.mxu0 %v1726
      %1917 = vmatpush1.msra.mxu0 %v1725
      %1918 = vmatprep.subr.mxu0 %v1730
      %1919 = vmatpush1.msra.mxu0 %v1729
      %1920 = vmatprep.subr.mxu0 %v1734
      %1921 = vmatpush1.msra.mxu0 %v1733
      %1922 = vmatprep.subr.mxu0 %v1738
      %1923 = vmatpush1.msra.mxu0 %v1737
      %1924 = vmatprep.subr.mxu0 %v1742
      %1925 = vmatpush1.msra.mxu0 %v1741
      %1926 = vmatprep.subr.mxu0 %v1746
      %1927 = vmatpush1.msra.mxu0 %v1745
      %1928 = vmatprep.subr.mxu0 %v1750
      %1929 = vmatpush1.msra.mxu0 %v1749
      %1930 = vmatprep.subr.mxu0 %v1754
      %1931 = vmatpush1.msra.mxu0 %v1753
      %1932 = vmatprep.subr.mxu0 %v1758
      %1933 = vmatpush1.msra.mxu0 %v1757
      %1934 = vmatprep.subr.mxu0 %v1762
      %1935 = vmatpush1.msra.mxu0 %v1761
      %1936 = vmatprep.subr.mxu0 %v1766
      %1937 = vmatpush1.msra.mxu0 %v1765
      %1938 = vmatprep.subr.mxu0 %v1770
      %1939 = vmatpush1.msra.mxu0 %v1769
      %1940 = vmatprep.subr.mxu0 %v1774
      %1941 = vmatpush1.msra.mxu0 %v1773
      %1942 = vmatprep.subr.mxu0 %v1778
      %1943 = vmatpush1.msra.mxu0 %v1777
      %1944 = vmatprep.subr.mxu0 %v1782
      %1945 = vmatpush1.msra.mxu0 %v1781
      %1946 = vmatprep.subr.mxu0 %v1786
      %1947 = vmatpush1.msra.mxu0 %v1785
      %1948 = vmatprep.subr.mxu0 %v1790
      %1949 = vmatpush1.msra.mxu0 %v1789
      %1950 = vmatprep.subr.mxu0 %v1794
      %1951 = vmatpush1.msra.mxu0 %v1793
      %1952 = vmatprep.subr.mxu0 %v1798
      %1953 = vmatpush1.msra.mxu0 %v1797
      %1954 = vmatprep.subr.mxu0 %v1802
      %1955 = vmatpush1.msra.mxu0 %v1801
      %1956 = vmatprep.subr.mxu0 %v1806
      %1957 = vmatpush1.msra.mxu0 %v1805
      %1958 = vmatprep.subr.mxu0 %v1810
      %1959 = vmatpush1.msra.mxu0 %v1809
      %1960 = vmatprep.subr.mxu0 %v1814
      %1961 = vmatpush1.msra.mxu0 %v1813
      %1962 = vmatprep.subr.mxu0 %v1818
      %1963 = vmatpush1.msra.mxu0 %v1817
      %1964 = vmatprep.subr.mxu0 %v1822
      %1965 = vmatpush1.msra.mxu0 %v1821
      %1966 = vmatprep.mubr.f32.mxu0 %v996
      %1967 = vmatmul.mubr.f32.gmra.mrb[0].mxu0 %v995
      %v1968 = vpop.f32.mrb[0].mxu0
      %v1969 = vadd.f32 %v1892, %v1968
      %v1970 = vpop.f32.mrb[0].mxu0
      %v1971 = vadd.f32 %v1894, %v1970
      %1972 = vmatprep.mubr.f32.mxu0 %v1000
      %1973 = vmatmul.mubr.f32.gmra.mrb[0].mxu0 %v999
      %v1974 = vpop.f32.mrb[0].mxu0
      %v1975 = vadd.f32 %v1898, %v1974
      %v1976 = vpop.f32.mrb[0].mxu0
      %v1977 = vadd.f32 %v1900, %v1976
      %1978 = vdwg.mxu0
      %1979 = vmatprep.subr.mxu0 %v1572
      %1980 = vmatpush1.msra.mxu0 %v1571
      %1981 = vmatprep.subr.mxu0 %v1576
      %1982 = vmatpush1.msra.mxu0 %v1575
      %1983 = vmatprep.subr.mxu0 %v1580
      %1984 = vmatpush1.msra.mxu0 %v1579
      %1985 = vmatprep.subr.mxu0 %v1584
      %1986 = vmatpush1.msra.mxu0 %v1583
      %1987 = vmatprep.subr.mxu0 %v1588
      %1988 = vmatpush1.msra.mxu0 %v1587
      %1989 = vmatprep.subr.mxu0 %v1592
      %1990 = vmatpush1.msra.mxu0 %v1591
      %1991 = vmatprep.subr.mxu0 %v1596
      %1992 = vmatpush1.msra.mxu0 %v1595
      %1993 = vmatprep.subr.mxu0 %v1600
      %1994 = vmatpush1.msra.mxu0 %v1599
      %1995 = vmatprep.subr.mxu0 %v1604
      %1996 = vmatpush1.msra.mxu0 %v1603
      %1997 = vmatprep.subr.mxu0 %v1608
      %1998 = vmatpush1.msra.mxu0 %v1607
      %1999 = vmatprep.subr.mxu0 %v1612
      %2000 = vmatpush1.msra.mxu0 %v1611
      %2001 = vmatprep.subr.mxu0 %v1616
      %2002 = vmatpush1.msra.mxu0 %v1615
      %2003 = vmatprep.subr.mxu0 %v1620
      %2004 = vmatpush1.msra.mxu0 %v1619
      %2005 = vmatprep.subr.mxu0 %v1624
      %2006 = vmatpush1.msra.mxu0 %v1623
      %2007 = vmatprep.subr.mxu0 %v1628
      %2008 = vmatpush1.msra.mxu0 %v1627
      %2009 = vmatprep.subr.mxu0 %v1632
      %2010 = vmatpush1.msra.mxu0 %v1631
      %2011 = vmatprep.subr.mxu0 %v1636
      %2012 = vmatpush1.msra.mxu0 %v1635
      %2013 = vmatprep.subr.mxu0 %v1640
      %2014 = vmatpush1.msra.mxu0 %v1639
      %2015 = vmatprep.subr.mxu0 %v1644
      %2016 = vmatpush1.msra.mxu0 %v1643
      %2017 = vmatprep.subr.mxu0 %v1648
      %2018 = vmatpush1.msra.mxu0 %v1647
      %2019 = vmatprep.subr.mxu0 %v1652
      %2020 = vmatpush1.msra.mxu0 %v1651
      %2021 = vmatprep.subr.mxu0 %v1656
      %2022 = vmatpush1.msra.mxu0 %v1655
      %2023 = vmatprep.subr.mxu0 %v1660
      %2024 = vmatpush1.msra.mxu0 %v1659
      %2025 = vmatprep.subr.mxu0 %v1664
      %2026 = vmatpush1.msra.mxu0 %v1663
      %2027 = vmatprep.subr.mxu0 %v1668
      %2028 = vmatpush1.msra.mxu0 %v1667
      %2029 = vmatprep.subr.mxu0 %v1672
      %2030 = vmatpush1.msra.mxu0 %v1671
      %2031 = vmatprep.subr.mxu0 %v1676
      %2032 = vmatpush1.msra.mxu0 %v1675
      %2033 = vmatprep.subr.mxu0 %v1680
      %2034 = vmatpush1.msra.mxu0 %v1679
      %2035 = vmatprep.subr.mxu0 %v1684
      %2036 = vmatpush1.msra.mxu0 %v1683
      %2037 = vmatprep.subr.mxu0 %v1688
      %2038 = vmatpush1.msra.mxu0 %v1687
      %2039 = vmatprep.subr.mxu0 %v1692
      %2040 = vmatpush1.msra.mxu0 %v1691
      %2041 = vmatprep.subr.mxu0 %v1696
      %2042 = vmatpush1.msra.mxu0 %v1695
      %2043 = vmatprep.mubr.f32.mxu0 %v994
      %2044 = vmatmul.mubr.f32.gmra.mrb[0].mxu0 %v993
      %v2045 = vpop.f32.mrb[0].mxu0
      %v2046 = vadd.f32 0.0, %v2045
      %v2047 = vpop.f32.mrb[0].mxu0
      %v2048 = vadd.f32 0.0, %v2047
      %2049 = vmatprep.mubr.f32.mxu0 %v998
      %2050 = vmatmul.mubr.f32.gmra.mrb[0].mxu0 %v997
      %v2051 = vpop.f32.mrb[0].mxu0
      %v2052 = vadd.f32 0.0, %v2051
      %v2053 = vpop.f32.mrb[0].mxu0
      %v2054 = vadd.f32 0.0, %v2053
      %2055 = vdwg.mxu0
      %2056 = vmatprep.subr.mxu0 %v1700
      %2057 = vmatpush1.msra.mxu0 %v1699
      %2058 = vmatprep.subr.mxu0 %v1704
      %2059 = vmatpush1.msra.mxu0 %v1703
      %2060 = vmatprep.subr.mxu0 %v1708
      %2061 = vmatpush1.msra.mxu0 %v1707
      %2062 = vmatprep.subr.mxu0 %v1712
      %2063 = vmatpush1.msra.mxu0 %v1711
      %2064 = vmatprep.subr.mxu0 %v1716
      %2065 = vmatpush1.msra.mxu0 %v1715
      %2066 = vmatprep.subr.mxu0 %v1720
      %2067 = vmatpush1.msra.mxu0 %v1719
      %2068 = vmatprep.subr.mxu0 %v1724
      %2069 = vmatpush1.msra.mxu0 %v1723
      %2070 = vmatprep.subr.mxu0 %v1728
      %2071 = vmatpush1.msra.mxu0 %v1727
      %2072 = vmatprep.subr.mxu0 %v1732
      %2073 = vmatpush1.msra.mxu0 %v1731
      %2074 = vmatprep.subr.mxu0 %v1736
      %2075 = vmatpush1.msra.mxu0 %v1735
      %2076 = vmatprep.subr.mxu0 %v1740
      %2077 = vmatpush1.msra.mxu0 %v1739
      %2078 = vmatprep.subr.mxu0 %v1744
      %2079 = vmatpush1.msra.mxu0 %v1743
      %2080 = vmatprep.subr.mxu0 %v1748
      %2081 = vmatpush1.msra.mxu0 %v1747
      %2082 = vmatprep.subr.mxu0 %v1752
      %2083 = vmatpush1.msra.mxu0 %v1751
      %2084 = vmatprep.subr.mxu0 %v1756
      %2085 = vmatpush1.msra.mxu0 %v1755
      %2086 = vmatprep.subr.mxu0 %v1760
      %2087 = vmatpush1.msra.mxu0 %v1759
      %2088 = vmatprep.subr.mxu0 %v1764
      %2089 = vmatpush1.msra.mxu0 %v1763
      %2090 = vmatprep.subr.mxu0 %v1768
      %2091 = vmatpush1.msra.mxu0 %v1767
      %2092 = vmatprep.subr.mxu0 %v1772
      %2093 = vmatpush1.msra.mxu0 %v1771
      %2094 = vmatprep.subr.mxu0 %v1776
      %2095 = vmatpush1.msra.mxu0 %v1775
      %2096 = vmatprep.subr.mxu0 %v1780
      %2097 = vmatpush1.msra.mxu0 %v1779
      %2098 = vmatprep.subr.mxu0 %v1784
      %2099 = vmatpush1.msra.mxu0 %v1783
      %2100 = vmatprep.subr.mxu0 %v1788
      %2101 = vmatpush1.msra.mxu0 %v1787
      %2102 = vmatprep.subr.mxu0 %v1792
      %2103 = vmatpush1.msra.mxu0 %v1791
      %2104 = vmatprep.subr.mxu0 %v1796
      %2105 = vmatpush1.msra.mxu0 %v1795
      %2106 = vmatprep.subr.mxu0 %v1800
      %2107 = vmatpush1.msra.mxu0 %v1799
      %2108 = vmatprep.subr.mxu0 %v1804
      %2109 = vmatpush1.msra.mxu0 %v1803
      %2110 = vmatprep.subr.mxu0 %v1808
      %2111 = vmatpush1.msra.mxu0 %v1807
      %2112 = vmatprep.subr.mxu0 %v1812
      %2113 = vmatpush1.msra.mxu0 %v1811
      %2114 = vmatprep.subr.mxu0 %v1816
      %2115 = vmatpush1.msra.mxu0 %v1815
      %2116 = vmatprep.subr.mxu0 %v1820
      %2117 = vmatpush1.msra.mxu0 %v1819
      %2118 = vmatprep.subr.mxu0 %v1824
      %2119 = vmatpush1.msra.mxu0 %v1823
      %2120 = vmatprep.mubr.f32.mxu0 %v996
      %2121 = vmatmul.mubr.f32.gmra.mrb[0].mxu0 %v995
      %v2122 = vpop.f32.mrb[0].mxu0
      %v2123 = vadd.f32 %v2046, %v2122
      %v2124 = vpop.f32.mrb[0].mxu0
      %v2125 = vadd.f32 %v2048, %v2124
      %2126 = vmatprep.mubr.f32.mxu0 %v1000
      %2127 = vmatmul.mubr.f32.gmra.mrb[0].mxu0 %v999
      %v2128 = vpop.f32.mrb[0].mxu0
      %v2129 = vadd.f32 %v2052, %v2128
      %v2130 = vpop.f32.mrb[0].mxu0
      %v2131 = vadd.f32 %v2054, %v2130
      %2132 = vdwg.mxu0
      %s2133 = scalar_lea.vmem %s1, 32
      %v2134 = vld [vmem:[%s2133] sm:$0xff]
      %v2135 = vld [vmem:[%s2133 + $0x8] sm:$0xff]
      %v2137 = vsel %vm252, %v2134, 0
      %v2140 = vsel %vm252, %v2135, 0
      %2142 = vmatprep.subr.mxu0 %v1971
      %2143 = vmatpush1.msra.mxu0 %v1969
      %2144 = vmatprep.subr.mxu0 %v1977
      %2145 = vmatpush1.msra.mxu0 %v1975
      %2146 = vmatprep.subr.mxu0 0.0
      %2147 = vmatpush1.msra.mxu0 0.0
      %2148 = vmatprep.subr.mxu0 0.0
      %2149 = vmatpush1.msra.mxu0 0.0
      %2150 = vmatprep.subr.mxu0 0.0
      %2151 = vmatpush1.msra.mxu0 0.0
      %2152 = vmatprep.subr.mxu0 0.0
      %2153 = vmatpush1.msra.mxu0 0.0
      %2154 = vmatprep.subr.mxu0 0.0
      %2155 = vmatpush1.msra.mxu0 0.0
      %2156 = vmatprep.subr.mxu0 0.0
      %2157 = vmatpush1.msra.mxu0 0.0
      %2158 = vmatprep.subr.mxu0 0.0
      %2159 = vmatpush1.msra.mxu0 0.0
      %2160 = vmatprep.subr.mxu0 0.0
      %2161 = vmatpush1.msra.mxu0 0.0
      %2162 = vmatprep.subr.mxu0 0.0
      %2163 = vmatpush1.msra.mxu0 0.0
      %2164 = vmatprep.subr.mxu0 0.0
      %2165 = vmatpush1.msra.mxu0 0.0
      %2166 = vmatprep.subr.mxu0 0.0
      %2167 = vmatpush1.msra.mxu0 0.0
      %2168 = vmatprep.subr.mxu0 0.0
      %2169 = vmatpush1.msra.mxu0 0.0
      %2170 = vmatprep.subr.mxu0 0.0
      %2171 = vmatpush1.msra.mxu0 0.0
      %2172 = vmatprep.subr.mxu0 0.0
      %2173 = vmatpush1.msra.mxu0 0.0
      %2174 = vmatprep.subr.mxu0 0.0
      %2175 = vmatpush1.msra.mxu0 0.0
      %2176 = vmatprep.subr.mxu0 0.0
      %2177 = vmatpush1.msra.mxu0 0.0
      %2178 = vmatprep.subr.mxu0 0.0
      %2179 = vmatpush1.msra.mxu0 0.0
      %2180 = vmatprep.subr.mxu0 0.0
      %2181 = vmatpush1.msra.mxu0 0.0
      %2182 = vmatprep.subr.mxu0 0.0
      %2183 = vmatpush1.msra.mxu0 0.0
      %2184 = vmatprep.subr.mxu0 0.0
      %2185 = vmatpush1.msra.mxu0 0.0
      %2186 = vmatprep.subr.mxu0 0.0
      %2187 = vmatpush1.msra.mxu0 0.0
      %2188 = vmatprep.subr.mxu0 0.0
      %2189 = vmatpush1.msra.mxu0 0.0
      %2190 = vmatprep.subr.mxu0 0.0
      %2191 = vmatpush1.msra.mxu0 0.0
      %2192 = vmatprep.subr.mxu0 0.0
      %2193 = vmatpush1.msra.mxu0 0.0
      %2194 = vmatprep.subr.mxu0 0.0
      %2195 = vmatpush1.msra.mxu0 0.0
      %2196 = vmatprep.subr.mxu0 0.0
      %2197 = vmatpush1.msra.mxu0 0.0
      %2198 = vmatprep.subr.mxu0 0.0
      %2199 = vmatpush1.msra.mxu0 0.0
      %2200 = vmatprep.subr.mxu0 0.0
      %2201 = vmatpush1.msra.mxu0 0.0
      %2202 = vmatprep.subr.mxu0 0.0
      %2203 = vmatpush1.msra.mxu0 0.0
      %2204 = vmatprep.subr.mxu0 0.0
      %2205 = vmatpush1.msra.mxu0 0.0
      %2206 = vmatprep.mubr.f32.mxu0 0.0
      %2207 = vmatmul.mubr.f32.gmra.mrb[0].mxu0 %v2137
      %v2208 = vpop.f32.mrb[0].mxu0
      %v2209 = vadd.f32 0.0, %v2208
      %v2210 = vpop.f32.mrb[0].mxu0
      %v2211 = vadd.f32 0.0, %v2210
      %2212 = vmatprep.mubr.f32.mxu0 0.0
      %2213 = vmatmul.mubr.f32.gmra.mrb[0].mxu0 %v2140
      %v2214 = vpop.f32.mrb[0].mxu0
      %v2215 = vadd.f32 0.0, %v2214
      %v2216 = vpop.f32.mrb[0].mxu0
      %v2217 = vadd.f32 0.0, %v2216
      %2218 = vdwg.mxu0
      %2219 = vmatprep.subr.mxu0 %v2125
      %2220 = vmatpush1.msra.mxu0 %v2123
      %2221 = vmatprep.subr.mxu0 %v2131
      %2222 = vmatpush1.msra.mxu0 %v2129
      %2223 = vmatprep.subr.mxu0 0.0
      %2224 = vmatpush1.msra.mxu0 0.0
      %2225 = vmatprep.subr.mxu0 0.0
      %2226 = vmatpush1.msra.mxu0 0.0
      %2227 = vmatprep.subr.mxu0 0.0
      %2228 = vmatpush1.msra.mxu0 0.0
      %2229 = vmatprep.subr.mxu0 0.0
      %2230 = vmatpush1.msra.mxu0 0.0
      %2231 = vmatprep.subr.mxu0 0.0
      %2232 = vmatpush1.msra.mxu0 0.0
      %2233 = vmatprep.subr.mxu0 0.0
      %2234 = vmatpush1.msra.mxu0 0.0
      %2235 = vmatprep.subr.mxu0 0.0
      %2236 = vmatpush1.msra.mxu0 0.0
      %2237 = vmatprep.subr.mxu0 0.0
      %2238 = vmatpush1.msra.mxu0 0.0
      %2239 = vmatprep.subr.mxu0 0.0
      %2240 = vmatpush1.msra.mxu0 0.0
      %2241 = vmatprep.subr.mxu0 0.0
      %2242 = vmatpush1.msra.mxu0 0.0
      %2243 = vmatprep.subr.mxu0 0.0
      %2244 = vmatpush1.msra.mxu0 0.0
      %2245 = vmatprep.subr.mxu0 0.0
      %2246 = vmatpush1.msra.mxu0 0.0
      %2247 = vmatprep.subr.mxu0 0.0
      %2248 = vmatpush1.msra.mxu0 0.0
      %2249 = vmatprep.subr.mxu0 0.0
      %2250 = vmatpush1.msra.mxu0 0.0
      %2251 = vmatprep.subr.mxu0 0.0
      %2252 = vmatpush1.msra.mxu0 0.0
      %2253 = vmatprep.subr.mxu0 0.0
      %2254 = vmatpush1.msra.mxu0 0.0
      %2255 = vmatprep.subr.mxu0 0.0
      %2256 = vmatpush1.msra.mxu0 0.0
      %2257 = vmatprep.subr.mxu0 0.0
      %2258 = vmatpush1.msra.mxu0 0.0
      %2259 = vmatprep.subr.mxu0 0.0
      %2260 = vmatpush1.msra.mxu0 0.0
      %2261 = vmatprep.subr.mxu0 0.0
      %2262 = vmatpush1.msra.mxu0 0.0
      %2263 = vmatprep.subr.mxu0 0.0
      %2264 = vmatpush1.msra.mxu0 0.0
      %2265 = vmatprep.subr.mxu0 0.0
      %2266 = vmatpush1.msra.mxu0 0.0
      %2267 = vmatprep.subr.mxu0 0.0
      %2268 = vmatpush1.msra.mxu0 0.0
      %2269 = vmatprep.subr.mxu0 0.0
      %2270 = vmatpush1.msra.mxu0 0.0
      %2271 = vmatprep.subr.mxu0 0.0
      %2272 = vmatpush1.msra.mxu0 0.0
      %2273 = vmatprep.subr.mxu0 0.0
      %2274 = vmatpush1.msra.mxu0 0.0
      %2275 = vmatprep.subr.mxu0 0.0
      %2276 = vmatpush1.msra.mxu0 0.0
      %2277 = vmatprep.subr.mxu0 0.0
      %2278 = vmatpush1.msra.mxu0 0.0
      %2279 = vmatprep.subr.mxu0 0.0
      %2280 = vmatpush1.msra.mxu0 0.0
      %2281 = vmatprep.subr.mxu0 0.0
      %2282 = vmatpush1.msra.mxu0 0.0
      %2283 = vmatprep.mubr.f32.mxu0 0.0
      %2284 = vmatmul.mubr.f32.gmra.mrb[0].mxu0 %v2137
      %v2285 = vpop.f32.mrb[0].mxu0
      %v2286 = vadd.f32 0.0, %v2285
      %v2287 = vpop.f32.mrb[0].mxu0
      %v2288 = vadd.f32 0.0, %v2287
      %2289 = vmatprep.mubr.f32.mxu0 0.0
      %2290 = vmatmul.mubr.f32.gmra.mrb[0].mxu0 %v2140
      %v2291 = vpop.f32.mrb[0].mxu0
      %v2292 = vadd.f32 0.0, %v2291
      %v2293 = vpop.f32.mrb[0].mxu0
      %v2294 = vadd.f32 0.0, %v2293
      %2295 = vdwg.mxu0
      %v2297 = vsel %vm252, %v1566, 0
      %v2300 = vsel %vm252, %v1567, 0
      %2302 = vmatprep.subr.mxu0 %v1403
      %2303 = vmatpush1.msra.mxu0 %v1401
      %2304 = vmatprep.subr.mxu0 %v1409
      %2305 = vmatpush1.msra.mxu0 %v1407
      %2306 = vmatprep.subr.mxu0 0.0
      %2307 = vmatpush1.msra.mxu0 0.0
      %2308 = vmatprep.subr.mxu0 0.0
      %2309 = vmatpush1.msra.mxu0 0.0
      %2310 = vmatprep.subr.mxu0 0.0
      %2311 = vmatpush1.msra.mxu0 0.0
      %2312 = vmatprep.subr.mxu0 0.0
      %2313 = vmatpush1.msra.mxu0 0.0
      %2314 = vmatprep.subr.mxu0 0.0
      %2315 = vmatpush1.msra.mxu0 0.0
      %2316 = vmatprep.subr.mxu0 0.0
      %2317 = vmatpush1.msra.mxu0 0.0
      %2318 = vmatprep.subr.mxu0 0.0
      %2319 = vmatpush1.msra.mxu0 0.0
      %2320 = vmatprep.subr.mxu0 0.0
      %2321 = vmatpush1.msra.mxu0 0.0
      %2322 = vmatprep.subr.mxu0 0.0
      %2323 = vmatpush1.msra.mxu0 0.0
      %2324 = vmatprep.subr.mxu0 0.0
      %2325 = vmatpush1.msra.mxu0 0.0
      %2326 = vmatprep.subr.mxu0 0.0
      %2327 = vmatpush1.msra.mxu0 0.0
      %2328 = vmatprep.subr.mxu0 0.0
      %2329 = vmatpush1.msra.mxu0 0.0
      %2330 = vmatprep.subr.mxu0 0.0
      %2331 = vmatpush1.msra.mxu0 0.0
      %2332 = vmatprep.subr.mxu0 0.0
      %2333 = vmatpush1.msra.mxu0 0.0
      %2334 = vmatprep.subr.mxu0 0.0
      %2335 = vmatpush1.msra.mxu0 0.0
      %2336 = vmatprep.subr.mxu0 0.0
      %2337 = vmatpush1.msra.mxu0 0.0
      %2338 = vmatprep.subr.mxu0 0.0
      %2339 = vmatpush1.msra.mxu0 0.0
      %2340 = vmatprep.subr.mxu0 0.0
      %2341 = vmatpush1.msra.mxu0 0.0
      %2342 = vmatprep.subr.mxu0 0.0
      %2343 = vmatpush1.msra.mxu0 0.0
      %2344 = vmatprep.subr.mxu0 0.0
      %2345 = vmatpush1.msra.mxu0 0.0
      %2346 = vmatprep.subr.mxu0 0.0
      %2347 = vmatpush1.msra.mxu0 0.0
      %2348 = vmatprep.subr.mxu0 0.0
      %2349 = vmatpush1.msra.mxu0 0.0
      %2350 = vmatprep.subr.mxu0 0.0
      %2351 = vmatpush1.msra.mxu0 0.0
      %2352 = vmatprep.subr.mxu0 0.0
      %2353 = vmatpush1.msra.mxu0 0.0
      %2354 = vmatprep.subr.mxu0 0.0
      %2355 = vmatpush1.msra.mxu0 0.0
      %2356 = vmatprep.subr.mxu0 0.0
      %2357 = vmatpush1.msra.mxu0 0.0
      %2358 = vmatprep.subr.mxu0 0.0
      %2359 = vmatpush1.msra.mxu0 0.0
      %2360 = vmatprep.subr.mxu0 0.0
      %2361 = vmatpush1.msra.mxu0 0.0
      %2362 = vmatprep.subr.mxu0 0.0
      %2363 = vmatpush1.msra.mxu0 0.0
      %2364 = vmatprep.subr.mxu0 0.0
      %2365 = vmatpush1.msra.mxu0 0.0
      %2366 = vmatprep.mubr.f32.mxu0 0.0
      %2367 = vmatmul.mubr.f32.gmra.mrb[0].mxu0 %v2297
      %v2368 = vpop.f32.mrb[0].mxu0
      %v2369 = vadd.f32 %v2209, %v2368
      %v2370 = vpop.f32.mrb[0].mxu0
      %v2371 = vadd.f32 %v2211, %v2370
      %2372 = vmatprep.mubr.f32.mxu0 0.0
      %2373 = vmatmul.mubr.f32.gmra.mrb[0].mxu0 %v2300
      %v2374 = vpop.f32.mrb[0].mxu0
      %v2375 = vadd.f32 %v2215, %v2374
      %v2376 = vpop.f32.mrb[0].mxu0
      %v2377 = vadd.f32 %v2217, %v2376
      %2378 = vdwg.mxu0
      %2379 = vmatprep.subr.mxu0 %v1557
      %2380 = vmatpush1.msra.mxu0 %v1555
      %2381 = vmatprep.subr.mxu0 %v1563
      %2382 = vmatpush1.msra.mxu0 %v1561
      %2383 = vmatprep.subr.mxu0 0.0
      %2384 = vmatpush1.msra.mxu0 0.0
      %2385 = vmatprep.subr.mxu0 0.0
      %2386 = vmatpush1.msra.mxu0 0.0
      %2387 = vmatprep.subr.mxu0 0.0
      %2388 = vmatpush1.msra.mxu0 0.0
      %2389 = vmatprep.subr.mxu0 0.0
      %2390 = vmatpush1.msra.mxu0 0.0
      %2391 = vmatprep.subr.mxu0 0.0
      %2392 = vmatpush1.msra.mxu0 0.0
      %2393 = vmatprep.subr.mxu0 0.0
      %2394 = vmatpush1.msra.mxu0 0.0
      %2395 = vmatprep.subr.mxu0 0.0
      %2396 = vmatpush1.msra.mxu0 0.0
      %2397 = vmatprep.subr.mxu0 0.0
      %2398 = vmatpush1.msra.mxu0 0.0
      %2399 = vmatprep.subr.mxu0 0.0
      %2400 = vmatpush1.msra.mxu0 0.0
      %2401 = vmatprep.subr.mxu0 0.0
      %2402 = vmatpush1.msra.mxu0 0.0
      %2403 = vmatprep.subr.mxu0 0.0
      %2404 = vmatpush1.msra.mxu0 0.0
      %2405 = vmatprep.subr.mxu0 0.0
      %2406 = vmatpush1.msra.mxu0 0.0
      %2407 = vmatprep.subr.mxu0 0.0
      %2408 = vmatpush1.msra.mxu0 0.0
      %2409 = vmatprep.subr.mxu0 0.0
      %2410 = vmatpush1.msra.mxu0 0.0
      %2411 = vmatprep.subr.mxu0 0.0
      %2412 = vmatpush1.msra.mxu0 0.0
      %2413 = vmatprep.subr.mxu0 0.0
      %2414 = vmatpush1.msra.mxu0 0.0
      %2415 = vmatprep.subr.mxu0 0.0
      %2416 = vmatpush1.msra.mxu0 0.0
      %2417 = vmatprep.subr.mxu0 0.0
      %2418 = vmatpush1.msra.mxu0 0.0
      %2419 = vmatprep.subr.mxu0 0.0
      %2420 = vmatpush1.msra.mxu0 0.0
      %2421 = vmatprep.subr.mxu0 0.0
      %2422 = vmatpush1.msra.mxu0 0.0
      %2423 = vmatprep.subr.mxu0 0.0
      %2424 = vmatpush1.msra.mxu0 0.0
      %2425 = vmatprep.subr.mxu0 0.0
      %2426 = vmatpush1.msra.mxu0 0.0
      %2427 = vmatprep.subr.mxu0 0.0
      %2428 = vmatpush1.msra.mxu0 0.0
      %2429 = vmatprep.subr.mxu0 0.0
      %2430 = vmatpush1.msra.mxu0 0.0
      %2431 = vmatprep.subr.mxu0 0.0
      %2432 = vmatpush1.msra.mxu0 0.0
      %2433 = vmatprep.subr.mxu0 0.0
      %2434 = vmatpush1.msra.mxu0 0.0
      %2435 = vmatprep.subr.mxu0 0.0
      %2436 = vmatpush1.msra.mxu0 0.0
      %2437 = vmatprep.subr.mxu0 0.0
      %2438 = vmatpush1.msra.mxu0 0.0
      %2439 = vmatprep.subr.mxu0 0.0
      %2440 = vmatpush1.msra.mxu0 0.0
      %2441 = vmatprep.subr.mxu0 0.0
      %2442 = vmatpush1.msra.mxu0 0.0
      %2443 = vmatprep.mubr.f32.mxu0 0.0
      %2444 = vmatmul.mubr.f32.gmra.mrb[0].mxu0 %v2297
      %v2445 = vpop.f32.mrb[0].mxu0
      %v2446 = vadd.f32 %v2286, %v2445
      %v2447 = vpop.f32.mrb[0].mxu0
      %v2448 = vadd.f32 %v2288, %v2447
      %2449 = vmatprep.mubr.f32.mxu0 0.0
      %2450 = vmatmul.mubr.f32.gmra.mrb[0].mxu0 %v2300
      %v2451 = vpop.f32.mrb[0].mxu0
      %v2452 = vadd.f32 %v2292, %v2451
      %v2453 = vpop.f32.mrb[0].mxu0
      %v2454 = vadd.f32 %v2294, %v2453
      %2455 = vdwg.mxu0
      %s2456 = scalar_lea.vmem %s3, 4096
      %v2457 = vld [vmem:[%s2456] sm:$0xff]
      %v2458 = vld [vmem:[%s2456 + $0x8] sm:$0xff]
      %v2459 = vld [vmem:[%s2456 + $0x10] sm:$0xff]
      %v2460 = vld [vmem:[%s2456 + $0x18] sm:$0xff]
      %v2461 = vld [vmem:[%s2456 + $0x20] sm:$0xff]
      %v2462 = vld [vmem:[%s2456 + $0x28] sm:$0xff]
      %v2463 = vld [vmem:[%s2456 + $0x30] sm:$0xff]
      %v2464 = vld [vmem:[%s2456 + $0x38] sm:$0xff]
      %v2465 = vld [vmem:[%s2456 + $0x40] sm:$0xff]
      %v2466 = vld [vmem:[%s2456 + $0x48] sm:$0xff]
      %v2467 = vld [vmem:[%s2456 + $0x50] sm:$0xff]
      %v2468 = vld [vmem:[%s2456 + $0x58] sm:$0xff]
      %v2469 = vld [vmem:[%s2456 + $0x60] sm:$0xff]
      %v2470 = vld [vmem:[%s2456 + $0x68] sm:$0xff]
      %v2471 = vld [vmem:[%s2456 + $0x70] sm:$0xff]
      %v2472 = vld [vmem:[%s2456 + $0x78] sm:$0xff]
      %v2473 = vld [vmem:[%s2456 + $0x80] sm:$0xff]
      %v2474 = vld [vmem:[%s2456 + $0x88] sm:$0xff]
      %v2475 = vld [vmem:[%s2456 + $0x90] sm:$0xff]
      %v2476 = vld [vmem:[%s2456 + $0x98] sm:$0xff]
      %v2477 = vld [vmem:[%s2456 + $0xa0] sm:$0xff]
      %v2478 = vld [vmem:[%s2456 + $0xa8] sm:$0xff]
      %v2479 = vld [vmem:[%s2456 + $0xb0] sm:$0xff]
      %v2480 = vld [vmem:[%s2456 + $0xb8] sm:$0xff]
      %v2481 = vld [vmem:[%s2456 + $0xc0] sm:$0xff]
      %v2482 = vld [vmem:[%s2456 + $0xc8] sm:$0xff]
      %v2483 = vld [vmem:[%s2456 + $0xd0] sm:$0xff]
      %v2484 = vld [vmem:[%s2456 + $0xd8] sm:$0xff]
      %v2485 = vld [vmem:[%s2456 + $0xe0] sm:$0xff]
      %v2486 = vld [vmem:[%s2456 + $0xe8] sm:$0xff]
      %v2487 = vld [vmem:[%s2456 + $0xf0] sm:$0xff]
      %v2488 = vld [vmem:[%s2456 + $0xf8] sm:$0xff]
      %v2489 = vld [vmem:[%s2456 + $0x100] sm:$0xff]
      %v2490 = vld [vmem:[%s2456 + $0x108] sm:$0xff]
      %v2491 = vld [vmem:[%s2456 + $0x110] sm:$0xff]
      %v2492 = vld [vmem:[%s2456 + $0x118] sm:$0xff]
      %v2493 = vld [vmem:[%s2456 + $0x120] sm:$0xff]
      %v2494 = vld [vmem:[%s2456 + $0x128] sm:$0xff]
      %v2495 = vld [vmem:[%s2456 + $0x130] sm:$0xff]
      %v2496 = vld [vmem:[%s2456 + $0x138] sm:$0xff]
      %v2497 = vld [vmem:[%s2456 + $0x140] sm:$0xff]
      %v2498 = vld [vmem:[%s2456 + $0x148] sm:$0xff]
      %v2499 = vld [vmem:[%s2456 + $0x150] sm:$0xff]
      %v2500 = vld [vmem:[%s2456 + $0x158] sm:$0xff]
      %v2501 = vld [vmem:[%s2456 + $0x160] sm:$0xff]
      %v2502 = vld [vmem:[%s2456 + $0x168] sm:$0xff]
      %v2503 = vld [vmem:[%s2456 + $0x170] sm:$0xff]
      %v2504 = vld [vmem:[%s2456 + $0x178] sm:$0xff]
      %v2505 = vld [vmem:[%s2456 + $0x180] sm:$0xff]
      %v2506 = vld [vmem:[%s2456 + $0x188] sm:$0xff]
      %v2507 = vld [vmem:[%s2456 + $0x190] sm:$0xff]
      %v2508 = vld [vmem:[%s2456 + $0x198] sm:$0xff]
      %v2509 = vld [vmem:[%s2456 + $0x1a0] sm:$0xff]
      %v2510 = vld [vmem:[%s2456 + $0x1a8] sm:$0xff]
      %v2511 = vld [vmem:[%s2456 + $0x1b0] sm:$0xff]
      %v2512 = vld [vmem:[%s2456 + $0x1b8] sm:$0xff]
      %v2513 = vld [vmem:[%s2456 + $0x1c0] sm:$0xff]
      %v2514 = vld [vmem:[%s2456 + $0x1c8] sm:$0xff]
      %v2515 = vld [vmem:[%s2456 + $0x1d0] sm:$0xff]
      %v2516 = vld [vmem:[%s2456 + $0x1d8] sm:$0xff]
      %v2517 = vld [vmem:[%s2456 + $0x1e0] sm:$0xff]
      %v2518 = vld [vmem:[%s2456 + $0x1e8] sm:$0xff]
      %v2519 = vld [vmem:[%s2456 + $0x1f0] sm:$0xff]
      %v2520 = vld [vmem:[%s2456 + $0x1f8] sm:$0xff]
      %v2521 = vld [vmem:[%s2456 + $0x200] sm:$0xff]
      %v2522 = vld [vmem:[%s2456 + $0x208] sm:$0xff]
      %v2523 = vld [vmem:[%s2456 + $0x210] sm:$0xff]
      %v2524 = vld [vmem:[%s2456 + $0x218] sm:$0xff]
      %v2525 = vld [vmem:[%s2456 + $0x220] sm:$0xff]
      %v2526 = vld [vmem:[%s2456 + $0x228] sm:$0xff]
      %v2527 = vld [vmem:[%s2456 + $0x230] sm:$0xff]
      %v2528 = vld [vmem:[%s2456 + $0x238] sm:$0xff]
      %v2529 = vld [vmem:[%s2456 + $0x240] sm:$0xff]
      %v2530 = vld [vmem:[%s2456 + $0x248] sm:$0xff]
      %v2531 = vld [vmem:[%s2456 + $0x250] sm:$0xff]
      %v2532 = vld [vmem:[%s2456 + $0x258] sm:$0xff]
      %v2533 = vld [vmem:[%s2456 + $0x260] sm:$0xff]
      %v2534 = vld [vmem:[%s2456 + $0x268] sm:$0xff]
      %v2535 = vld [vmem:[%s2456 + $0x270] sm:$0xff]
      %v2536 = vld [vmem:[%s2456 + $0x278] sm:$0xff]
      %v2537 = vld [vmem:[%s2456 + $0x280] sm:$0xff]
      %v2538 = vld [vmem:[%s2456 + $0x288] sm:$0xff]
      %v2539 = vld [vmem:[%s2456 + $0x290] sm:$0xff]
      %v2540 = vld [vmem:[%s2456 + $0x298] sm:$0xff]
      %v2541 = vld [vmem:[%s2456 + $0x2a0] sm:$0xff]
      %v2542 = vld [vmem:[%s2456 + $0x2a8] sm:$0xff]
      %v2543 = vld [vmem:[%s2456 + $0x2b0] sm:$0xff]
      %v2544 = vld [vmem:[%s2456 + $0x2b8] sm:$0xff]
      %v2545 = vld [vmem:[%s2456 + $0x2c0] sm:$0xff]
      %v2546 = vld [vmem:[%s2456 + $0x2c8] sm:$0xff]
      %v2547 = vld [vmem:[%s2456 + $0x2d0] sm:$0xff]
      %v2548 = vld [vmem:[%s2456 + $0x2d8] sm:$0xff]
      %v2549 = vld [vmem:[%s2456 + $0x2e0] sm:$0xff]
      %v2550 = vld [vmem:[%s2456 + $0x2e8] sm:$0xff]
      %v2551 = vld [vmem:[%s2456 + $0x2f0] sm:$0xff]
      %v2552 = vld [vmem:[%s2456 + $0x2f8] sm:$0xff]
      %v2553 = vld [vmem:[%s2456 + $0x300] sm:$0xff]
      %v2554 = vld [vmem:[%s2456 + $0x308] sm:$0xff]
      %v2555 = vld [vmem:[%s2456 + $0x310] sm:$0xff]
      %v2556 = vld [vmem:[%s2456 + $0x318] sm:$0xff]
      %v2557 = vld [vmem:[%s2456 + $0x320] sm:$0xff]
      %v2558 = vld [vmem:[%s2456 + $0x328] sm:$0xff]
      %v2559 = vld [vmem:[%s2456 + $0x330] sm:$0xff]
      %v2560 = vld [vmem:[%s2456 + $0x338] sm:$0xff]
      %v2561 = vld [vmem:[%s2456 + $0x340] sm:$0xff]
      %v2562 = vld [vmem:[%s2456 + $0x348] sm:$0xff]
      %v2563 = vld [vmem:[%s2456 + $0x350] sm:$0xff]
      %v2564 = vld [vmem:[%s2456 + $0x358] sm:$0xff]
      %v2565 = vld [vmem:[%s2456 + $0x360] sm:$0xff]
      %v2566 = vld [vmem:[%s2456 + $0x368] sm:$0xff]
      %v2567 = vld [vmem:[%s2456 + $0x370] sm:$0xff]
      %v2568 = vld [vmem:[%s2456 + $0x378] sm:$0xff]
      %v2569 = vld [vmem:[%s2456 + $0x380] sm:$0xff]
      %v2570 = vld [vmem:[%s2456 + $0x388] sm:$0xff]
      %v2571 = vld [vmem:[%s2456 + $0x390] sm:$0xff]
      %v2572 = vld [vmem:[%s2456 + $0x398] sm:$0xff]
      %v2573 = vld [vmem:[%s2456 + $0x3a0] sm:$0xff]
      %v2574 = vld [vmem:[%s2456 + $0x3a8] sm:$0xff]
      %v2575 = vld [vmem:[%s2456 + $0x3b0] sm:$0xff]
      %v2576 = vld [vmem:[%s2456 + $0x3b8] sm:$0xff]
      %v2577 = vld [vmem:[%s2456 + $0x3c0] sm:$0xff]
      %v2578 = vld [vmem:[%s2456 + $0x3c8] sm:$0xff]
      %v2579 = vld [vmem:[%s2456 + $0x3d0] sm:$0xff]
      %v2580 = vld [vmem:[%s2456 + $0x3d8] sm:$0xff]
      %v2581 = vld [vmem:[%s2456 + $0x3e0] sm:$0xff]
      %v2582 = vld [vmem:[%s2456 + $0x3e8] sm:$0xff]
      %v2583 = vld [vmem:[%s2456 + $0x3f0] sm:$0xff]
      %v2584 = vld [vmem:[%s2456 + $0x3f8] sm:$0xff]
      %v2585 = vld [vmem:[%s2456 + $0x400] sm:$0xff]
      %v2586 = vld [vmem:[%s2456 + $0x408] sm:$0xff]
      %v2587 = vld [vmem:[%s2456 + $0x410] sm:$0xff]
      %v2588 = vld [vmem:[%s2456 + $0x418] sm:$0xff]
      %v2589 = vld [vmem:[%s2456 + $0x420] sm:$0xff]
      %v2590 = vld [vmem:[%s2456 + $0x428] sm:$0xff]
      %v2591 = vld [vmem:[%s2456 + $0x430] sm:$0xff]
      %v2592 = vld [vmem:[%s2456 + $0x438] sm:$0xff]
      %v2593 = vld [vmem:[%s2456 + $0x440] sm:$0xff]
      %v2594 = vld [vmem:[%s2456 + $0x448] sm:$0xff]
      %v2595 = vld [vmem:[%s2456 + $0x450] sm:$0xff]
      %v2596 = vld [vmem:[%s2456 + $0x458] sm:$0xff]
      %v2597 = vld [vmem:[%s2456 + $0x460] sm:$0xff]
      %v2598 = vld [vmem:[%s2456 + $0x468] sm:$0xff]
      %v2599 = vld [vmem:[%s2456 + $0x470] sm:$0xff]
      %v2600 = vld [vmem:[%s2456 + $0x478] sm:$0xff]
      %v2601 = vld [vmem:[%s2456 + $0x480] sm:$0xff]
      %v2602 = vld [vmem:[%s2456 + $0x488] sm:$0xff]
      %v2603 = vld [vmem:[%s2456 + $0x490] sm:$0xff]
      %v2604 = vld [vmem:[%s2456 + $0x498] sm:$0xff]
      %v2605 = vld [vmem:[%s2456 + $0x4a0] sm:$0xff]
      %v2606 = vld [vmem:[%s2456 + $0x4a8] sm:$0xff]
      %v2607 = vld [vmem:[%s2456 + $0x4b0] sm:$0xff]
      %v2608 = vld [vmem:[%s2456 + $0x4b8] sm:$0xff]
      %v2609 = vld [vmem:[%s2456 + $0x4c0] sm:$0xff]
      %v2610 = vld [vmem:[%s2456 + $0x4c8] sm:$0xff]
      %v2611 = vld [vmem:[%s2456 + $0x4d0] sm:$0xff]
      %v2612 = vld [vmem:[%s2456 + $0x4d8] sm:$0xff]
      %v2613 = vld [vmem:[%s2456 + $0x4e0] sm:$0xff]
      %v2614 = vld [vmem:[%s2456 + $0x4e8] sm:$0xff]
      %v2615 = vld [vmem:[%s2456 + $0x4f0] sm:$0xff]
      %v2616 = vld [vmem:[%s2456 + $0x4f8] sm:$0xff]
      %v2617 = vld [vmem:[%s2456 + $0x500] sm:$0xff]
      %v2618 = vld [vmem:[%s2456 + $0x508] sm:$0xff]
      %v2619 = vld [vmem:[%s2456 + $0x510] sm:$0xff]
      %v2620 = vld [vmem:[%s2456 + $0x518] sm:$0xff]
      %v2621 = vld [vmem:[%s2456 + $0x520] sm:$0xff]
      %v2622 = vld [vmem:[%s2456 + $0x528] sm:$0xff]
      %v2623 = vld [vmem:[%s2456 + $0x530] sm:$0xff]
      %v2624 = vld [vmem:[%s2456 + $0x538] sm:$0xff]
      %v2625 = vld [vmem:[%s2456 + $0x540] sm:$0xff]
      %v2626 = vld [vmem:[%s2456 + $0x548] sm:$0xff]
      %v2627 = vld [vmem:[%s2456 + $0x550] sm:$0xff]
      %v2628 = vld [vmem:[%s2456 + $0x558] sm:$0xff]
      %v2629 = vld [vmem:[%s2456 + $0x560] sm:$0xff]
      %v2630 = vld [vmem:[%s2456 + $0x568] sm:$0xff]
      %v2631 = vld [vmem:[%s2456 + $0x570] sm:$0xff]
      %v2632 = vld [vmem:[%s2456 + $0x578] sm:$0xff]
      %v2633 = vld [vmem:[%s2456 + $0x580] sm:$0xff]
      %v2634 = vld [vmem:[%s2456 + $0x588] sm:$0xff]
      %v2635 = vld [vmem:[%s2456 + $0x590] sm:$0xff]
      %v2636 = vld [vmem:[%s2456 + $0x598] sm:$0xff]
      %v2637 = vld [vmem:[%s2456 + $0x5a0] sm:$0xff]
      %v2638 = vld [vmem:[%s2456 + $0x5a8] sm:$0xff]
      %v2639 = vld [vmem:[%s2456 + $0x5b0] sm:$0xff]
      %v2640 = vld [vmem:[%s2456 + $0x5b8] sm:$0xff]
      %v2641 = vld [vmem:[%s2456 + $0x5c0] sm:$0xff]
      %v2642 = vld [vmem:[%s2456 + $0x5c8] sm:$0xff]
      %v2643 = vld [vmem:[%s2456 + $0x5d0] sm:$0xff]
      %v2644 = vld [vmem:[%s2456 + $0x5d8] sm:$0xff]
      %v2645 = vld [vmem:[%s2456 + $0x5e0] sm:$0xff]
      %v2646 = vld [vmem:[%s2456 + $0x5e8] sm:$0xff]
      %v2647 = vld [vmem:[%s2456 + $0x5f0] sm:$0xff]
      %v2648 = vld [vmem:[%s2456 + $0x5f8] sm:$0xff]
      %v2649 = vld [vmem:[%s2456 + $0x600] sm:$0xff]
      %v2650 = vld [vmem:[%s2456 + $0x608] sm:$0xff]
      %v2651 = vld [vmem:[%s2456 + $0x610] sm:$0xff]
      %v2652 = vld [vmem:[%s2456 + $0x618] sm:$0xff]
      %v2653 = vld [vmem:[%s2456 + $0x620] sm:$0xff]
      %v2654 = vld [vmem:[%s2456 + $0x628] sm:$0xff]
      %v2655 = vld [vmem:[%s2456 + $0x630] sm:$0xff]
      %v2656 = vld [vmem:[%s2456 + $0x638] sm:$0xff]
      %v2657 = vld [vmem:[%s2456 + $0x640] sm:$0xff]
      %v2658 = vld [vmem:[%s2456 + $0x648] sm:$0xff]
      %v2659 = vld [vmem:[%s2456 + $0x650] sm:$0xff]
      %v2660 = vld [vmem:[%s2456 + $0x658] sm:$0xff]
      %v2661 = vld [vmem:[%s2456 + $0x660] sm:$0xff]
      %v2662 = vld [vmem:[%s2456 + $0x668] sm:$0xff]
      %v2663 = vld [vmem:[%s2456 + $0x670] sm:$0xff]
      %v2664 = vld [vmem:[%s2456 + $0x678] sm:$0xff]
      %v2665 = vld [vmem:[%s2456 + $0x680] sm:$0xff]
      %v2666 = vld [vmem:[%s2456 + $0x688] sm:$0xff]
      %v2667 = vld [vmem:[%s2456 + $0x690] sm:$0xff]
      %v2668 = vld [vmem:[%s2456 + $0x698] sm:$0xff]
      %v2669 = vld [vmem:[%s2456 + $0x6a0] sm:$0xff]
      %v2670 = vld [vmem:[%s2456 + $0x6a8] sm:$0xff]
      %v2671 = vld [vmem:[%s2456 + $0x6b0] sm:$0xff]
      %v2672 = vld [vmem:[%s2456 + $0x6b8] sm:$0xff]
      %v2673 = vld [vmem:[%s2456 + $0x6c0] sm:$0xff]
      %v2674 = vld [vmem:[%s2456 + $0x6c8] sm:$0xff]
      %v2675 = vld [vmem:[%s2456 + $0x6d0] sm:$0xff]
      %v2676 = vld [vmem:[%s2456 + $0x6d8] sm:$0xff]
      %v2677 = vld [vmem:[%s2456 + $0x6e0] sm:$0xff]
      %v2678 = vld [vmem:[%s2456 + $0x6e8] sm:$0xff]
      %v2679 = vld [vmem:[%s2456 + $0x6f0] sm:$0xff]
      %v2680 = vld [vmem:[%s2456 + $0x6f8] sm:$0xff]
      %v2681 = vld [vmem:[%s2456 + $0x700] sm:$0xff]
      %v2682 = vld [vmem:[%s2456 + $0x708] sm:$0xff]
      %v2683 = vld [vmem:[%s2456 + $0x710] sm:$0xff]
      %v2684 = vld [vmem:[%s2456 + $0x718] sm:$0xff]
      %v2685 = vld [vmem:[%s2456 + $0x720] sm:$0xff]
      %v2686 = vld [vmem:[%s2456 + $0x728] sm:$0xff]
      %v2687 = vld [vmem:[%s2456 + $0x730] sm:$0xff]
      %v2688 = vld [vmem:[%s2456 + $0x738] sm:$0xff]
      %v2689 = vld [vmem:[%s2456 + $0x740] sm:$0xff]
      %v2690 = vld [vmem:[%s2456 + $0x748] sm:$0xff]
      %v2691 = vld [vmem:[%s2456 + $0x750] sm:$0xff]
      %v2692 = vld [vmem:[%s2456 + $0x758] sm:$0xff]
      %v2693 = vld [vmem:[%s2456 + $0x760] sm:$0xff]
      %v2694 = vld [vmem:[%s2456 + $0x768] sm:$0xff]
      %v2695 = vld [vmem:[%s2456 + $0x770] sm:$0xff]
      %v2696 = vld [vmem:[%s2456 + $0x778] sm:$0xff]
      %v2697 = vld [vmem:[%s2456 + $0x780] sm:$0xff]
      %v2698 = vld [vmem:[%s2456 + $0x788] sm:$0xff]
      %v2699 = vld [vmem:[%s2456 + $0x790] sm:$0xff]
      %v2700 = vld [vmem:[%s2456 + $0x798] sm:$0xff]
      %v2701 = vld [vmem:[%s2456 + $0x7a0] sm:$0xff]
      %v2702 = vld [vmem:[%s2456 + $0x7a8] sm:$0xff]
      %v2703 = vld [vmem:[%s2456 + $0x7b0] sm:$0xff]
      %v2704 = vld [vmem:[%s2456 + $0x7b8] sm:$0xff]
      %v2705 = vld [vmem:[%s2456 + $0x7c0] sm:$0xff]
      %v2706 = vld [vmem:[%s2456 + $0x7c8] sm:$0xff]
      %v2707 = vld [vmem:[%s2456 + $0x7d0] sm:$0xff]
      %v2708 = vld [vmem:[%s2456 + $0x7d8] sm:$0xff]
      %v2709 = vld [vmem:[%s2456 + $0x7e0] sm:$0xff]
      %v2710 = vld [vmem:[%s2456 + $0x7e8] sm:$0xff]
      %v2711 = vld [vmem:[%s2456 + $0x7f0] sm:$0xff]
      %v2712 = vld [vmem:[%s2456 + $0x7f8] sm:$0xff]
      %2713 = vmatprep.subr.mxu0 %v2458
      %2714 = vmatpush1.msra.mxu0 %v2457
      %2715 = vmatprep.subr.mxu0 %v2462
      %2716 = vmatpush1.msra.mxu0 %v2461
      %2717 = vmatprep.subr.mxu0 %v2466
      %2718 = vmatpush1.msra.mxu0 %v2465
      %2719 = vmatprep.subr.mxu0 %v2470
      %2720 = vmatpush1.msra.mxu0 %v2469
      %2721 = vmatprep.subr.mxu0 %v2474
      %2722 = vmatpush1.msra.mxu0 %v2473
      %2723 = vmatprep.subr.mxu0 %v2478
      %2724 = vmatpush1.msra.mxu0 %v2477
      %2725 = vmatprep.subr.mxu0 %v2482
      %2726 = vmatpush1.msra.mxu0 %v2481
      %2727 = vmatprep.subr.mxu0 %v2486
      %2728 = vmatpush1.msra.mxu0 %v2485
      %2729 = vmatprep.subr.mxu0 %v2490
      %2730 = vmatpush1.msra.mxu0 %v2489
      %2731 = vmatprep.subr.mxu0 %v2494
      %2732 = vmatpush1.msra.mxu0 %v2493
      %2733 = vmatprep.subr.mxu0 %v2498
      %2734 = vmatpush1.msra.mxu0 %v2497
      %2735 = vmatprep.subr.mxu0 %v2502
      %2736 = vmatpush1.msra.mxu0 %v2501
      %2737 = vmatprep.subr.mxu0 %v2506
      %2738 = vmatpush1.msra.mxu0 %v2505
      %2739 = vmatprep.subr.mxu0 %v2510
      %2740 = vmatpush1.msra.mxu0 %v2509
      %2741 = vmatprep.subr.mxu0 %v2514
      %2742 = vmatpush1.msra.mxu0 %v2513
      %2743 = vmatprep.subr.mxu0 %v2518
      %2744 = vmatpush1.msra.mxu0 %v2517
      %2745 = vmatprep.subr.mxu0 %v2522
      %2746 = vmatpush1.msra.mxu0 %v2521
      %2747 = vmatprep.subr.mxu0 %v2526
      %2748 = vmatpush1.msra.mxu0 %v2525
      %2749 = vmatprep.subr.mxu0 %v2530
      %2750 = vmatpush1.msra.mxu0 %v2529
      %2751 = vmatprep.subr.mxu0 %v2534
      %2752 = vmatpush1.msra.mxu0 %v2533
      %2753 = vmatprep.subr.mxu0 %v2538
      %2754 = vmatpush1.msra.mxu0 %v2537
      %2755 = vmatprep.subr.mxu0 %v2542
      %2756 = vmatpush1.msra.mxu0 %v2541
      %2757 = vmatprep.subr.mxu0 %v2546
      %2758 = vmatpush1.msra.mxu0 %v2545
      %2759 = vmatprep.subr.mxu0 %v2550
      %2760 = vmatpush1.msra.mxu0 %v2549
      %2761 = vmatprep.subr.mxu0 %v2554
      %2762 = vmatpush1.msra.mxu0 %v2553
      %2763 = vmatprep.subr.mxu0 %v2558
      %2764 = vmatpush1.msra.mxu0 %v2557
      %2765 = vmatprep.subr.mxu0 %v2562
      %2766 = vmatpush1.msra.mxu0 %v2561
      %2767 = vmatprep.subr.mxu0 %v2566
      %2768 = vmatpush1.msra.mxu0 %v2565
      %2769 = vmatprep.subr.mxu0 %v2570
      %2770 = vmatpush1.msra.mxu0 %v2569
      %2771 = vmatprep.subr.mxu0 %v2574
      %2772 = vmatpush1.msra.mxu0 %v2573
      %2773 = vmatprep.subr.mxu0 %v2578
      %2774 = vmatpush1.msra.mxu0 %v2577
      %2775 = vmatprep.subr.mxu0 %v2582
      %2776 = vmatpush1.msra.mxu0 %v2581
      %2777 = vmatprep.mubr.f32.mxu0 %v994
      %2778 = vmatmul.mubr.f32.gmra.mrb[0].mxu0 %v993
      %v2779 = vpop.f32.mrb[0].mxu0
      %v2780 = vadd.f32 0.0, %v2779
      %v2781 = vpop.f32.mrb[0].mxu0
      %v2782 = vadd.f32 0.0, %v2781
      %2783 = vmatprep.mubr.f32.mxu0 %v998
      %2784 = vmatmul.mubr.f32.gmra.mrb[0].mxu0 %v997
      %v2785 = vpop.f32.mrb[0].mxu0
      %v2786 = vadd.f32 0.0, %v2785
      %v2787 = vpop.f32.mrb[0].mxu0
      %v2788 = vadd.f32 0.0, %v2787
      %2789 = vdwg.mxu0
      %2790 = vmatprep.subr.mxu0 %v2586
      %2791 = vmatpush1.msra.mxu0 %v2585
      %2792 = vmatprep.subr.mxu0 %v2590
      %2793 = vmatpush1.msra.mxu0 %v2589
      %2794 = vmatprep.subr.mxu0 %v2594
      %2795 = vmatpush1.msra.mxu0 %v2593
      %2796 = vmatprep.subr.mxu0 %v2598
      %2797 = vmatpush1.msra.mxu0 %v2597
      %2798 = vmatprep.subr.mxu0 %v2602
      %2799 = vmatpush1.msra.mxu0 %v2601
      %2800 = vmatprep.subr.mxu0 %v2606
      %2801 = vmatpush1.msra.mxu0 %v2605
      %2802 = vmatprep.subr.mxu0 %v2610
      %2803 = vmatpush1.msra.mxu0 %v2609
      %2804 = vmatprep.subr.mxu0 %v2614
      %2805 = vmatpush1.msra.mxu0 %v2613
      %2806 = vmatprep.subr.mxu0 %v2618
      %2807 = vmatpush1.msra.mxu0 %v2617
      %2808 = vmatprep.subr.mxu0 %v2622
      %2809 = vmatpush1.msra.mxu0 %v2621
      %2810 = vmatprep.subr.mxu0 %v2626
      %2811 = vmatpush1.msra.mxu0 %v2625
      %2812 = vmatprep.subr.mxu0 %v2630
      %2813 = vmatpush1.msra.mxu0 %v2629
      %2814 = vmatprep.subr.mxu0 %v2634
      %2815 = vmatpush1.msra.mxu0 %v2633
      %2816 = vmatprep.subr.mxu0 %v2638
      %2817 = vmatpush1.msra.mxu0 %v2637
      %2818 = vmatprep.subr.mxu0 %v2642
      %2819 = vmatpush1.msra.mxu0 %v2641
      %2820 = vmatprep.subr.mxu0 %v2646
      %2821 = vmatpush1.msra.mxu0 %v2645
      %2822 = vmatprep.subr.mxu0 %v2650
      %2823 = vmatpush1.msra.mxu0 %v2649
      %2824 = vmatprep.subr.mxu0 %v2654
      %2825 = vmatpush1.msra.mxu0 %v2653
      %2826 = vmatprep.subr.mxu0 %v2658
      %2827 = vmatpush1.msra.mxu0 %v2657
      %2828 = vmatprep.subr.mxu0 %v2662
      %2829 = vmatpush1.msra.mxu0 %v2661
      %2830 = vmatprep.subr.mxu0 %v2666
      %2831 = vmatpush1.msra.mxu0 %v2665
      %2832 = vmatprep.subr.mxu0 %v2670
      %2833 = vmatpush1.msra.mxu0 %v2669
      %2834 = vmatprep.subr.mxu0 %v2674
      %2835 = vmatpush1.msra.mxu0 %v2673
      %2836 = vmatprep.subr.mxu0 %v2678
      %2837 = vmatpush1.msra.mxu0 %v2677
      %2838 = vmatprep.subr.mxu0 %v2682
      %2839 = vmatpush1.msra.mxu0 %v2681
      %2840 = vmatprep.subr.mxu0 %v2686
      %2841 = vmatpush1.msra.mxu0 %v2685
      %2842 = vmatprep.subr.mxu0 %v2690
      %2843 = vmatpush1.msra.mxu0 %v2689
      %2844 = vmatprep.subr.mxu0 %v2694
      %2845 = vmatpush1.msra.mxu0 %v2693
      %2846 = vmatprep.subr.mxu0 %v2698
      %2847 = vmatpush1.msra.mxu0 %v2697
      %2848 = vmatprep.subr.mxu0 %v2702
      %2849 = vmatpush1.msra.mxu0 %v2701
      %2850 = vmatprep.subr.mxu0 %v2706
      %2851 = vmatpush1.msra.mxu0 %v2705
      %2852 = vmatprep.subr.mxu0 %v2710
      %2853 = vmatpush1.msra.mxu0 %v2709
      %2854 = vmatprep.mubr.f32.mxu0 %v996
      %2855 = vmatmul.mubr.f32.gmra.mrb[0].mxu0 %v995
      %v2856 = vpop.f32.mrb[0].mxu0
      %v2857 = vadd.f32 %v2780, %v2856
      %v2858 = vpop.f32.mrb[0].mxu0
      %v2859 = vadd.f32 %v2782, %v2858
      %2860 = vmatprep.mubr.f32.mxu0 %v1000
      %2861 = vmatmul.mubr.f32.gmra.mrb[0].mxu0 %v999
      %v2862 = vpop.f32.mrb[0].mxu0
      %v2863 = vadd.f32 %v2786, %v2862
      %v2864 = vpop.f32.mrb[0].mxu0
      %v2865 = vadd.f32 %v2788, %v2864
      %2866 = vdwg.mxu0
      %2867 = vmatprep.subr.mxu0 %v2460
      %2868 = vmatpush1.msra.mxu0 %v2459
      %2869 = vmatprep.subr.mxu0 %v2464
      %2870 = vmatpush1.msra.mxu0 %v2463
      %2871 = vmatprep.subr.mxu0 %v2468
      %2872 = vmatpush1.msra.mxu0 %v2467
      %2873 = vmatprep.subr.mxu0 %v2472
      %2874 = vmatpush1.msra.mxu0 %v2471
      %2875 = vmatprep.subr.mxu0 %v2476
      %2876 = vmatpush1.msra.mxu0 %v2475
      %2877 = vmatprep.subr.mxu0 %v2480
      %2878 = vmatpush1.msra.mxu0 %v2479
      %2879 = vmatprep.subr.mxu0 %v2484
      %2880 = vmatpush1.msra.mxu0 %v2483
      %2881 = vmatprep.subr.mxu0 %v2488
      %2882 = vmatpush1.msra.mxu0 %v2487
      %2883 = vmatprep.subr.mxu0 %v2492
      %2884 = vmatpush1.msra.mxu0 %v2491
      %2885 = vmatprep.subr.mxu0 %v2496
      %2886 = vmatpush1.msra.mxu0 %v2495
      %2887 = vmatprep.subr.mxu0 %v2500
      %2888 = vmatpush1.msra.mxu0 %v2499
      %2889 = vmatprep.subr.mxu0 %v2504
      %2890 = vmatpush1.msra.mxu0 %v2503
      %2891 = vmatprep.subr.mxu0 %v2508
      %2892 = vmatpush1.msra.mxu0 %v2507
      %2893 = vmatprep.subr.mxu0 %v2512
      %2894 = vmatpush1.msra.mxu0 %v2511
      %2895 = vmatprep.subr.mxu0 %v2516
      %2896 = vmatpush1.msra.mxu0 %v2515
      %2897 = vmatprep.subr.mxu0 %v2520
      %2898 = vmatpush1.msra.mxu0 %v2519
      %2899 = vmatprep.subr.mxu0 %v2524
      %2900 = vmatpush1.msra.mxu0 %v2523
      %2901 = vmatprep.subr.mxu0 %v2528
      %2902 = vmatpush1.msra.mxu0 %v2527
      %2903 = vmatprep.subr.mxu0 %v2532
      %2904 = vmatpush1.msra.mxu0 %v2531
      %2905 = vmatprep.subr.mxu0 %v2536
      %2906 = vmatpush1.msra.mxu0 %v2535
      %2907 = vmatprep.subr.mxu0 %v2540
      %2908 = vmatpush1.msra.mxu0 %v2539
      %2909 = vmatprep.subr.mxu0 %v2544
      %2910 = vmatpush1.msra.mxu0 %v2543
      %2911 = vmatprep.subr.mxu0 %v2548
      %2912 = vmatpush1.msra.mxu0 %v2547
      %2913 = vmatprep.subr.mxu0 %v2552
      %2914 = vmatpush1.msra.mxu0 %v2551
      %2915 = vmatprep.subr.mxu0 %v2556
      %2916 = vmatpush1.msra.mxu0 %v2555
      %2917 = vmatprep.subr.mxu0 %v2560
      %2918 = vmatpush1.msra.mxu0 %v2559
      %2919 = vmatprep.subr.mxu0 %v2564
      %2920 = vmatpush1.msra.mxu0 %v2563
      %2921 = vmatprep.subr.mxu0 %v2568
      %2922 = vmatpush1.msra.mxu0 %v2567
      %2923 = vmatprep.subr.mxu0 %v2572
      %2924 = vmatpush1.msra.mxu0 %v2571
      %2925 = vmatprep.subr.mxu0 %v2576
      %2926 = vmatpush1.msra.mxu0 %v2575
      %2927 = vmatprep.subr.mxu0 %v2580
      %2928 = vmatpush1.msra.mxu0 %v2579
      %2929 = vmatprep.subr.mxu0 %v2584
      %2930 = vmatpush1.msra.mxu0 %v2583
      %2931 = vmatprep.mubr.f32.mxu0 %v994
      %2932 = vmatmul.mubr.f32.gmra.mrb[0].mxu0 %v993
      %v2933 = vpop.f32.mrb[0].mxu0
      %v2934 = vadd.f32 0.0, %v2933
      %v2935 = vpop.f32.mrb[0].mxu0
      %v2936 = vadd.f32 0.0, %v2935
      %2937 = vmatprep.mubr.f32.mxu0 %v998
      %2938 = vmatmul.mubr.f32.gmra.mrb[0].mxu0 %v997
      %v2939 = vpop.f32.mrb[0].mxu0
      %v2940 = vadd.f32 0.0, %v2939
      %v2941 = vpop.f32.mrb[0].mxu0
      %v2942 = vadd.f32 0.0, %v2941
      %2943 = vdwg.mxu0
      %2944 = vmatprep.subr.mxu0 %v2588
      %2945 = vmatpush1.msra.mxu0 %v2587
      %2946 = vmatprep.subr.mxu0 %v2592
      %2947 = vmatpush1.msra.mxu0 %v2591
      %2948 = vmatprep.subr.mxu0 %v2596
      %2949 = vmatpush1.msra.mxu0 %v2595
      %2950 = vmatprep.subr.mxu0 %v2600
      %2951 = vmatpush1.msra.mxu0 %v2599
      %2952 = vmatprep.subr.mxu0 %v2604
      %2953 = vmatpush1.msra.mxu0 %v2603
      %2954 = vmatprep.subr.mxu0 %v2608
      %2955 = vmatpush1.msra.mxu0 %v2607
      %2956 = vmatprep.subr.mxu0 %v2612
      %2957 = vmatpush1.msra.mxu0 %v2611
      %2958 = vmatprep.subr.mxu0 %v2616
      %2959 = vmatpush1.msra.mxu0 %v2615
      %2960 = vmatprep.subr.mxu0 %v2620
      %2961 = vmatpush1.msra.mxu0 %v2619
      %2962 = vmatprep.subr.mxu0 %v2624
      %2963 = vmatpush1.msra.mxu0 %v2623
      %2964 = vmatprep.subr.mxu0 %v2628
      %2965 = vmatpush1.msra.mxu0 %v2627
      %2966 = vmatprep.subr.mxu0 %v2632
      %2967 = vmatpush1.msra.mxu0 %v2631
      %2968 = vmatprep.subr.mxu0 %v2636
      %2969 = vmatpush1.msra.mxu0 %v2635
      %2970 = vmatprep.subr.mxu0 %v2640
      %2971 = vmatpush1.msra.mxu0 %v2639
      %2972 = vmatprep.subr.mxu0 %v2644
      %2973 = vmatpush1.msra.mxu0 %v2643
      %2974 = vmatprep.subr.mxu0 %v2648
      %2975 = vmatpush1.msra.mxu0 %v2647
      %2976 = vmatprep.subr.mxu0 %v2652
      %2977 = vmatpush1.msra.mxu0 %v2651
      %2978 = vmatprep.subr.mxu0 %v2656
      %2979 = vmatpush1.msra.mxu0 %v2655
      %2980 = vmatprep.subr.mxu0 %v2660
      %2981 = vmatpush1.msra.mxu0 %v2659
      %2982 = vmatprep.subr.mxu0 %v2664
      %2983 = vmatpush1.msra.mxu0 %v2663
      %2984 = vmatprep.subr.mxu0 %v2668
      %2985 = vmatpush1.msra.mxu0 %v2667
      %2986 = vmatprep.subr.mxu0 %v2672
      %2987 = vmatpush1.msra.mxu0 %v2671
      %2988 = vmatprep.subr.mxu0 %v2676
      %2989 = vmatpush1.msra.mxu0 %v2675
      %2990 = vmatprep.subr.mxu0 %v2680
      %2991 = vmatpush1.msra.mxu0 %v2679
      %2992 = vmatprep.subr.mxu0 %v2684
      %2993 = vmatpush1.msra.mxu0 %v2683
      %2994 = vmatprep.subr.mxu0 %v2688
      %2995 = vmatpush1.msra.mxu0 %v2687
      %2996 = vmatprep.subr.mxu0 %v2692
      %2997 = vmatpush1.msra.mxu0 %v2691
      %2998 = vmatprep.subr.mxu0 %v2696
      %2999 = vmatpush1.msra.mxu0 %v2695
      %3000 = vmatprep.subr.mxu0 %v2700
      %3001 = vmatpush1.msra.mxu0 %v2699
      %3002 = vmatprep.subr.mxu0 %v2704
      %3003 = vmatpush1.msra.mxu0 %v2703
      %3004 = vmatprep.subr.mxu0 %v2708
      %3005 = vmatpush1.msra.mxu0 %v2707
      %3006 = vmatprep.subr.mxu0 %v2712
      %3007 = vmatpush1.msra.mxu0 %v2711
      %3008 = vmatprep.mubr.f32.mxu0 %v996
      %3009 = vmatmul.mubr.f32.gmra.mrb[0].mxu0 %v995
      %v3010 = vpop.f32.mrb[0].mxu0
      %v3011 = vadd.f32 %v2934, %v3010
      %v3012 = vpop.f32.mrb[0].mxu0
      %v3013 = vadd.f32 %v2936, %v3012
      %3014 = vmatprep.mubr.f32.mxu0 %v1000
      %3015 = vmatmul.mubr.f32.gmra.mrb[0].mxu0 %v999
      %v3016 = vpop.f32.mrb[0].mxu0
      %v3017 = vadd.f32 %v2940, %v3016
      %v3018 = vpop.f32.mrb[0].mxu0
      %v3019 = vadd.f32 %v2942, %v3018
      %3020 = vdwg.mxu0
      %s3021 = scalar_lea.vmem %s1, 48
      %v3022 = vld [vmem:[%s3021] sm:$0xff]
      %v3023 = vld [vmem:[%s3021 + $0x8] sm:$0xff]
      %v3025 = vsel %vm252, %v3022, 0
      %v3028 = vsel %vm252, %v3023, 0
      %3030 = vmatprep.subr.mxu0 %v2859
      %3031 = vmatpush1.msra.mxu0 %v2857
      %3032 = vmatprep.subr.mxu0 %v2865
      %3033 = vmatpush1.msra.mxu0 %v2863
      %3034 = vmatprep.subr.mxu0 0.0
      %3035 = vmatpush1.msra.mxu0 0.0
      %3036 = vmatprep.subr.mxu0 0.0
      %3037 = vmatpush1.msra.mxu0 0.0
      %3038 = vmatprep.subr.mxu0 0.0
      %3039 = vmatpush1.msra.mxu0 0.0
      %3040 = vmatprep.subr.mxu0 0.0
      %3041 = vmatpush1.msra.mxu0 0.0
      %3042 = vmatprep.subr.mxu0 0.0
      %3043 = vmatpush1.msra.mxu0 0.0
      %3044 = vmatprep.subr.mxu0 0.0
      %3045 = vmatpush1.msra.mxu0 0.0
      %3046 = vmatprep.subr.mxu0 0.0
      %3047 = vmatpush1.msra.mxu0 0.0
      %3048 = vmatprep.subr.mxu0 0.0
      %3049 = vmatpush1.msra.mxu0 0.0
      %3050 = vmatprep.subr.mxu0 0.0
      %3051 = vmatpush1.msra.mxu0 0.0
      %3052 = vmatprep.subr.mxu0 0.0
      %3053 = vmatpush1.msra.mxu0 0.0
      %3054 = vmatprep.subr.mxu0 0.0
      %3055 = vmatpush1.msra.mxu0 0.0
      %3056 = vmatprep.subr.mxu0 0.0
      %3057 = vmatpush1.msra.mxu0 0.0
      %3058 = vmatprep.subr.mxu0 0.0
      %3059 = vmatpush1.msra.mxu0 0.0
      %3060 = vmatprep.subr.mxu0 0.0
      %3061 = vmatpush1.msra.mxu0 0.0
      %3062 = vmatprep.subr.mxu0 0.0
      %3063 = vmatpush1.msra.mxu0 0.0
      %3064 = vmatprep.subr.mxu0 0.0
      %3065 = vmatpush1.msra.mxu0 0.0
      %3066 = vmatprep.subr.mxu0 0.0
      %3067 = vmatpush1.msra.mxu0 0.0
      %3068 = vmatprep.subr.mxu0 0.0
      %3069 = vmatpush1.msra.mxu0 0.0
      %3070 = vmatprep.subr.mxu0 0.0
      %3071 = vmatpush1.msra.mxu0 0.0
      %3072 = vmatprep.subr.mxu0 0.0
      %3073 = vmatpush1.msra.mxu0 0.0
      %3074 = vmatprep.subr.mxu0 0.0
      %3075 = vmatpush1.msra.mxu0 0.0
      %3076 = vmatprep.subr.mxu0 0.0
      %3077 = vmatpush1.msra.mxu0 0.0
      %3078 = vmatprep.subr.mxu0 0.0
      %3079 = vmatpush1.msra.mxu0 0.0
      %3080 = vmatprep.subr.mxu0 0.0
      %3081 = vmatpush1.msra.mxu0 0.0
      %3082 = vmatprep.subr.mxu0 0.0
      %3083 = vmatpush1.msra.mxu0 0.0
      %3084 = vmatprep.subr.mxu0 0.0
      %3085 = vmatpush1.msra.mxu0 0.0
      %3086 = vmatprep.subr.mxu0 0.0
      %3087 = vmatpush1.msra.mxu0 0.0
      %3088 = vmatprep.subr.mxu0 0.0
      %3089 = vmatpush1.msra.mxu0 0.0
      %3090 = vmatprep.subr.mxu0 0.0
      %3091 = vmatpush1.msra.mxu0 0.0
      %3092 = vmatprep.subr.mxu0 0.0
      %3093 = vmatpush1.msra.mxu0 0.0
      %3094 = vmatprep.mubr.f32.mxu0 0.0
      %3095 = vmatmul.mubr.f32.gmra.mrb[0].mxu0 %v3025
      %v3096 = vpop.f32.mrb[0].mxu0
      %v3097 = vadd.f32 0.0, %v3096
      %v3098 = vpop.f32.mrb[0].mxu0
      %v3099 = vadd.f32 0.0, %v3098
      %3100 = vmatprep.mubr.f32.mxu0 0.0
      %3101 = vmatmul.mubr.f32.gmra.mrb[0].mxu0 %v3028
      %v3102 = vpop.f32.mrb[0].mxu0
      %v3103 = vadd.f32 0.0, %v3102
      %v3104 = vpop.f32.mrb[0].mxu0
      %v3105 = vadd.f32 0.0, %v3104
      %3106 = vdwg.mxu0
      %3107 = vmatprep.subr.mxu0 %v3013
      %3108 = vmatpush1.msra.mxu0 %v3011
      %3109 = vmatprep.subr.mxu0 %v3019
      %3110 = vmatpush1.msra.mxu0 %v3017
      %3111 = vmatprep.subr.mxu0 0.0
      %3112 = vmatpush1.msra.mxu0 0.0
      %3113 = vmatprep.subr.mxu0 0.0
      %3114 = vmatpush1.msra.mxu0 0.0
      %3115 = vmatprep.subr.mxu0 0.0
      %3116 = vmatpush1.msra.mxu0 0.0
      %3117 = vmatprep.subr.mxu0 0.0
      %3118 = vmatpush1.msra.mxu0 0.0
      %3119 = vmatprep.subr.mxu0 0.0
      %3120 = vmatpush1.msra.mxu0 0.0
      %3121 = vmatprep.subr.mxu0 0.0
      %3122 = vmatpush1.msra.mxu0 0.0
      %3123 = vmatprep.subr.mxu0 0.0
      %3124 = vmatpush1.msra.mxu0 0.0
      %3125 = vmatprep.subr.mxu0 0.0
      %3126 = vmatpush1.msra.mxu0 0.0
      %3127 = vmatprep.subr.mxu0 0.0
      %3128 = vmatpush1.msra.mxu0 0.0
      %3129 = vmatprep.subr.mxu0 0.0
      %3130 = vmatpush1.msra.mxu0 0.0
      %3131 = vmatprep.subr.mxu0 0.0
      %3132 = vmatpush1.msra.mxu0 0.0
      %3133 = vmatprep.subr.mxu0 0.0
      %3134 = vmatpush1.msra.mxu0 0.0
      %3135 = vmatprep.subr.mxu0 0.0
      %3136 = vmatpush1.msra.mxu0 0.0
      %3137 = vmatprep.subr.mxu0 0.0
      %3138 = vmatpush1.msra.mxu0 0.0
      %3139 = vmatprep.subr.mxu0 0.0
      %3140 = vmatpush1.msra.mxu0 0.0
      %3141 = vmatprep.subr.mxu0 0.0
      %3142 = vmatpush1.msra.mxu0 0.0
      %3143 = vmatprep.subr.mxu0 0.0
      %3144 = vmatpush1.msra.mxu0 0.0
      %3145 = vmatprep.subr.mxu0 0.0
      %3146 = vmatpush1.msra.mxu0 0.0
      %3147 = vmatprep.subr.mxu0 0.0
      %3148 = vmatpush1.msra.mxu0 0.0
      %3149 = vmatprep.subr.mxu0 0.0
      %3150 = vmatpush1.msra.mxu0 0.0
      %3151 = vmatprep.subr.mxu0 0.0
      %3152 = vmatpush1.msra.mxu0 0.0
      %3153 = vmatprep.subr.mxu0 0.0
      %3154 = vmatpush1.msra.mxu0 0.0
      %3155 = vmatprep.subr.mxu0 0.0
      %3156 = vmatpush1.msra.mxu0 0.0
      %3157 = vmatprep.subr.mxu0 0.0
      %3158 = vmatpush1.msra.mxu0 0.0
      %3159 = vmatprep.subr.mxu0 0.0
      %3160 = vmatpush1.msra.mxu0 0.0
      %3161 = vmatprep.subr.mxu0 0.0
      %3162 = vmatpush1.msra.mxu0 0.0
      %3163 = vmatprep.subr.mxu0 0.0
      %3164 = vmatpush1.msra.mxu0 0.0
      %3165 = vmatprep.subr.mxu0 0.0
      %3166 = vmatpush1.msra.mxu0 0.0
      %3167 = vmatprep.subr.mxu0 0.0
      %3168 = vmatpush1.msra.mxu0 0.0
      %3169 = vmatprep.subr.mxu0 0.0
      %3170 = vmatpush1.msra.mxu0 0.0
      %3171 = vmatprep.mubr.f32.mxu0 0.0
      %3172 = vmatmul.mubr.f32.gmra.mrb[0].mxu0 %v3025
      %v3173 = vpop.f32.mrb[0].mxu0
      %v3174 = vadd.f32 0.0, %v3173
      %v3175 = vpop.f32.mrb[0].mxu0
      %v3176 = vadd.f32 0.0, %v3175
      %3177 = vmatprep.mubr.f32.mxu0 0.0
      %3178 = vmatmul.mubr.f32.gmra.mrb[0].mxu0 %v3028
      %v3179 = vpop.f32.mrb[0].mxu0
      %v3180 = vadd.f32 0.0, %v3179
      %v3181 = vpop.f32.mrb[0].mxu0
      %v3182 = vadd.f32 0.0, %v3181
      %3183 = vdwg.mxu0
      %v3184 = vadd.f32 %v2369, %v3097
      %v3185 = vadd.f32 %v2371, %v3099
      %v3186 = vadd.f32 %v2446, %v3174
      %v3187 = vadd.f32 %v2448, %v3176
      %v3188 = vadd.f32 %v2375, %v3103
      %v3189 = vadd.f32 %v2377, %v3105
      %v3190 = vadd.f32 %v2452, %v3180
      %v3191 = vadd.f32 %v2454, %v3182
      %s3192 = smul.u32 %s17, 8
      %s3193 = smul.addr %s3192, 8
      %s3194 = scalar_lea.vmem %s6, %s3193
      %3195 = vst [vmem:[%s3194] sm:$0xff] %v3184
      %3196 = vst [vmem:[%s3194 + $0x8] sm:$0xff] %v3185
      %3197 = vst [vmem:[%s3194 + $0x10] sm:$0xff] %v3186
      %3198 = vst [vmem:[%s3194 + $0x18] sm:$0xff] %v3187
      %3199 = vst [vmem:[%s3194 + $0x20] sm:$0xff] %v3188
      %3200 = vst [vmem:[%s3194 + $0x28] sm:$0xff] %v3189
      %3201 = vst [vmem:[%s3194 + $0x30] sm:$0xff] %v3190
      %3202 = vst [vmem:[%s3194 + $0x38] sm:$0xff] %v3191
      %v3203 = vld [vmem:[#allocation2] ss:$2 sm:$0xf]
      %v3204 = vadd.f32 %v3184, %v3188
      %v3205 = vrot.slane %v3204, 4
      %v3206 = vadd.f32 %v3204, %v3205
      %v3207 = vrot.slane %v3206, 2
      %v3208 = vadd.f32 %v3206, %v3207
      %v3209 = vrot.slane %v3208, 1
      %v3210 = vadd.f32 %v3208, %v3209
      %v3211 = vadd.f32 %v3185, %v3189
      %v3212 = vrot.slane %v3211, 4
      %v3213 = vadd.f32 %v3211, %v3212
      %v3214 = vrot.slane %v3213, 2
      %v3215 = vadd.f32 %v3213, %v3214
      %v3216 = vrot.slane %v3215, 1
      %v3217 = vadd.f32 %v3215, %v3216
      %v3218 = vadd.f32 %v3186, %v3190
      %v3219 = vrot.slane %v3218, 4
      %v3220 = vadd.f32 %v3218, %v3219
      %v3221 = vrot.slane %v3220, 2
      %v3222 = vadd.f32 %v3220, %v3221
      %v3223 = vrot.slane %v3222, 1
      %v3224 = vadd.f32 %v3222, %v3223
      %v3225 = vadd.f32 %v3187, %v3191
      %v3226 = vrot.slane %v3225, 4
      %v3227 = vadd.f32 %v3225, %v3226
      %v3228 = vrot.slane %v3227, 2
      %v3229 = vadd.f32 %v3227, %v3228
      %v3230 = vrot.slane %v3229, 1
      %v3231 = vadd.f32 %v3229, %v3230
      %v3236 = vcombine.low %v3210, %v3217
      %v3237 = vcombine.low %v3224, %v3231
      %v3239 = vunpack.c.l.s4 1966171168
      %v3240 = vunpack.c.0.s8 %v3239
      %v3241 = vlaneseq
      %v3242 = vshrl.u32 %v3241, 7
      %v3243 = vsub.s32 %v3240, %v3242
      %v3244 = vrot.slane %v3236, %v3243
      %v3246 = vunpack.c.l.s4 1966171168
      %v3247 = vunpack.c.0.s8 %v3246
      %v3248 = vlaneseq
      %v3249 = vshrl.u32 %v3248, 7
      %v3250 = vsub.s32 %v3247, %v3249
      %v3251 = vrot.slane %v3237, %v3250
      %v3252 = vcombine.low %v3244, %v3251
      %v3254 = vunpack.c.l.s4 1966171168
      %v3255 = vunpack.c.0.s8 %v3254
      %v3256 = vlaneseq
      %v3257 = vshrl.u32 %v3256, 7
      %v3258 = vsub.s32 %v3255, %v3257
      %v3259 = vrot.slane %v3252, %v3258
      %v3261 = vadd.f32 %v3203, %v3259
      %v3262 = vlaneseq
      %vm3263 = vcmp.ge.s32.totalorder %v3262, 0
      %vm3264 = vcmp.lt.s32.totalorder %v3262, 512
      %vm3265 = vmand %vm3263, %vm3264
      %3266 = vst.msk [vmem:[#allocation2] ss:$2 sm:$0xf] %vm3265, %v3261
      %s3267 = scalar_lea.vmem [#allocation2], 1
      %v3268 = vld [vmem:[%s3267] ss:$2 sm:$0xf]
      %v3269 = vmul.f32 %v3184, %v3184
      %v3270 = vmul.f32 %v3185, %v3185
      %v3271 = vmul.f32 %v3186, %v3186
      %v3272 = vmul.f32 %v3187, %v3187
      %v3273 = vmul.f32 %v3188, %v3188
      %v3274 = vmul.f32 %v3189, %v3189
      %v3275 = vmul.f32 %v3190, %v3190
      %v3276 = vmul.f32 %v3191, %v3191
      %v3277 = vadd.f32 %v3269, %v3273
      %v3278 = vrot.slane %v3277, 4
      %v3279 = vadd.f32 %v3277, %v3278
      %v3280 = vrot.slane %v3279, 2
      %v3281 = vadd.f32 %v3279, %v3280
      %v3282 = vrot.slane %v3281, 1
      %v3283 = vadd.f32 %v3281, %v3282
      %v3284 = vadd.f32 %v3270, %v3274
      %v3285 = vrot.slane %v3284, 4
      %v3286 = vadd.f32 %v3284, %v3285
      %v3287 = vrot.slane %v3286, 2
      %v3288 = vadd.f32 %v3286, %v3287
      %v3289 = vrot.slane %v3288, 1
      %v3290 = vadd.f32 %v3288, %v3289
      %v3291 = vadd.f32 %v3271, %v3275
      %v3292 = vrot.slane %v3291, 4
      %v3293 = vadd.f32 %v3291, %v3292
      %v3294 = vrot.slane %v3293, 2
      %v3295 = vadd.f32 %v3293, %v3294
      %v3296 = vrot.slane %v3295, 1
      %v3297 = vadd.f32 %v3295, %v3296
      %v3298 = vadd.f32 %v3272, %v3276
      %v3299 = vrot.slane %v3298, 4
      %v3300 = vadd.f32 %v3298, %v3299
      %v3301 = vrot.slane %v3300, 2
      %v3302 = vadd.f32 %v3300, %v3301
      %v3303 = vrot.slane %v3302, 1
      %v3304 = vadd.f32 %v3302, %v3303
      %v3309 = vcombine.low %v3283, %v3290
      %v3310 = vcombine.low %v3297, %v3304
      %v3312 = vunpack.c.l.s4 1966171168
      %v3313 = vunpack.c.0.s8 %v3312
      %v3314 = vlaneseq
      %v3315 = vshrl.u32 %v3314, 7
      %v3316 = vsub.s32 %v3313, %v3315
      %v3317 = vrot.slane %v3309, %v3316
      %v3319 = vunpack.c.l.s4 1966171168
      %v3320 = vunpack.c.0.s8 %v3319
      %v3321 = vlaneseq
      %v3322 = vshrl.u32 %v3321, 7
      %v3323 = vsub.s32 %v3320, %v3322
      %v3324 = vrot.slane %v3310, %v3323
      %v3325 = vcombine.low %v3317, %v3324
      %v3327 = vunpack.c.l.s4 1966171168
      %v3328 = vunpack.c.0.s8 %v3327
      %v3329 = vlaneseq
      %v3330 = vshrl.u32 %v3329, 7
      %v3331 = vsub.s32 %v3328, %v3330
      %v3332 = vrot.slane %v3325, %v3331
      %v3334 = vadd.f32 %v3268, %v3332
      %3335 = vst.msk [vmem:[%s3267] ss:$2 sm:$0xf] %vm3265, %v3334
      %p3336 = scmp.eq.s32.totalorder %s17, 1
      // Predicated region
      $region49: #{boundary_enhance_forward.1} parent=43 // pred_check
        %p3337 = pneg %p3336
      $region50: #{boundary_enhance_forward.1} parent=43 // pred_check_branch
        %3339 = sbr.rel (%p3337) target = $region52
      $region51: #{boundary_enhance_forward.1} parent=43 // pred_region
        %v3340 = vld [vmem:[#allocation2] sm:$0x3]
        %3342 = vrot.lane.b32.xlu0 %v3340, 96
        %v3343 = vpop.permute.xlu0 %3342
        %v3345 = vadd.f32 %v3340, %v3343
        %3346 = vrot.lane.b32.xlu0 %v3340, 64
        %v3347 = vpop.permute.xlu0 %3346
        %v3349 = vadd.f32 %v3345, %v3347
        %3350 = vrot.lane.b32.xlu0 %v3340, 32
        %v3351 = vpop.permute.xlu0 %3350
        %v3353 = vadd.f32 %v3349, %v3351
        %v3354 = vld [vmem:[#allocation2 + $0x2] sm:$0x3]
        %v3355 = vadd.f32 %v3353, %v3354
        %3357 = vrot.lane.b32.xlu0 %v3354, 96
        %v3358 = vpop.permute.xlu0 %3357
        %v3360 = vadd.f32 %v3355, %v3358
        %3361 = vrot.lane.b32.xlu0 %v3354, 64
        %v3362 = vpop.permute.xlu0 %3361
        %v3364 = vadd.f32 %v3360, %v3362
        %3365 = vrot.lane.b32.xlu0 %v3354, 32
        %v3366 = vpop.permute.xlu0 %3365
        %v3368 = vadd.f32 %v3364, %v3366
        %v3369 = vld [vmem:[#allocation2 + $0x4] sm:$0x3]
        %v3370 = vadd.f32 %v3368, %v3369
        %3372 = vrot.lane.b32.xlu0 %v3369, 96
        %v3373 = vpop.permute.xlu0 %3372
        %v3375 = vadd.f32 %v3370, %v3373
        %3376 = vrot.lane.b32.xlu0 %v3369, 64
        %v3377 = vpop.permute.xlu0 %3376
        %v3379 = vadd.f32 %v3375, %v3377
        %3380 = vrot.lane.b32.xlu0 %v3369, 32
        %v3381 = vpop.permute.xlu0 %3380
        %v3383 = vadd.f32 %v3379, %v3381
        %v3384 = vld [vmem:[#allocation2 + $0x6] sm:$0x3]
        %v3385 = vadd.f32 %v3383, %v3384
        %3387 = vrot.lane.b32.xlu0 %v3384, 96
        %v3388 = vpop.permute.xlu0 %3387
        %v3390 = vadd.f32 %v3385, %v3388
        %3391 = vrot.lane.b32.xlu0 %v3384, 64
        %v3392 = vpop.permute.xlu0 %3391
        %v3394 = vadd.f32 %v3390, %v3392
        %3395 = vrot.lane.b32.xlu0 %v3384, 32
        %v3396 = vpop.permute.xlu0 %3395
        %v3398 = vadd.f32 %v3394, %v3396
        %v3399 = vmul.f32 %v3398, 0.001953125
        %v3400 = vmul.f32 %v3399, %v3399
        %v3402 = vrot.slane %v3400, 7
        %v3404 = vsub.f32 %v3399, %v3402
        %v3405 = vmax.f32 %v3404, 0.0
        %v3406 = vld [vmem:[%s4] sm:$0x1]
        %v3407 = vadd.f32 %v3405, 1e-05
        %v3408 = vrsqrt.pop %v3407
        %v3411 = vunpack.c.l.s4 1966171168
        %v3412 = vunpack.c.0.s8 %v3411
        %v3413 = vlaneseq
        %v3414 = vshrl.u32 %v3413, 7
        %v3415 = vsub.s32 %v3412, %v3414
        %v3416 = vrot.slane %v3408, %v3415
        %v3417 = vcombine.high %v3416, %v3416
        %v3419 = vmul.f32 %v3406, %v3417
        %v3420 = vld [vmem:[%s5] sm:$0x1]
        %v3421 = vmul.f32 %v3399, %v3419
        %v3422 = vsub.f32 %v3420, %v3421
        %vm3423 = vcmask 253952
        %3424 = vst.msk [vmem:[#allocation3] sm:$0x1] %vm3423, %v3419
        %3425 = vst.msk [vmem:[#allocation3 + $0x1] sm:$0x1] %vm3423, %v3422
        %v3428 = vunpack.c.l.s4 857870592
        %v3429 = vunpack.c.0.s8 %v3428
        %v3430 = vlaneseq
        %v3431 = vshrl.u32 %v3430, 7
        %v3432 = vsub.s32 %v3429, %v3431
        %v3433 = vrot.slane %v3419, %v3432
        %3434 = vrot.lane.b32.xlu0 %v3433, 32
        %v3435 = vpop.permute.xlu0 %3434
        %vm3437 = vcmask 516352
        %3438 = vst.msk [vmem:[#allocation3] sm:$0x1] %vm3437, %v3435
        %v3441 = vunpack.c.l.s4 857870592
        %v3442 = vunpack.c.0.s8 %v3441
        %v3443 = vlaneseq
        %v3444 = vshrl.u32 %v3443, 7
        %v3445 = vsub.s32 %v3442, %v3444
        %v3446 = vrot.slane %v3422, %v3445
        %3447 = vrot.lane.b32.xlu0 %v3446, 32
        %v3448 = vpop.permute.xlu0 %3447
        %3450 = vst.msk [vmem:[#allocation3 + $0x1] sm:$0x1] %vm3437, %v3448
        %3451 = vrot.lane.b32.xlu0 %v3433, 64
        %v3452 = vpop.permute.xlu0 %3451
        %vm3454 = vcmask 778752
        %3455 = vst.msk [vmem:[#allocation3] sm:$0x1] %vm3454, %v3452
        %3456 = vrot.lane.b32.xlu0 %v3446, 64
        %v3457 = vpop.permute.xlu0 %3456
        %3459 = vst.msk [vmem:[#allocation3 + $0x1] sm:$0x1] %vm3454, %v3457
        %3460 = vrot.lane.b32.xlu0 %v3433, 96
        %v3461 = vpop.permute.xlu0 %3460
        %vm3463 = vcmask 1041152
        %3464 = vst.msk [vmem:[#allocation3] sm:$0x1] %vm3463, %v3461
        %3465 = vrot.lane.b32.xlu0 %v3446, 96
        %v3466 = vpop.permute.xlu0 %3465
        %3468 = vst.msk [vmem:[#allocation3 + $0x1] sm:$0x1] %vm3463, %v3466
        %3469 = vst.msk [vmem:[#allocation3 + $0x2] sm:$0x1] %vm3423, %v3419
        %3470 = vst.msk [vmem:[#allocation3 + $0x3] sm:$0x1] %vm3423, %v3422
        %3471 = vst.msk [vmem:[#allocation3 + $0x2] sm:$0x1] %vm3437, %v3435
        %3472 = vst.msk [vmem:[#allocation3 + $0x3] sm:$0x1] %vm3437, %v3448
        %3473 = vst.msk [vmem:[#allocation3 + $0x2] sm:$0x1] %vm3454, %v3452
        %3474 = vst.msk [vmem:[#allocation3 + $0x3] sm:$0x1] %vm3454, %v3457
        %3475 = vst.msk [vmem:[#allocation3 + $0x2] sm:$0x1] %vm3463, %v3461
        %3476 = vst.msk [vmem:[#allocation3 + $0x3] sm:$0x1] %vm3463, %v3466
        %3477 = vst.msk [vmem:[#allocation3 + $0x4] sm:$0x1] %vm3423, %v3419
        %3478 = vst.msk [vmem:[#allocation3 + $0x5] sm:$0x1] %vm3423, %v3422
        %3479 = vst.msk [vmem:[#allocation3 + $0x4] sm:$0x1] %vm3437, %v3435
        %3480 = vst.msk [vmem:[#allocation3 + $0x5] sm:$0x1] %vm3437, %v3448
        %3481 = vst.msk [vmem:[#allocation3 + $0x4] sm:$0x1] %vm3454, %v3452
        %3482 = vst.msk [vmem:[#allocation3 + $0x5] sm:$0x1] %vm3454, %v3457
        %3483 = vst.msk [vmem:[#allocation3 + $0x4] sm:$0x1] %vm3463, %v3461
        %3484 = vst.msk [vmem:[#allocation3 + $0x5] sm:$0x1] %vm3463, %v3466
        %3485 = vst.msk [vmem:[#allocation3 + $0x6] sm:$0x1] %vm3423, %v3419
        %3486 = vst.msk [vmem:[#allocation3 + $0x7] sm:$0x1] %vm3423, %v3422
        %3487 = vst.msk [vmem:[#allocation3 + $0x6] sm:$0x1] %vm3437, %v3435
        %3488 = vst.msk [vmem:[#allocation3 + $0x7] sm:$0x1] %vm3437, %v3448
        %3489 = vst.msk [vmem:[#allocation3 + $0x6] sm:$0x1] %vm3454, %v3452
        %3490 = vst.msk [vmem:[#allocation3 + $0x7] sm:$0x1] %vm3454, %v3457
        %3491 = vst.msk [vmem:[#allocation3 + $0x6] sm:$0x1] %vm3463, %v3461
        %3492 = vst.msk [vmem:[#allocation3 + $0x7] sm:$0x1] %vm3463, %v3466
        %v3493 = vld [vmem:[#allocation3] ss:$2 sm:$0xf]
        %s3494 = scalar_lea.vmem [#allocation3], 1
        %v3495 = vld [vmem:[%s3494] ss:$2 sm:$0xf]
        %v3496 = vld [vmem:[%s6] sm:$0xff]
        %v3497 = vld [vmem:[%s6 + $0x8] sm:$0xff]
        %v3498 = vld [vmem:[%s6 + $0x10] sm:$0xff]
        %v3499 = vld [vmem:[%s6 + $0x18] sm:$0xff]
        %v3500 = vld [vmem:[%s6 + $0x20] sm:$0xff]
        %v3501 = vld [vmem:[%s6 + $0x28] sm:$0xff]
        %v3502 = vld [vmem:[%s6 + $0x30] sm:$0xff]
        %v3503 = vld [vmem:[%s6 + $0x38] sm:$0xff]
        %v3505 = vlaneseq
        %v3506 = vshrl.u32 %v3505, 7
        %v3507 = vsub.s32 0, %v3506
        %v3508 = vrot.slane %v3493, %v3507
        %v3509 = vlaneseq
        %v3510 = vshrl.u32 %v3509, 7
        %v3511 = vsub.s32 1, %v3510
        %v3512 = vrot.slane %v3493, %v3511
        %v3513 = vlaneseq
        %v3514 = vshrl.u32 %v3513, 7
        %v3515 = vsub.s32 2, %v3514
        %v3516 = vrot.slane %v3493, %v3515
        %v3517 = vlaneseq
        %v3518 = vshrl.u32 %v3517, 7
        %v3519 = vsub.s32 3, %v3518
        %v3520 = vrot.slane %v3493, %v3519
        %v3525 = vmul.f32 %v3496, %v3508
        %v3526 = vmul.f32 %v3497, %v3512
        %v3527 = vmul.f32 %v3498, %v3516
        %v3528 = vmul.f32 %v3499, %v3520
        %v3529 = vmul.f32 %v3500, %v3508
        %v3530 = vmul.f32 %v3501, %v3512
        %v3531 = vmul.f32 %v3502, %v3516
        %v3532 = vmul.f32 %v3503, %v3520
        %v3534 = vlaneseq
        %v3535 = vshrl.u32 %v3534, 7
        %v3536 = vsub.s32 0, %v3535
        %v3537 = vrot.slane %v3495, %v3536
        %v3538 = vlaneseq
        %v3539 = vshrl.u32 %v3538, 7
        %v3540 = vsub.s32 1, %v3539
        %v3541 = vrot.slane %v3495, %v3540
        %v3542 = vlaneseq
        %v3543 = vshrl.u32 %v3542, 7
        %v3544 = vsub.s32 2, %v3543
        %v3545 = vrot.slane %v3495, %v3544
        %v3546 = vlaneseq
        %v3547 = vshrl.u32 %v3546, 7
        %v3548 = vsub.s32 3, %v3547
        %v3549 = vrot.slane %v3495, %v3548
        %v3554 = vadd.f32 %v3525, %v3537
        %v3555 = vadd.f32 %v3526, %v3541
        %v3556 = vadd.f32 %v3527, %v3545
        %v3557 = vadd.f32 %v3528, %v3549
        %v3558 = vadd.f32 %v3529, %v3537
        %v3559 = vadd.f32 %v3530, %v3541
        %v3560 = vadd.f32 %v3531, %v3545
        %v3561 = vadd.f32 %v3532, %v3549
        %v3562 = vmax.f32 %v3554, 0.0
        %v3563 = vmax.f32 %v3555, 0.0
        %v3564 = vmax.f32 %v3556, 0.0
        %v3565 = vmax.f32 %v3557, 0.0
        %v3566 = vmax.f32 %v3558, 0.0
        %v3567 = vmax.f32 %v3559, 0.0
        %v3568 = vmax.f32 %v3560, 0.0
        %v3569 = vmax.f32 %v3561, 0.0
        %3570 = vst [vmem:[%s6] sm:$0xff] %v3562
        %3571 = vst [vmem:[%s6 + $0x8] sm:$0xff] %v3563
        %3572 = vst [vmem:[%s6 + $0x10] sm:$0xff] %v3564
        %3573 = vst [vmem:[%s6 + $0x18] sm:$0xff] %v3565
        %3574 = vst [vmem:[%s6 + $0x20] sm:$0xff] %v3566
        %3575 = vst [vmem:[%s6 + $0x28] sm:$0xff] %v3567
        %3576 = vst [vmem:[%s6 + $0x30] sm:$0xff] %v3568
        %3577 = vst [vmem:[%s6 + $0x38] sm:$0xff] %v3569
        %s3578 = scalar_lea.vmem %s6, 64
        %v3579 = vld [vmem:[%s3578] sm:$0xff]
        %v3580 = vld [vmem:[%s3578 + $0x8] sm:$0xff]
        %v3581 = vld [vmem:[%s3578 + $0x10] sm:$0xff]
        %v3582 = vld [vmem:[%s3578 + $0x18] sm:$0xff]
        %v3583 = vld [vmem:[%s3578 + $0x20] sm:$0xff]
        %v3584 = vld [vmem:[%s3578 + $0x28] sm:$0xff]
        %v3585 = vld [vmem:[%s3578 + $0x30] sm:$0xff]
        %v3586 = vld [vmem:[%s3578 + $0x38] sm:$0xff]
        %v3587 = vmul.f32 %v3579, %v3508
        %v3588 = vmul.f32 %v3580, %v3512
        %v3589 = vmul.f32 %v3581, %v3516
        %v3590 = vmul.f32 %v3582, %v3520
        %v3591 = vmul.f32 %v3583, %v3508
        %v3592 = vmul.f32 %v3584, %v3512
        %v3593 = vmul.f32 %v3585, %v3516
        %v3594 = vmul.f32 %v3586, %v3520
        %v3595 = vadd.f32 %v3587, %v3537
        %v3596 = vadd.f32 %v3588, %v3541
        %v3597 = vadd.f32 %v3589, %v3545
        %v3598 = vadd.f32 %v3590, %v3549
        %v3599 = vadd.f32 %v3591, %v3537
        %v3600 = vadd.f32 %v3592, %v3541
        %v3601 = vadd.f32 %v3593, %v3545
        %v3602 = vadd.f32 %v3594, %v3549
        %v3603 = vmax.f32 %v3595, 0.0
        %v3604 = vmax.f32 %v3596, 0.0
        %v3605 = vmax.f32 %v3597, 0.0
        %v3606 = vmax.f32 %v3598, 0.0
        %v3607 = vmax.f32 %v3599, 0.0
        %v3608 = vmax.f32 %v3600, 0.0
        %v3609 = vmax.f32 %v3601, 0.0
        %v3610 = vmax.f32 %v3602, 0.0
        %3611 = vst [vmem:[%s3578] sm:$0xff] %v3603
        %3612 = vst [vmem:[%s3578 + $0x8] sm:$0xff] %v3604
        %3613 = vst [vmem:[%s3578 + $0x10] sm:$0xff] %v3605
        %3614 = vst [vmem:[%s3578 + $0x18] sm:$0xff] %v3606
        %3615 = vst [vmem:[%s3578 + $0x20] sm:$0xff] %v3607
        %3616 = vst [vmem:[%s3578 + $0x28] sm:$0xff] %v3608
        %3617 = vst [vmem:[%s3578 + $0x30] sm:$0xff] %v3609
        %3618 = vst [vmem:[%s3578 + $0x38] sm:$0xff] %v3610
      $region52: #{boundary_enhance_forward.1} parent=43 // pred_fallthru
        _
      // Predicated region
      $region53: #{boundary_enhance_forward.1} parent=43 // pred_check
        %p3619 = pneg %p161
      $region54: #{boundary_enhance_forward.1} parent=43 // pred_check_branch
        %3621 = sbr.rel (%p3619) target = $region56
      $region55: #{boundary_enhance_forward.1} parent=43 // pred_region
        _
      $region56: #{boundary_enhance_forward.1} parent=43 // pred_fallthru
        _
      // Predicated region
      $region57: #{boundary_enhance_forward.1} parent=43 // pred_check
        %p3622 = pneg %p161
      $region58: #{boundary_enhance_forward.1} parent=43 // pred_check_branch
        %3624 = sbr.rel (%p3622) target = $region60
      $region59: #{boundary_enhance_forward.1} parent=43 // pred_region
        _
      $region60: #{boundary_enhance_forward.1} parent=43 // pred_fallthru
        _
    $region44: #{boundary_enhance_forward.1} parent=5 // pred_fallthru
      _
    %p3625 = scmp.le.s32.totalorder 2, %s12
    // Predicated region
    $region61: #{boundary_enhance_forward.1} parent=5 // pred_check
      %p3626 = pneg %p3625
    $region62: #{boundary_enhance_forward.1} parent=5 // pred_check_branch
      %3628 = sbr.rel (%p3626) target = $region64
    $region63: #{boundary_enhance_forward.1} parent=5 // pred_region
      %s3629 = ssub.s32 %s12, 2
    $region64: #{boundary_enhance_forward.1} parent=5 // pred_fallthru
      _
  $region6: #{boundary_enhance_forward.1} parent=0 // loop_footer
    %s16 = sadd.s32 1, %s12
  $region7: #{boundary_enhance_forward.1} parent=0 // loop_footer_branch
    %11 = sbr.rel target = $region3
  $region8: #{boundary_enhance_forward.1} parent=0 // loop_exit
    _

</llo_original>
